<compile_context>
chip_gen: v7x
topology: tpu7x:2x2x1
jax: 0.10.0
libtpu: 0.0.40
codegen_flags: <defaults>
</compile_context>

<pallas_src>
import functools
import math

import jax
import jax.numpy as jnp
from jax import lax
from jax.experimental import pallas as pl
from jax.experimental.pallas import tpu as pltpu


# ----------------------------------------------------------------------------
# generation-aware VMEM budget
# ----------------------------------------------------------------------------
def _vmem_limit_bytes(default=64 * 1024 * 1024):
    try:
        info = pltpu.get_tpu_info()
        cap = getattr(info, "vmem_capacity_bytes", None)
        if cap:
            return int(cap) * 3 // 4        # ~96 MiB on v5e/v6e, ~48 MiB on v7x
    except Exception:
        pass
    return default


# ----------------------------------------------------------------------------
# shared numerics / helpers
# ----------------------------------------------------------------------------
def _layernorm(x, g, b, eps=1e-5):
    # PyTorch nn.LayerNorm: biased variance, eps inside rsqrt; kept in f32.
    mu = jnp.mean(x, axis=-1, keepdims=True)
    var = jnp.mean((x - mu) ** 2, axis=-1, keepdims=True)
    return (x - mu) * lax.rsqrt(var + eps) * g + b


def _pick_batch_block(b, seq, max_rows=2048):
    """Largest batch block that (a) divides B, (b) leaves >= 2 grid steps along the
    'parallel' batch axis (so megacore can still shard it), and (c) keeps Bb*S rows
    bounded for VMEM."""
    if b <= 1:
        return 1
    best = 1
    for cand in range(1, b // 2 + 1):
        if b % cand == 0 and cand * seq <= max_rows:
            best = cand
    return best


# ----------------------------------------------------------------------------
# rotary time-embedding tables  (RotaryEmbedding(dim=time_embed_dim, ...))
# ----------------------------------------------------------------------------
def make_rope_tables(n_time, e_num, head_dim, time_embed_dim, interpolate_factor):
    # prepare_freqs((eN, N)): each of the eN embed tokens at time t shares
    # position t / interpolate_factor; sequence order is time-major (flatten(1,2)).
    t = jnp.arange(n_time, dtype=jnp.float32) / interpolate_factor
    t = jnp.repeat(t, e_num)                                      # (S,)
    inv_freq = 1.0 / (10000.0 ** (
        jnp.arange(0, time_embed_dim, 2, dtype=jnp.float32) / time_embed_dim))
    freqs = jnp.einsum("i,j->ij", t, inv_freq)                    # (S, ted/2)
    freqs = jnp.repeat(freqs, 2, axis=-1)                         # interleaved (S, ted)
    s = t.shape[0]
    pad = head_dim - time_embed_dim                               # pass-through dims
    cos = jnp.concatenate([jnp.cos(freqs), jnp.ones((s, pad), jnp.float32)], axis=-1)
    sin = jnp.concatenate([jnp.sin(freqs), jnp.zeros((s, pad), jnp.float32)], axis=-1)
    return cos, sin


def fold_rope_masks(sin, head_dim):
    # rotate_half(x)*sin == roll(x, +1)*sin_p + roll(x, -1)*sin_m
    # (interleaved pairs: y[2i] = -x[2i+1], y[2i+1] = x[2i]); zero masks also kill
    # roll wrap-around and the pass-through padded lanes.
    idx = jnp.arange(head_dim)
    odd = (idx % 2 == 1).astype(jnp.float32)
    return sin * odd, -sin * (1.0 - odd)


# ----------------------------------------------------------------------------
# the fused predictor kernel
# ----------------------------------------------------------------------------
def _predictor_kernel(
    x_ref, cos_ref, sinp_ref, sinm_ref,
    ew_ref, eb_ref, fng_ref, fnb_ref, pw_ref, pb_ref,
    ln1g_ref, ln1b_ref, wqkv_ref, bqkv_ref, wo_ref, bo_ref,
    ln2g_ref, ln2b_ref, fc1w_ref, fc1b_ref, fc2w_ref, fc2b_ref,
    o_ref, slab_ref, *, num_heads, bb, seq,
):
    layer = pl.program_id(1)
    n_layers = pl.num_programs(1)

    d = slab_ref.shape[1]
    hd = d // num_heads
    m_rows = bb * seq

    # -- prologue: predictor_embed (embed_dim -> pred_dim) at the first layer ----
    @pl.when(layer == 0)
    def _():
        xe = x_ref[...].reshape(m_rows, x_ref.shape[2]).astype(jnp.bfloat16)
        slab_ref[...] = (
            jnp.dot(xe, ew_ref[...], preferred_element_type=jnp.float32) + eb_ref[...]
        )

    x = slab_ref[...]                                    # (M, D) f32 running activation

    # ---- attention branch (pre-LN) ----------------------------------------------
    hn = _layernorm(x, ln1g_ref[...], ln1b_ref[...]).astype(jnp.bfloat16)
    # one wide QKV matmul (N = 3D fills the MXU); 1/sqrt(hd) pre-folded into q cols
    qkv = (jnp.dot(hn, wqkv_ref[...], preferred_element_type=jnp.float32)
           + bqkv_ref[...])                              # (M, 3D) f32
    q3 = qkv[:, 0 * d:1 * d].reshape(bb, seq, d)
    k3 = qkv[:, 1 * d:2 * d].reshape(bb, seq, d)
    v3 = qkv[:, 2 * d:3 * d].reshape(bb, seq, d)

    cos = cos_ref[...]                                   # (S, hd) f32
    sin_p = sinp_ref[...]
    sin_m = sinm_ref[...]

    def rope(t):                                         # t: (Bb, S, hd)
        return (t * cos
                + pltpu.roll(t, shift=1, axis=2) * sin_p
                + pltpu.roll(t, shift=hd - 1, axis=2) * sin_m)

    # Per-head attention, batched over the Bb sequences of this grid step so that
    # different sequences never attend to each other.
    # TODO(synk): flash-style KV tiling (bounds the S*S score tile) and bf16 exp on
    # v6e/v7x would be needed for long sequences / v7x's 64 MiB VMEM.
    head_outs = []
    for h in range(num_heads):
        sl = slice(h * hd, (h + 1) * hd)
        qh = rope(q3[:, :, sl]).astype(jnp.bfloat16)
        kh = rope(k3[:, :, sl]).astype(jnp.bfloat16)
        vh = v3[:, :, sl].astype(jnp.bfloat16)
        s = jnp.einsum("bqd,bkd->bqk", qh, kh,
                       preferred_element_type=jnp.float32)        # (Bb, S, S)
        s = s - jnp.max(s, axis=-1, keepdims=True)
        p = jnp.exp(s)
        l = jnp.sum(p, axis=-1, keepdims=True)
        oh = jnp.einsum("bqk,bkd->bqd", p.astype(jnp.bfloat16), vh,
                        preferred_element_type=jnp.float32)       # (Bb, S, hd)
        head_outs.append(oh * pl.reciprocal(l, approx=True))      # deferred softmax norm
    attn = jnp.concatenate(head_outs, axis=-1)           # (Bb, S, D) f32
    attn = attn.reshape(m_rows, d).astype(jnp.bfloat16)

    # single (M, D) x (D, D) output projection (K = D, no per-head projections)
    x = x + (jnp.dot(attn, wo_ref[...], preferred_element_type=jnp.float32)
             + bo_ref[...])

    # ---- MLP branch (pre-LN) -----------------------------------------------------
    h2 = _layernorm(x, ln2g_ref[...], ln2b_ref[...]).astype(jnp.bfloat16)
    mlp = (jnp.dot(h2, fc1w_ref[...], preferred_element_type=jnp.float32)
           + fc1b_ref[...])
    # TODO(synk): PyTorch nn.GELU default is exact (erf); tanh approximation used
    # here for robust Mosaic lowering.
    mlp = jax.nn.gelu(mlp, approximate=True)
    mlp = (jnp.dot(mlp.astype(jnp.bfloat16), fc2w_ref[...],
                   preferred_element_type=jnp.float32) + fc2b_ref[...])
    x = x + mlp

    slab_ref[...] = x

    # -- epilogue: predictor_norm + predictor_proj at the last layer ---------------
    @pl.when(layer == n_layers - 1)
    def _():
        hf = _layernorm(x, fng_ref[...], fnb_ref[...]).astype(jnp.bfloat16)
        out = (jnp.dot(hf, pw_ref[...], preferred_element_type=jnp.float32)
               + pb_ref[...])                            # (M, embed_dim)
        o_ref[...] = out.reshape(o_ref.shape)


def predictor_stack_call(x3, cos, sin_p, sin_m, prepared, *, num_heads, batch_block):
    B, S, E = x3.shape
    bb = batch_block
    assert B % bb == 0
    stk = prepared["blocks"]
    depth = stk["ln1_g"].shape[0]
    D = prepared["embed_w"].shape[1]
    hidden = stk["fc1_w"].shape[-1]
    hd = D // num_heads

    def rep(shape):                       # replicated across the whole grid
        nd = len(shape)
        return pl.BlockSpec(shape, lambda bi, li, _n=nd: (0,) * _n)

    def per_layer(trailing):              # streamed along the depth grid axis
        nd = len(trailing)
        return pl.BlockSpec((None,) + trailing,
                            lambda bi, li, _n=nd: (li,) + (0,) * _n)

    in_specs = [
        pl.BlockSpec((bb, S, E), lambda bi, li: (bi, 0, 0)),   # x (read at layer 0)
        rep((S, hd)), rep((S, hd)), rep((S, hd)),              # cos / sin_p / sin_m
        rep((E, D)), rep((1, D)),                              # predictor_embed
        rep((1, D)), rep((1, D)),                              # predictor_norm
        rep((D, E)), rep((1, E)),                              # predictor_proj
        per_layer((1, D)), per_layer((1, D)),                  # ln1 g, b
        per_layer((D, 3 * D)), per_layer((1, 3 * D)),          # wqkv, bqkv
        per_layer((D, D)), per_layer((1, D)),                  # attn out-proj
        per_layer((1, D)), per_layer((1, D)),                  # ln2 g, b
        per_layer((D, hidden)), per_layer((1, hidden)),        # fc1
        per_layer((hidden, D)), per_layer((1, D)),             # fc2
    ]

    kernel = functools.partial(_predictor_kernel, num_heads=num_heads, bb=bb, seq=S)

    # TODO(synk): for v7x-scale D / mlp_ratio, split attn vs MLP weights over an
    # extra grid axis (or lower their pipeline buffering) to keep concurrent
    # weight residency under the 64 MiB VMEM.
    return pl.pallas_call(
        kernel,
        grid=(B // bb, depth),
        out_shape=jax.ShapeDtypeStruct((B, S, E), jnp.float32),
        in_specs=in_specs,
        out_specs=pl.BlockSpec((bb, S, E), lambda bi, li: (bi, 0, 0)),
        scratch_shapes=[pltpu.VMEM((bb * S, D), jnp.float32)],
        compiler_params=pltpu.CompilerParams(
            dimension_semantics=("parallel", "arbitrary"),
            vmem_limit_bytes=_vmem_limit_bytes(),
        ),
    )(
        x3, cos, sin_p, sin_m,
        prepared["embed_w"], prepared["embed_b"],
        prepared["norm_g"], prepared["norm_b"],
        prepared["proj_w"], prepared["proj_b"],
        stk["ln1_g"], stk["ln1_b"],
        stk["wqkv"], stk["bqkv"],
        stk["wo"], stk["bo"],
        stk["ln2_g"], stk["ln2_b"],
        stk["fc1_w"], stk["fc1_b"],
        stk["fc2_w"], stk["fc2_b"],
    )


# ----------------------------------------------------------------------------
# parameter init (trunc_normal / zeros / ones + fix_init_weight rescale) and
# one-time kernel-layout preparation
# ----------------------------------------------------------------------------
def trunc_normal(key, shape, std=0.02):
    return std * jax.random.truncated_normal(key, -2.0, 2.0, shape, jnp.float32)


def init_params(key, embed_dim, pred_dim, depth, mlp_ratio, init_std=0.02):
    hidden = int(pred_dim * mlp_ratio)
    keys = iter(jax.random.split(key, 2 + 4 * depth))
    params = {
        "embed_w": trunc_normal(next(keys), (embed_dim, pred_dim), init_std),
        "embed_b": jnp.zeros((pred_dim,), jnp.float32),
        "norm_g": jnp.ones((pred_dim,), jnp.float32),
        "norm_b": jnp.zeros((pred_dim,), jnp.float32),
        "proj_w": trunc_normal(next(keys), (pred_dim, embed_dim), init_std),
        "proj_b": jnp.zeros((embed_dim,), jnp.float32),
        "blocks": [],
    }
    for i in range(depth):
        lid = i + 1          # fix_init_weight: rescale attn.proj / mlp.fc2
        blk = {
            "ln1_g": jnp.ones((pred_dim,), jnp.float32),
            "ln1_b": jnp.zeros((pred_dim,), jnp.float32),
            "qkv_w": trunc_normal(next(keys), (pred_dim, 3 * pred_dim), init_std),
            "qkv_b": jnp.zeros((3 * pred_dim,), jnp.float32),
            "proj_w": trunc_normal(next(keys), (pred_dim, pred_dim), init_std)
            / math.sqrt(2.0 * lid),
            "proj_b": jnp.zeros((pred_dim,), jnp.float32),
            "ln2_g": jnp.ones((pred_dim,), jnp.float32),
            "ln2_b": jnp.zeros((pred_dim,), jnp.float32),
            "fc1_w": trunc_normal(next(keys), (pred_dim, hidden), init_std),
            "fc1_b": jnp.zeros((hidden,), jnp.float32),
            "fc2_w": trunc_normal(next(keys), (hidden, pred_dim), init_std)
            / math.sqrt(2.0 * lid),
            "fc2_b": jnp.zeros((pred_dim,), jnp.float32),
        }
        params["blocks"].append(blk)
    return params


def prepare_params(params, *, num_heads):
    """Depth-stacked, scale-folded, bf16 weights and pre-reshaped biases/LN params."""
    d = params["embed_w"].shape[1]
    hd = d // num_heads
    scale = 1.0 / math.sqrt(hd)
    bf16 = jnp.bfloat16
    blocks = params["blocks"]

    def stack(name):
        return jnp.stack([blk[name] for blk in blocks], axis=0)

    # fold 1/sqrt(head_dim) into the q third of the fused QKV weight / bias
    col_scale = jnp.concatenate(
        [jnp.full((d,), scale, jnp.float32), jnp.ones((2 * d,), jnp.float32)])
    qkv_w = stack("qkv_w") * col_scale[None, None, :]
    qkv_b = stack("qkv_b") * col_scale[None, :]

    stacked = {
        "ln1_g": stack("ln1_g")[:, None, :],
        "ln1_b": stack("ln1_b")[:, None, :],
        "wqkv": qkv_w.astype(bf16),                    # (L, D, 3D)
        "bqkv": qkv_b[:, None, :],                     # (L, 1, 3D) f32
        "wo": stack("proj_w").astype(bf16),            # (L, D, D)
        "bo": stack("proj_b")[:, None, :],
        "ln2_g": stack("ln2_g")[:, None, :],
        "ln2_b": stack("ln2_b")[:, None, :],
        "fc1_w": stack("fc1_w").astype(bf16),
        "fc1_b": stack("fc1_b")[:, None, :],
        "fc2_w": stack("fc2_w").astype(bf16),
        "fc2_b": stack("fc2_b")[:, None, :],
    }
    return {
        "embed_w": params["embed_w"].astype(bf16),
        "embed_b": params["embed_b"][None, :],
        "norm_g": params["norm_g"][None, :],
        "norm_b": params["norm_b"][None, :],
        "proj_w": params["proj_w"].astype(bf16),
        "proj_b": params["proj_b"][None, :],
        "blocks": stacked,
    }


# ----------------------------------------------------------------------------
# full forward (mask_x=None path; dropout rates are 0 -> identity)
# ----------------------------------------------------------------------------
def sensor_transformer_predictor(x, prepared, *, num_patches, num_heads,
                                 interpolate_factor=2.0, batch_block=None):
    # TODO(synk): mask_x / mask_t (mask-token insert + argsort/index_select reorder),
    # use_part_pred recombination, use_pos_embed and return_attention early-exit
    # paths are not implemented.
    B, mN, eN, embed_dim = x.shape
    _, N = num_patches
    pred_dim = prepared["embed_w"].shape[1]
    head_dim = pred_dim // num_heads
    time_embed_dim = head_dim // 2        # predictor_embed_dim // num_heads // 2
    S = mN * eN

    if batch_block is None:
        batch_block = _pick_batch_block(B, S)

    cos, sin = make_rope_tables(N, eN, head_dim, time_embed_dim, interpolate_factor)
    sin_p, sin_m = fold_rope_masks(sin, head_dim)

    out = predictor_stack_call(
        x.reshape(B, S, embed_dim), cos, sin_p, sin_m, prepared,
        num_heads=num_heads, batch_block=batch_block)
    return out.reshape(B, mN, eN, embed_dim)


# ----------------------------------------------------------------------------
# pure-JAX f32 reference (weights rounded to bf16 to mirror kernel weight precision)
# ----------------------------------------------------------------------------
def reference_forward(x, params, *, num_patches, num_heads, interpolate_factor=2.0):
    B, mN, eN, E = x.shape
    _, N = num_patches
    D = params["embed_w"].shape[1]
    H = num_heads
    hd = D // H
    ted = hd // 2
    S = mN * eN

    def qz(w):
        return w.astype(jnp.bfloat16).astype(jnp.float32)

    cos, sin = make_rope_tables(N, eN, hd, ted, interpolate_factor)   # (S, hd)

    def rot_half(t):
        t2 = t.reshape(t.shape[:-1] + (hd // 2, 2))
        return jnp.stack([-t2[..., 1], t2[..., 0]], axis=-1).reshape(t.shape)

    def rope(t):          # t: (B, H, S, hd)
        return t * cos + rot_half(t) * sin

    h = x.reshape(B * S, E) @ qz(params["embed_w"]) + params["embed_b"]
    h = h.reshape(B, S, D)

    for blk in params["blocks"]:
        y = _layernorm(h, blk["ln1_g"], blk["ln1_b"])
        qkv = y @ qz(blk["qkv_w"]) + blk["qkv_b"]

        def split(t):
            return t.reshape(B, S, H, hd).transpose(0, 2, 1, 3)

        q = rope(split(qkv[..., 0 * D:1 * D])) * (hd ** -0.5)
        k = rope(split(qkv[..., 1 * D:2 * D]))
        v = split(qkv[..., 2 * D:3 * D])
        s = jnp.einsum("bhqd,bhkd->bhqk", q, k)
        p = jax.nn.softmax(s, axis=-1)
        o = jnp.einsum("bhqk,bhkd->bhqd", p, v)
        o = o.transpose(0, 2, 1, 3).reshape(B, S, D)
        h = h + o @ qz(blk["proj_w"]) + blk["proj_b"]

        y = _layernorm(h, blk["ln2_g"], blk["ln2_b"])
        m = jax.nn.gelu(y @ qz(blk["fc1_w"]) + blk["fc1_b"], approximate=True)
        h = h + m @ qz(blk["fc2_w"]) + blk["fc2_b"]

    h = _layernorm(h, params["norm_g"], params["norm_b"])
    out = h @ qz(params["proj_w"]) + params["proj_b"]
    return out.reshape(B, mN, eN, E)


# ----------------------------------------------------------------------------
if __name__ == "__main__":
    # Lane-friendly small demo: embed_dim / pred_dim multiples of 128, head_dim = 128,
    # S = mN*eN multiple of 8; B = 4 so the batch-blocked path (Bb = 2) is exercised.
    B, mN, eN = 4, 8, 1
    embed_dim = 128
    pred_dim = 256
    num_heads = 2
    depth = 2
    mlp_ratio = 2.0
    num_patches = (2, mN)            # (C, N); unmasked path uses N == mN time steps

    key = jax.random.PRNGKey(0)
    kx, kp = jax.random.split(key)
    x = jax.random.normal(kx, (B, mN, eN, embed_dim), jnp.float32)
    raw = init_params(kp, embed_dim, pred_dim, depth, mlp_ratio)
    prepared = prepare_params(raw, num_heads=num_heads)

    out = sensor_transformer_predictor(
        x, prepared, num_patches=num_patches, num_heads=num_heads,
        interpolate_factor=2.0)
    out = jax.block_until_ready(out)

    assert out.shape == (B, mN, eN, embed_dim), out.shape
    assert bool(jnp.all(jnp.isfinite(out)))

    ref = reference_forward(x, raw, num_patches=num_patches, num_heads=num_heads,
                            interpolate_factor=2.0)
    err = float(jnp.max(jnp.abs(out - ref)))
    assert err < 7.5e-2, f"max abs error vs reference: {err}"
    print("KERNEL_OK")
</pallas_src>

<mosaic_0001>
module attributes {stable_mosaic.version = 11 : i64} {
  func.func @_predictor_kernel(%arg0: i32, %arg1: i32, %arg2: memref<2x8x128xf32, #tpu.memory_space<vmem>>, %arg3: memref<8x128xf32, #tpu.memory_space<vmem>>, %arg4: memref<8x128xf32, #tpu.memory_space<vmem>>, %arg5: memref<8x128xf32, #tpu.memory_space<vmem>>, %arg6: memref<128x256xbf16, #tpu.memory_space<vmem>>, %arg7: memref<1x256xf32, #tpu.memory_space<vmem>>, %arg8: memref<1x256xf32, #tpu.memory_space<vmem>>, %arg9: memref<1x256xf32, #tpu.memory_space<vmem>>, %arg10: memref<256x128xbf16, #tpu.memory_space<vmem>>, %arg11: memref<1x128xf32, #tpu.memory_space<vmem>>, %arg12: memref<1x1x256xf32, #tpu.memory_space<vmem>>, %arg13: memref<1x1x256xf32, #tpu.memory_space<vmem>>, %arg14: memref<1x256x768xbf16, #tpu.memory_space<vmem>>, %arg15: memref<1x1x768xf32, #tpu.memory_space<vmem>>, %arg16: memref<1x256x256xbf16, #tpu.memory_space<vmem>>, %arg17: memref<1x1x256xf32, #tpu.memory_space<vmem>>, %arg18: memref<1x1x256xf32, #tpu.memory_space<vmem>>, %arg19: memref<1x1x256xf32, #tpu.memory_space<vmem>>, %arg20: memref<1x256x512xbf16, #tpu.memory_space<vmem>>, %arg21: memref<1x1x512xf32, #tpu.memory_space<vmem>>, %arg22: memref<1x512x256xbf16, #tpu.memory_space<vmem>>, %arg23: memref<1x1x256xf32, #tpu.memory_space<vmem>>, %arg24: memref<2x8x128xf32, #tpu.memory_space<vmem>>, %arg25: memref<16x256xf32, #tpu.memory_space<vmem>>) attributes {dimension_semantics = [#tpu.dimension_semantics<parallel>, #tpu.dimension_semantics<arbitrary>], iteration_bounds = array<i64: 2, 2>, scalar_prefetch = 0 : i64, scratch_operands = 1 : i64, tpu.core_type = #tpu.core_type<tc>, window_params = [{transform_indices = @transform_0, window_bounds = array<i64: 2, 8, 128>}, {pipeline_mode = #tpu.pipeline_mode<synchronous>, transform_indices = @transform_1, window_bounds = array<i64: 8, 128>}, {pipeline_mode = #tpu.pipeline_mode<synchronous>, transform_indices = @transform_2, window_bounds = array<i64: 8, 128>}, {pipeline_mode = #tpu.pipeline_mode<synchronous>, transform_indices = @transform_3, window_bounds = array<i64: 8, 128>}, {pipeline_mode = #tpu.pipeline_mode<synchronous>, transform_indices = @transform_4, window_bounds = array<i64: 128, 256>}, {pipeline_mode = #tpu.pipeline_mode<synchronous>, transform_indices = @transform_5, window_bounds = array<i64: 1, 256>}, {pipeline_mode = #tpu.pipeline_mode<synchronous>, transform_indices = @transform_6, window_bounds = array<i64: 1, 256>}, {pipeline_mode = #tpu.pipeline_mode<synchronous>, transform_indices = @transform_7, window_bounds = array<i64: 1, 256>}, {pipeline_mode = #tpu.pipeline_mode<synchronous>, transform_indices = @transform_8, window_bounds = array<i64: 256, 128>}, {pipeline_mode = #tpu.pipeline_mode<synchronous>, transform_indices = @transform_9, window_bounds = array<i64: 1, 128>}, {transform_indices = @transform_10, window_bounds = array<i64: 1, 1, 256>}, {transform_indices = @transform_11, window_bounds = array<i64: 1, 1, 256>}, {transform_indices = @transform_12, window_bounds = array<i64: 1, 256, 768>}, {transform_indices = @transform_13, window_bounds = array<i64: 1, 1, 768>}, {transform_indices = @transform_14, window_bounds = array<i64: 1, 256, 256>}, {transform_indices = @transform_15, window_bounds = array<i64: 1, 1, 256>}, {transform_indices = @transform_16, window_bounds = array<i64: 1, 1, 256>}, {transform_indices = @transform_17, window_bounds = array<i64: 1, 1, 256>}, {transform_indices = @transform_18, window_bounds = array<i64: 1, 256, 512>}, {transform_indices = @transform_19, window_bounds = array<i64: 1, 1, 512>}, {transform_indices = @transform_20, window_bounds = array<i64: 1, 512, 256>}, {transform_indices = @transform_21, window_bounds = array<i64: 1, 1, 256>}, {transform_indices = @transform_22, window_bounds = array<i64: 2, 8, 128>}]} {
    %c0_i32 = arith.constant 0 : i32
    %0 = arith.cmpi eq, %arg1, %c0_i32 : i32
    %1 = arith.extui %0 : i1 to i32
    %c0_i32_0 = arith.constant 0 : i32
    %2 = arith.cmpi ne, %1, %c0_i32_0 : i32
    scf.if %2 {
      %c0_79 = arith.constant 0 : index
      %c0_80 = arith.constant 0 : index
      %c0_81 = arith.constant 0 : index
      %208 = vector.load %arg2[%c0_79, %c0_80, %c0_81] : memref<2x8x128xf32, #tpu.memory_space<vmem>>, vector<2x8x128xf32>
      %209 = vector.shape_cast %208 : vector<2x8x128xf32> to vector<16x128xf32>
      %210 = arith.truncf %209 : vector<16x128xf32> to vector<16x128xbf16>
      %c0_82 = arith.constant 0 : index
      %c0_83 = arith.constant 0 : index
      %211 = vector.load %arg6[%c0_82, %c0_83] : memref<128x256xbf16, #tpu.memory_space<vmem>>, vector<128x256xbf16>
      %cst_84 = arith.constant dense<0.000000e+00> : vector<16x256xf32>
      %212 = tpu.matmul %210, %211, %cst_84 {dimension_numbers = #tpu.dot_dimension_numbers<[1], [0], [0], [1], [0, 0, 1, 1], [], []>} : vector<16x128xbf16>, vector<128x256xbf16>, vector<16x256xf32> -> vector<16x256xf32>
      %c0_85 = arith.constant 0 : index
      %c0_86 = arith.constant 0 : index
      %213 = vector.load %arg7[%c0_85, %c0_86] : memref<1x256xf32, #tpu.memory_space<vmem>>, vector<1x256xf32>
      %214 = vector.broadcast %213 : vector<1x256xf32> to vector<16x256xf32>
      %215 = arith.addf %212, %214 : vector<16x256xf32>
      %c0_87 = arith.constant 0 : index
      %c0_88 = arith.constant 0 : index
      %216 = vector.load %arg25[%c0_87, %c0_88] : memref<16x256xf32, #tpu.memory_space<vmem>>, vector<16x256xf32>
      tpu.vector_store %arg25[%c0_87, %c0_88], %215 {strides = array<i32>} : memref<16x256xf32, #tpu.memory_space<vmem>>, vector<16x256xf32>,
    } else {
    }
    %c0 = arith.constant 0 : index
    %c0_1 = arith.constant 0 : index
    %3 = vector.load %arg25[%c0, %c0_1] : memref<16x256xf32, #tpu.memory_space<vmem>>, vector<16x256xf32>
    %c0_2 = arith.constant 0 : index
    %c0_3 = arith.constant 0 : index
    %c0_4 = arith.constant 0 : index
    %4 = vector.load %arg12[%c0_2, %c0_3, %c0_4] : memref<1x1x256xf32, #tpu.memory_space<vmem>>, vector<1x1x256xf32>
    %5 = vector.shape_cast %4 : vector<1x1x256xf32> to vector<1x256xf32>
    %c0_5 = arith.constant 0 : index
    %c0_6 = arith.constant 0 : index
    %c0_7 = arith.constant 0 : index
    %6 = vector.load %arg13[%c0_5, %c0_6, %c0_7] : memref<1x1x256xf32, #tpu.memory_space<vmem>>, vector<1x1x256xf32>
    %7 = vector.shape_cast %6 : vector<1x1x256xf32> to vector<1x256xf32>
    %cst = arith.constant dense<0.000000e+00> : vector<16xf32>
    %8 = vector.multi_reduction <add>, %3, %cst [1] : vector<16x256xf32> to vector<16xf32>
    %9 = vector.shape_cast %8 : vector<16xf32> to vector<16x1xf32>
    %cst_8 = arith.constant 2.560000e+02 : f32
    %10 = vector.broadcast %cst_8 : f32 to vector<16x1xf32>
    %11 = arith.divf %9, %10 : vector<16x1xf32>
    %12 = vector.broadcast %11 : vector<16x1xf32> to vector<16x256xf32>
    %13 = arith.subf %3, %12 : vector<16x256xf32>
    %14 = arith.mulf %13, %13 : vector<16x256xf32>
    %cst_9 = arith.constant dense<0.000000e+00> : vector<16xf32>
    %15 = vector.multi_reduction <add>, %14, %cst_9 [1] : vector<16x256xf32> to vector<16xf32>
    %16 = vector.shape_cast %15 : vector<16xf32> to vector<16x1xf32>
    %cst_10 = arith.constant 2.560000e+02 : f32
    %17 = vector.broadcast %cst_10 : f32 to vector<16x1xf32>
    %18 = arith.divf %16, %17 : vector<16x1xf32>
    %19 = vector.broadcast %11 : vector<16x1xf32> to vector<16x256xf32>
    %20 = arith.subf %3, %19 : vector<16x256xf32>
    %cst_11 = arith.constant 9.99999974E-6 : f32
    %21 = vector.broadcast %cst_11 : f32 to vector<16x1xf32>
    %22 = arith.addf %18, %21 : vector<16x1xf32>
    %23 = math.rsqrt %22 : vector<16x1xf32>
    %24 = vector.broadcast %23 : vector<16x1xf32> to vector<16x256xf32>
    %25 = arith.mulf %20, %24 : vector<16x256xf32>
    %26 = vector.broadcast %5 : vector<1x256xf32> to vector<16x256xf32>
    %27 = arith.mulf %25, %26 : vector<16x256xf32>
    %28 = vector.broadcast %7 : vector<1x256xf32> to vector<16x256xf32>
    %29 = arith.addf %27, %28 : vector<16x256xf32>
    %30 = arith.truncf %29 : vector<16x256xf32> to vector<16x256xbf16>
    %c0_12 = arith.constant 0 : index
    %c0_13 = arith.constant 0 : index
    %c0_14 = arith.constant 0 : index
    %31 = vector.load %arg14[%c0_12, %c0_13, %c0_14] : memref<1x256x768xbf16, #tpu.memory_space<vmem>>, vector<1x256x768xbf16>
    %32 = vector.shape_cast %31 : vector<1x256x768xbf16> to vector<256x768xbf16>
    %cst_15 = arith.constant dense<0.000000e+00> : vector<16x768xf32>
    %33 = tpu.matmul %30, %32, %cst_15 {dimension_numbers = #tpu.dot_dimension_numbers<[1], [0], [0], [1], [0, 0, 1, 1], [], []>} : vector<16x256xbf16>, vector<256x768xbf16>, vector<16x768xf32> -> vector<16x768xf32>
    %c0_16 = arith.constant 0 : index
    %c0_17 = arith.constant 0 : index
    %c0_18 = arith.constant 0 : index
    %34 = vector.load %arg15[%c0_16, %c0_17, %c0_18] : memref<1x1x768xf32, #tpu.memory_space<vmem>>, vector<1x1x768xf32>
    %35 = vector.shape_cast %34 : vector<1x1x768xf32> to vector<1x768xf32>
    %36 = vector.broadcast %35 : vector<1x768xf32> to vector<16x768xf32>
    %37 = arith.addf %33, %36 : vector<16x768xf32>
    %38 = vector.extract_strided_slice %37 {offsets = [0, 0], sizes = [16, 256], strides = [1, 1]} : vector<16x768xf32> to vector<16x256xf32>
    %39 = vector.shape_cast %38 : vector<16x256xf32> to vector<2x8x256xf32>
    %40 = vector.extract_strided_slice %37 {offsets = [0, 256], sizes = [16, 256], strides = [1, 1]} : vector<16x768xf32> to vector<16x256xf32>
    %41 = vector.shape_cast %40 : vector<16x256xf32> to vector<2x8x256xf32>
    %42 = vector.extract_strided_slice %37 {offsets = [0, 512], sizes = [16, 256], strides = [1, 1]} : vector<16x768xf32> to vector<16x256xf32>
    %43 = vector.shape_cast %42 : vector<16x256xf32> to vector<2x8x256xf32>
    %c0_19 = arith.constant 0 : index
    %c0_20 = arith.constant 0 : index
    %44 = vector.load %arg3[%c0_19, %c0_20] : memref<8x128xf32, #tpu.memory_space<vmem>>, vector<8x128xf32>
    %c0_21 = arith.constant 0 : index
    %c0_22 = arith.constant 0 : index
    %45 = vector.load %arg4[%c0_21, %c0_22] : memref<8x128xf32, #tpu.memory_space<vmem>>, vector<8x128xf32>
    %c0_23 = arith.constant 0 : index
    %c0_24 = arith.constant 0 : index
    %46 = vector.load %arg5[%c0_23, %c0_24] : memref<8x128xf32, #tpu.memory_space<vmem>>, vector<8x128xf32>
    %47 = vector.extract_strided_slice %39 {offsets = [0, 0, 0], sizes = [2, 8, 128], strides = [1, 1, 1]} : vector<2x8x256xf32> to vector<2x8x128xf32>
    %48 = vector.shape_cast %44 : vector<8x128xf32> to vector<1x8x128xf32>
    %49 = vector.broadcast %48 : vector<1x8x128xf32> to vector<2x8x128xf32>
    %50 = arith.mulf %47, %49 : vector<2x8x128xf32>
    %c1_i32 = arith.constant 1 : i32
    %51 = tpu.dynamic_rotate %47 by %c1_i32 dim 2 : vector<2x8x128xf32>, i32 -> vector<2x8x128xf32>
    %52 = vector.shape_cast %45 : vector<8x128xf32> to vector<1x8x128xf32>
    %53 = vector.broadcast %52 : vector<1x8x128xf32> to vector<2x8x128xf32>
    %54 = arith.mulf %51, %53 : vector<2x8x128xf32>
    %55 = arith.addf %50, %54 : vector<2x8x128xf32>
    %c127_i32 = arith.constant 127 : i32
    %56 = tpu.dynamic_rotate %47 by %c127_i32 dim 2 : vector<2x8x128xf32>, i32 -> vector<2x8x128xf32>
    %57 = vector.shape_cast %46 : vector<8x128xf32> to vector<1x8x128xf32>
    %58 = vector.broadcast %57 : vector<1x8x128xf32> to vector<2x8x128xf32>
    %59 = arith.mulf %56, %58 : vector<2x8x128xf32>
    %60 = arith.addf %55, %59 : vector<2x8x128xf32>
    %61 = arith.truncf %60 : vector<2x8x128xf32> to vector<2x8x128xbf16>
    %62 = vector.extract_strided_slice %41 {offsets = [0, 0, 0], sizes = [2, 8, 128], strides = [1, 1, 1]} : vector<2x8x256xf32> to vector<2x8x128xf32>
    %63 = vector.shape_cast %44 : vector<8x128xf32> to vector<1x8x128xf32>
    %64 = vector.broadcast %63 : vector<1x8x128xf32> to vector<2x8x128xf32>
    %65 = arith.mulf %62, %64 : vector<2x8x128xf32>
    %c1_i32_25 = arith.constant 1 : i32
    %66 = tpu.dynamic_rotate %62 by %c1_i32_25 dim 2 : vector<2x8x128xf32>, i32 -> vector<2x8x128xf32>
    %67 = vector.shape_cast %45 : vector<8x128xf32> to vector<1x8x128xf32>
    %68 = vector.broadcast %67 : vector<1x8x128xf32> to vector<2x8x128xf32>
    %69 = arith.mulf %66, %68 : vector<2x8x128xf32>
    %70 = arith.addf %65, %69 : vector<2x8x128xf32>
    %c127_i32_26 = arith.constant 127 : i32
    %71 = tpu.dynamic_rotate %62 by %c127_i32_26 dim 2 : vector<2x8x128xf32>, i32 -> vector<2x8x128xf32>
    %72 = vector.shape_cast %46 : vector<8x128xf32> to vector<1x8x128xf32>
    %73 = vector.broadcast %72 : vector<1x8x128xf32> to vector<2x8x128xf32>
    %74 = arith.mulf %71, %73 : vector<2x8x128xf32>
    %75 = arith.addf %70, %74 : vector<2x8x128xf32>
    %76 = arith.truncf %75 : vector<2x8x128xf32> to vector<2x8x128xbf16>
    %77 = vector.extract_strided_slice %43 {offsets = [0, 0, 0], sizes = [2, 8, 128], strides = [1, 1, 1]} : vector<2x8x256xf32> to vector<2x8x128xf32>
    %78 = arith.truncf %77 : vector<2x8x128xf32> to vector<2x8x128xbf16>
    "tpu.trace_start"() <{level = 10 : i32, message = "bqd,bkd->bqk"}> : () -> ()
    %cst_27 = arith.constant dense<0.000000e+00> : vector<2x8x8xf32>
    %79 = tpu.matmul %61, %76, %cst_27 {dimension_numbers = #tpu.dot_dimension_numbers<[2], [2], [1], [1], [0, 0, 0, 1, 1, 1], [0], [0]>} : vector<2x8x128xbf16>, vector<2x8x128xbf16>, vector<2x8x8xf32> -> vector<2x8x8xf32>
    "tpu.trace_stop"() : () -> ()
    %cst_28 = arith.constant dense<0xFF800000> : vector<2x8xf32>
    %80 = vector.multi_reduction <maximumf>, %79, %cst_28 [2] : vector<2x8x8xf32> to vector<2x8xf32>
    %81 = vector.shape_cast %80 : vector<2x8xf32> to vector<2x8x1xf32>
    %82 = vector.broadcast %81 : vector<2x8x1xf32> to vector<2x8x8xf32>
    %83 = arith.subf %79, %82 : vector<2x8x8xf32>
    %84 = math.exp %83 : vector<2x8x8xf32>
    %cst_29 = arith.constant dense<0.000000e+00> : vector<2x8xf32>
    %85 = vector.multi_reduction <add>, %84, %cst_29 [2] : vector<2x8x8xf32> to vector<2x8xf32>
    %86 = vector.shape_cast %85 : vector<2x8xf32> to vector<2x8x1xf32>
    %87 = arith.truncf %84 : vector<2x8x8xf32> to vector<2x8x8xbf16>
    "tpu.trace_start"() <{level = 10 : i32, message = "bqk,bkd->bqd"}> : () -> ()
    %cst_30 = arith.constant dense<0.000000e+00> : vector<2x8x128xf32>
    %88 = tpu.matmul %87, %78, %cst_30 {dimension_numbers = #tpu.dot_dimension_numbers<[2], [1], [1], [2], [0, 0, 0, 1, 1, 2], [0], [0]>} : vector<2x8x8xbf16>, vector<2x8x128xbf16>, vector<2x8x128xf32> -> vector<2x8x128xf32>
    "tpu.trace_stop"() : () -> ()
    %89 = tpu.reciprocal %86 {approx = true} : vector<2x8x1xf32> -> vector<2x8x1xf32>
    %90 = vector.broadcast %89 : vector<2x8x1xf32> to vector<2x8x128xf32>
    %91 = arith.mulf %88, %90 : vector<2x8x128xf32>
    %92 = vector.extract_strided_slice %39 {offsets = [0, 0, 128], sizes = [2, 8, 128], strides = [1, 1, 1]} : vector<2x8x256xf32> to vector<2x8x128xf32>
    %93 = vector.shape_cast %44 : vector<8x128xf32> to vector<1x8x128xf32>
    %94 = vector.broadcast %93 : vector<1x8x128xf32> to vector<2x8x128xf32>
    %95 = arith.mulf %92, %94 : vector<2x8x128xf32>
    %c1_i32_31 = arith.constant 1 : i32
    %96 = tpu.dynamic_rotate %92 by %c1_i32_31 dim 2 : vector<2x8x128xf32>, i32 -> vector<2x8x128xf32>
    %97 = vector.shape_cast %45 : vector<8x128xf32> to vector<1x8x128xf32>
    %98 = vector.broadcast %97 : vector<1x8x128xf32> to vector<2x8x128xf32>
    %99 = arith.mulf %96, %98 : vector<2x8x128xf32>
    %100 = arith.addf %95, %99 : vector<2x8x128xf32>
    %c127_i32_32 = arith.constant 127 : i32
    %101 = tpu.dynamic_rotate %92 by %c127_i32_32 dim 2 : vector<2x8x128xf32>, i32 -> vector<2x8x128xf32>
    %102 = vector.shape_cast %46 : vector<8x128xf32> to vector<1x8x128xf32>
    %103 = vector.broadcast %102 : vector<1x8x128xf32> to vector<2x8x128xf32>
    %104 = arith.mulf %101, %103 : vector<2x8x128xf32>
    %105 = arith.addf %100, %104 : vector<2x8x128xf32>
    %106 = arith.truncf %105 : vector<2x8x128xf32> to vector<2x8x128xbf16>
    %107 = vector.extract_strided_slice %41 {offsets = [0, 0, 128], sizes = [2, 8, 128], strides = [1, 1, 1]} : vector<2x8x256xf32> to vector<2x8x128xf32>
    %108 = vector.shape_cast %44 : vector<8x128xf32> to vector<1x8x128xf32>
    %109 = vector.broadcast %108 : vector<1x8x128xf32> to vector<2x8x128xf32>
    %110 = arith.mulf %107, %109 : vector<2x8x128xf32>
    %c1_i32_33 = arith.constant 1 : i32
    %111 = tpu.dynamic_rotate %107 by %c1_i32_33 dim 2 : vector<2x8x128xf32>, i32 -> vector<2x8x128xf32>
    %112 = vector.shape_cast %45 : vector<8x128xf32> to vector<1x8x128xf32>
    %113 = vector.broadcast %112 : vector<1x8x128xf32> to vector<2x8x128xf32>
    %114 = arith.mulf %111, %113 : vector<2x8x128xf32>
    %115 = arith.addf %110, %114 : vector<2x8x128xf32>
    %c127_i32_34 = arith.constant 127 : i32
    %116 = tpu.dynamic_rotate %107 by %c127_i32_34 dim 2 : vector<2x8x128xf32>, i32 -> vector<2x8x128xf32>
    %117 = vector.shape_cast %46 : vector<8x128xf32> to vector<1x8x128xf32>
    %118 = vector.broadcast %117 : vector<1x8x128xf32> to vector<2x8x128xf32>
    %119 = arith.mulf %116, %118 : vector<2x8x128xf32>
    %120 = arith.addf %115, %119 : vector<2x8x128xf32>
    %121 = arith.truncf %120 : vector<2x8x128xf32> to vector<2x8x128xbf16>
    %122 = vector.extract_strided_slice %43 {offsets = [0, 0, 128], sizes = [2, 8, 128], strides = [1, 1, 1]} : vector<2x8x256xf32> to vector<2x8x128xf32>
    %123 = arith.truncf %122 : vector<2x8x128xf32> to vector<2x8x128xbf16>
    "tpu.trace_start"() <{level = 10 : i32, message = "bqd,bkd->bqk"}> : () -> ()
    %cst_35 = arith.constant dense<0.000000e+00> : vector<2x8x8xf32>
    %124 = tpu.matmul %106, %121, %cst_35 {dimension_numbers = #tpu.dot_dimension_numbers<[2], [2], [1], [1], [0, 0, 0, 1, 1, 1], [0], [0]>} : vector<2x8x128xbf16>, vector<2x8x128xbf16>, vector<2x8x8xf32> -> vector<2x8x8xf32>
    "tpu.trace_stop"() : () -> ()
    %cst_36 = arith.constant dense<0xFF800000> : vector<2x8xf32>
    %125 = vector.multi_reduction <maximumf>, %124, %cst_36 [2] : vector<2x8x8xf32> to vector<2x8xf32>
    %126 = vector.shape_cast %125 : vector<2x8xf32> to vector<2x8x1xf32>
    %127 = vector.broadcast %126 : vector<2x8x1xf32> to vector<2x8x8xf32>
    %128 = arith.subf %124, %127 : vector<2x8x8xf32>
    %129 = math.exp %128 : vector<2x8x8xf32>
    %cst_37 = arith.constant dense<0.000000e+00> : vector<2x8xf32>
    %130 = vector.multi_reduction <add>, %129, %cst_37 [2] : vector<2x8x8xf32> to vector<2x8xf32>
    %131 = vector.shape_cast %130 : vector<2x8xf32> to vector<2x8x1xf32>
    %132 = arith.truncf %129 : vector<2x8x8xf32> to vector<2x8x8xbf16>
    "tpu.trace_start"() <{level = 10 : i32, message = "bqk,bkd->bqd"}> : () -> ()
    %cst_38 = arith.constant dense<0.000000e+00> : vector<2x8x128xf32>
    %133 = tpu.matmul %132, %123, %cst_38 {dimension_numbers = #tpu.dot_dimension_numbers<[2], [1], [1], [2], [0, 0, 0, 1, 1, 2], [0], [0]>} : vector<2x8x8xbf16>, vector<2x8x128xbf16>, vector<2x8x128xf32> -> vector<2x8x128xf32>
    "tpu.trace_stop"() : () -> ()
    %134 = tpu.reciprocal %131 {approx = true} : vector<2x8x1xf32> -> vector<2x8x1xf32>
    %135 = vector.broadcast %134 : vector<2x8x1xf32> to vector<2x8x128xf32>
    %136 = arith.mulf %133, %135 : vector<2x8x128xf32>
    %137 = tpu.concatenate %91, %136 in 2 : vector<2x8x128xf32>, vector<2x8x128xf32> -> vector<2x8x256xf32>
    %138 = vector.shape_cast %137 : vector<2x8x256xf32> to vector<16x256xf32>
    %139 = arith.truncf %138 : vector<16x256xf32> to vector<16x256xbf16>
    %c0_39 = arith.constant 0 : index
    %c0_40 = arith.constant 0 : index
    %c0_41 = arith.constant 0 : index
    %140 = vector.load %arg16[%c0_39, %c0_40, %c0_41] : memref<1x256x256xbf16, #tpu.memory_space<vmem>>, vector<1x256x256xbf16>
    %141 = vector.shape_cast %140 : vector<1x256x256xbf16> to vector<256x256xbf16>
    %cst_42 = arith.constant dense<0.000000e+00> : vector<16x256xf32>
    %142 = tpu.matmul %139, %141, %cst_42 {dimension_numbers = #tpu.dot_dimension_numbers<[1], [0], [0], [1], [0, 0, 1, 1], [], []>} : vector<16x256xbf16>, vector<256x256xbf16>, vector<16x256xf32> -> vector<16x256xf32>
    %c0_43 = arith.constant 0 : index
    %c0_44 = arith.constant 0 : index
    %c0_45 = arith.constant 0 : index
    %143 = vector.load %arg17[%c0_43, %c0_44, %c0_45] : memref<1x1x256xf32, #tpu.memory_space<vmem>>, vector<1x1x256xf32>
    %144 = vector.shape_cast %143 : vector<1x1x256xf32> to vector<1x256xf32>
    %145 = vector.broadcast %144 : vector<1x256xf32> to vector<16x256xf32>
    %146 = arith.addf %142, %145 : vector<16x256xf32>
    %147 = arith.addf %3, %146 : vector<16x256xf32>
    %c0_46 = arith.constant 0 : index
    %c0_47 = arith.constant 0 : index
    %c0_48 = arith.constant 0 : index
    %148 = vector.load %arg18[%c0_46, %c0_47, %c0_48] : memref<1x1x256xf32, #tpu.memory_space<vmem>>, vector<1x1x256xf32>
    %149 = vector.shape_cast %148 : vector<1x1x256xf32> to vector<1x256xf32>
    %c0_49 = arith.constant 0 : index
    %c0_50 = arith.constant 0 : index
    %c0_51 = arith.constant 0 : index
    %150 = vector.load %arg19[%c0_49, %c0_50, %c0_51] : memref<1x1x256xf32, #tpu.memory_space<vmem>>, vector<1x1x256xf32>
    %151 = vector.shape_cast %150 : vector<1x1x256xf32> to vector<1x256xf32>
    %cst_52 = arith.constant dense<0.000000e+00> : vector<16xf32>
    %152 = vector.multi_reduction <add>, %147, %cst_52 [1] : vector<16x256xf32> to vector<16xf32>
    %153 = vector.shape_cast %152 : vector<16xf32> to vector<16x1xf32>
    %cst_53 = arith.constant 2.560000e+02 : f32
    %154 = vector.broadcast %cst_53 : f32 to vector<16x1xf32>
    %155 = arith.divf %153, %154 : vector<16x1xf32>
    %156 = vector.broadcast %155 : vector<16x1xf32> to vector<16x256xf32>
    %157 = arith.subf %147, %156 : vector<16x256xf32>
    %158 = arith.mulf %157, %157 : vector<16x256xf32>
    %cst_54 = arith.constant dense<0.000000e+00> : vector<16xf32>
    %159 = vector.multi_reduction <add>, %158, %cst_54 [1] : vector<16x256xf32> to vector<16xf32>
    %160 = vector.shape_cast %159 : vector<16xf32> to vector<16x1xf32>
    %cst_55 = arith.constant 2.560000e+02 : f32
    %161 = vector.broadcast %cst_55 : f32 to vector<16x1xf32>
    %162 = arith.divf %160, %161 : vector<16x1xf32>
    %163 = vector.broadcast %155 : vector<16x1xf32> to vector<16x256xf32>
    %164 = arith.subf %147, %163 : vector<16x256xf32>
    %cst_56 = arith.constant 9.99999974E-6 : f32
    %165 = vector.broadcast %cst_56 : f32 to vector<16x1xf32>
    %166 = arith.addf %162, %165 : vector<16x1xf32>
    %167 = math.rsqrt %166 : vector<16x1xf32>
    %168 = vector.broadcast %167 : vector<16x1xf32> to vector<16x256xf32>
    %169 = arith.mulf %164, %168 : vector<16x256xf32>
    %170 = vector.broadcast %149 : vector<1x256xf32> to vector<16x256xf32>
    %171 = arith.mulf %169, %170 : vector<16x256xf32>
    %172 = vector.broadcast %151 : vector<1x256xf32> to vector<16x256xf32>
    %173 = arith.addf %171, %172 : vector<16x256xf32>
    %174 = arith.truncf %173 : vector<16x256xf32> to vector<16x256xbf16>
    %c0_57 = arith.constant 0 : index
    %c0_58 = arith.constant 0 : index
    %c0_59 = arith.constant 0 : index
    %175 = vector.load %arg20[%c0_57, %c0_58, %c0_59] : memref<1x256x512xbf16, #tpu.memory_space<vmem>>, vector<1x256x512xbf16>
    %176 = vector.shape_cast %175 : vector<1x256x512xbf16> to vector<256x512xbf16>
    %cst_60 = arith.constant dense<0.000000e+00> : vector<16x512xf32>
    %177 = tpu.matmul %174, %176, %cst_60 {dimension_numbers = #tpu.dot_dimension_numbers<[1], [0], [0], [1], [0, 0, 1, 1], [], []>} : vector<16x256xbf16>, vector<256x512xbf16>, vector<16x512xf32> -> vector<16x512xf32>
    %c0_61 = arith.constant 0 : index
    %c0_62 = arith.constant 0 : index
    %c0_63 = arith.constant 0 : index
    %178 = vector.load %arg21[%c0_61, %c0_62, %c0_63] : memref<1x1x512xf32, #tpu.memory_space<vmem>>, vector<1x1x512xf32>
    %179 = vector.shape_cast %178 : vector<1x1x512xf32> to vector<1x512xf32>
    %180 = vector.broadcast %179 : vector<1x512xf32> to vector<16x512xf32>
    %181 = arith.addf %177, %180 : vector<16x512xf32>
    %182 = arith.mulf %181, %181 : vector<16x512xf32>
    %183 = arith.mulf %181, %182 : vector<16x512xf32>
    %cst_64 = arith.constant 4.471500e-02 : f32
    %184 = vector.broadcast %cst_64 : f32 to vector<16x512xf32>
    %185 = arith.mulf %184, %183 : vector<16x512xf32>
    %186 = arith.addf %181, %185 : vector<16x512xf32>
    %cst_65 = arith.constant 0.797884583 : f32
    %187 = vector.broadcast %cst_65 : f32 to vector<16x512xf32>
    %188 = arith.mulf %187, %186 : vector<16x512xf32>
    %189 = math.tanh %188 : vector<16x512xf32>
    %cst_66 = arith.constant 1.000000e+00 : f32
    %190 = vector.broadcast %cst_66 : f32 to vector<16x512xf32>
    %191 = arith.addf %190, %189 : vector<16x512xf32>
    %cst_67 = arith.constant 5.000000e-01 : f32
    %192 = vector.broadcast %cst_67 : f32 to vector<16x512xf32>
    %193 = arith.mulf %192, %191 : vector<16x512xf32>
    %194 = arith.mulf %181, %193 : vector<16x512xf32>
    %195 = arith.truncf %194 : vector<16x512xf32> to vector<16x512xbf16>
    %c0_68 = arith.constant 0 : index
    %c0_69 = arith.constant 0 : index
    %c0_70 = arith.constant 0 : index
    %196 = vector.load %arg22[%c0_68, %c0_69, %c0_70] : memref<1x512x256xbf16, #tpu.memory_space<vmem>>, vector<1x512x256xbf16>
    %197 = vector.shape_cast %196 : vector<1x512x256xbf16> to vector<512x256xbf16>
    %cst_71 = arith.constant dense<0.000000e+00> : vector<16x256xf32>
    %198 = tpu.matmul %195, %197, %cst_71 {dimension_numbers = #tpu.dot_dimension_numbers<[1], [0], [0], [1], [0, 0, 1, 1], [], []>} : vector<16x512xbf16>, vector<512x256xbf16>, vector<16x256xf32> -> vector<16x256xf32>
    %c0_72 = arith.constant 0 : index
    %c0_73 = arith.constant 0 : index
    %c0_74 = arith.constant 0 : index
    %199 = vector.load %arg23[%c0_72, %c0_73, %c0_74] : memref<1x1x256xf32, #tpu.memory_space<vmem>>, vector<1x1x256xf32>
    %200 = vector.shape_cast %199 : vector<1x1x256xf32> to vector<1x256xf32>
    %201 = vector.broadcast %200 : vector<1x256xf32> to vector<16x256xf32>
    %202 = arith.addf %198, %201 : vector<16x256xf32>
    %203 = arith.addf %147, %202 : vector<16x256xf32>
    %c0_75 = arith.constant 0 : index
    %c0_76 = arith.constant 0 : index
    %204 = vector.load %arg25[%c0_75, %c0_76] : memref<16x256xf32, #tpu.memory_space<vmem>>, vector<16x256xf32>
    tpu.vector_store %arg25[%c0_75, %c0_76], %203 {strides = array<i32>} : memref<16x256xf32, #tpu.memory_space<vmem>>, vector<16x256xf32>,
    %c1_i32_77 = arith.constant 1 : i32
    %205 = arith.cmpi eq, %arg1, %c1_i32_77 : i32
    %206 = arith.extui %205 : i1 to i32
    %c0_i32_78 = arith.constant 0 : i32
    %207 = arith.cmpi ne, %206, %c0_i32_78 : i32
    scf.if %207 {
      %c0_79 = arith.constant 0 : index
      %c0_80 = arith.constant 0 : index
      %208 = vector.load %arg8[%c0_79, %c0_80] : memref<1x256xf32, #tpu.memory_space<vmem>>, vector<1x256xf32>
      %c0_81 = arith.constant 0 : index
      %c0_82 = arith.constant 0 : index
      %209 = vector.load %arg9[%c0_81, %c0_82] : memref<1x256xf32, #tpu.memory_space<vmem>>, vector<1x256xf32>
      %cst_83 = arith.constant dense<0.000000e+00> : vector<16xf32>
      %210 = vector.multi_reduction <add>, %203, %cst_83 [1] : vector<16x256xf32> to vector<16xf32>
      %211 = vector.shape_cast %210 : vector<16xf32> to vector<16x1xf32>
      %cst_84 = arith.constant 2.560000e+02 : f32
      %212 = vector.broadcast %cst_84 : f32 to vector<16x1xf32>
      %213 = arith.divf %211, %212 : vector<16x1xf32>
      %214 = vector.broadcast %213 : vector<16x1xf32> to vector<16x256xf32>
      %215 = arith.subf %203, %214 : vector<16x256xf32>
      %216 = arith.mulf %215, %215 : vector<16x256xf32>
      %cst_85 = arith.constant dense<0.000000e+00> : vector<16xf32>
      %217 = vector.multi_reduction <add>, %216, %cst_85 [1] : vector<16x256xf32> to vector<16xf32>
      %218 = vector.shape_cast %217 : vector<16xf32> to vector<16x1xf32>
      %cst_86 = arith.constant 2.560000e+02 : f32
      %219 = vector.broadcast %cst_86 : f32 to vector<16x1xf32>
      %220 = arith.divf %218, %219 : vector<16x1xf32>
      %221 = vector.broadcast %213 : vector<16x1xf32> to vector<16x256xf32>
      %222 = arith.subf %203, %221 : vector<16x256xf32>
      %cst_87 = arith.constant 9.99999974E-6 : f32
      %223 = vector.broadcast %cst_87 : f32 to vector<16x1xf32>
      %224 = arith.addf %220, %223 : vector<16x1xf32>
      %225 = math.rsqrt %224 : vector<16x1xf32>
      %226 = vector.broadcast %225 : vector<16x1xf32> to vector<16x256xf32>
      %227 = arith.mulf %222, %226 : vector<16x256xf32>
      %228 = vector.broadcast %208 : vector<1x256xf32> to vector<16x256xf32>
      %229 = arith.mulf %227, %228 : vector<16x256xf32>
      %230 = vector.broadcast %209 : vector<1x256xf32> to vector<16x256xf32>
      %231 = arith.addf %229, %230 : vector<16x256xf32>
      %232 = arith.truncf %231 : vector<16x256xf32> to vector<16x256xbf16>
      %c0_88 = arith.constant 0 : index
      %c0_89 = arith.constant 0 : index
      %233 = vector.load %arg10[%c0_88, %c0_89] : memref<256x128xbf16, #tpu.memory_space<vmem>>, vector<256x128xbf16>
      %cst_90 = arith.constant dense<0.000000e+00> : vector<16x128xf32>
      %234 = tpu.matmul %232, %233, %cst_90 {dimension_numbers = #tpu.dot_dimension_numbers<[1], [0], [0], [1], [0, 0, 1, 1], [], []>} : vector<16x256xbf16>, vector<256x128xbf16>, vector<16x128xf32> -> vector<16x128xf32>
      %c0_91 = arith.constant 0 : index
      %c0_92 = arith.constant 0 : index
      %235 = vector.load %arg11[%c0_91, %c0_92] : memref<1x128xf32, #tpu.memory_space<vmem>>, vector<1x128xf32>
      %236 = vector.broadcast %235 : vector<1x128xf32> to vector<16x128xf32>
      %237 = arith.addf %234, %236 : vector<16x128xf32>
      %238 = vector.shape_cast %237 : vector<16x128xf32> to vector<2x8x128xf32>
      %c0_93 = arith.constant 0 : index
      %c0_94 = arith.constant 0 : index
      %c0_95 = arith.constant 0 : index
      %239 = vector.load %arg24[%c0_93, %c0_94, %c0_95] : memref<2x8x128xf32, #tpu.memory_space<vmem>>, vector<2x8x128xf32>
      tpu.vector_store %arg24[%c0_93, %c0_94, %c0_95], %238 {strides = array<i32>} : memref<2x8x128xf32, #tpu.memory_space<vmem>>, vector<2x8x128xf32>,
    } else {
    }
    return
  }
  func.func @transform_0(%arg0: i32, %arg1: i32) -> (i32, i32, i32) {
    %c0_i32 = arith.constant 0 : i32
    %c0_i32_0 = arith.constant 0 : i32
    %c0_i32_1 = arith.constant 0 : i32
    return %arg0, %c0_i32, %c0_i32_0 : i32, i32, i32
  }
  func.func @transform_1(%arg0: i32, %arg1: i32) -> (i32, i32) {
    %c0_i32 = arith.constant 0 : i32
    %c0_i32_0 = arith.constant 0 : i32
    %c0_i32_1 = arith.constant 0 : i32
    return %c0_i32, %c0_i32_0 : i32, i32
  }
  func.func @transform_2(%arg0: i32, %arg1: i32) -> (i32, i32) {
    %c0_i32 = arith.constant 0 : i32
    %c0_i32_0 = arith.constant 0 : i32
    %c0_i32_1 = arith.constant 0 : i32
    return %c0_i32, %c0_i32_0 : i32, i32
  }
  func.func @transform_3(%arg0: i32, %arg1: i32) -> (i32, i32) {
    %c0_i32 = arith.constant 0 : i32
    %c0_i32_0 = arith.constant 0 : i32
    %c0_i32_1 = arith.constant 0 : i32
    return %c0_i32, %c0_i32_0 : i32, i32
  }
  func.func @transform_4(%arg0: i32, %arg1: i32) -> (i32, i32) {
    %c0_i32 = arith.constant 0 : i32
    %c0_i32_0 = arith.constant 0 : i32
    %c0_i32_1 = arith.constant 0 : i32
    return %c0_i32, %c0_i32_0 : i32, i32
  }
  func.func @transform_5(%arg0: i32, %arg1: i32) -> (i32, i32) {
    %c0_i32 = arith.constant 0 : i32
    %c0_i32_0 = arith.constant 0 : i32
    %c0_i32_1 = arith.constant 0 : i32
    return %c0_i32, %c0_i32_0 : i32, i32
  }
  func.func @transform_6(%arg0: i32, %arg1: i32) -> (i32, i32) {
    %c0_i32 = arith.constant 0 : i32
    %c0_i32_0 = arith.constant 0 : i32
    %c0_i32_1 = arith.constant 0 : i32
    return %c0_i32, %c0_i32_0 : i32, i32
  }
  func.func @transform_7(%arg0: i32, %arg1: i32) -> (i32, i32) {
    %c0_i32 = arith.constant 0 : i32
    %c0_i32_0 = arith.constant 0 : i32
    %c0_i32_1 = arith.constant 0 : i32
    return %c0_i32, %c0_i32_0 : i32, i32
  }
  func.func @transform_8(%arg0: i32, %arg1: i32) -> (i32, i32) {
    %c0_i32 = arith.constant 0 : i32
    %c0_i32_0 = arith.constant 0 : i32
    %c0_i32_1 = arith.constant 0 : i32
    return %c0_i32, %c0_i32_0 : i32, i32
  }
  func.func @transform_9(%arg0: i32, %arg1: i32) -> (i32, i32) {
    %c0_i32 = arith.constant 0 : i32
    %c0_i32_0 = arith.constant 0 : i32
    %c0_i32_1 = arith.constant 0 : i32
    return %c0_i32, %c0_i32_0 : i32, i32
  }
  func.func @transform_10(%arg0: i32, %arg1: i32) -> (i32, i32, i32) {
    %c0_i32 = arith.constant 0 : i32
    %c0_i32_0 = arith.constant 0 : i32
    %c0_i32_1 = arith.constant 0 : i32
    return %arg1, %c0_i32, %c0_i32_0 : i32, i32, i32
  }
  func.func @transform_11(%arg0: i32, %arg1: i32) -> (i32, i32, i32) {
    %c0_i32 = arith.constant 0 : i32
    %c0_i32_0 = arith.constant 0 : i32
    %c0_i32_1 = arith.constant 0 : i32
    return %arg1, %c0_i32, %c0_i32_0 : i32, i32, i32
  }
  func.func @transform_12(%arg0: i32, %arg1: i32) -> (i32, i32, i32) {
    %c0_i32 = arith.constant 0 : i32
    %c0_i32_0 = arith.constant 0 : i32
    %c0_i32_1 = arith.constant 0 : i32
    return %arg1, %c0_i32, %c0_i32_0 : i32, i32, i32
  }
  func.func @transform_13(%arg0: i32, %arg1: i32) -> (i32, i32, i32) {
    %c0_i32 = arith.constant 0 : i32
    %c0_i32_0 = arith.constant 0 : i32
    %c0_i32_1 = arith.constant 0 : i32
    return %arg1, %c0_i32, %c0_i32_0 : i32, i32, i32
  }
  func.func @transform_14(%arg0: i32, %arg1: i32) -> (i32, i32, i32) {
    %c0_i32 = arith.constant 0 : i32
    %c0_i32_0 = arith.constant 0 : i32
    %c0_i32_1 = arith.constant 0 : i32
    return %arg1, %c0_i32, %c0_i32_0 : i32, i32, i32
  }
  func.func @transform_15(%arg0: i32, %arg1: i32) -> (i32, i32, i32) {
    %c0_i32 = arith.constant 0 : i32
    %c0_i32_0 = arith.constant 0 : i32
    %c0_i32_1 = arith.constant 0 : i32
    return %arg1, %c0_i32, %c0_i32_0 : i32, i32, i32
  }
  func.func @transform_16(%arg0: i32, %arg1: i32) -> (i32, i32, i32) {
    %c0_i32 = arith.constant 0 : i32
    %c0_i32_0 = arith.constant 0 : i32
    %c0_i32_1 = arith.constant 0 : i32
    return %arg1, %c0_i32, %c0_i32_0 : i32, i32, i32
  }
  func.func @transform_17(%arg0: i32, %arg1: i32) -> (i32, i32, i32) {
    %c0_i32 = arith.constant 0 : i32
    %c0_i32_0 = arith.constant 0 : i32
    %c0_i32_1 = arith.constant 0 : i32
    return %arg1, %c0_i32, %c0_i32_0 : i32, i32, i32
  }
  func.func @transform_18(%arg0: i32, %arg1: i32) -> (i32, i32, i32) {
    %c0_i32 = arith.constant 0 : i32
    %c0_i32_0 = arith.constant 0 : i32
    %c0_i32_1 = arith.constant 0 : i32
    return %arg1, %c0_i32, %c0_i32_0 : i32, i32, i32
  }
  func.func @transform_19(%arg0: i32, %arg1: i32) -> (i32, i32, i32) {
    %c0_i32 = arith.constant 0 : i32
    %c0_i32_0 = arith.constant 0 : i32
    %c0_i32_1 = arith.constant 0 : i32
    return %arg1, %c0_i32, %c0_i32_0 : i32, i32, i32
  }
  func.func @transform_20(%arg0: i32, %arg1: i32) -> (i32, i32, i32) {
    %c0_i32 = arith.constant 0 : i32
    %c0_i32_0 = arith.constant 0 : i32
    %c0_i32_1 = arith.constant 0 : i32
    return %arg1, %c0_i32, %c0_i32_0 : i32, i32, i32
  }
  func.func @transform_21(%arg0: i32, %arg1: i32) -> (i32, i32, i32) {
    %c0_i32 = arith.constant 0 : i32
    %c0_i32_0 = arith.constant 0 : i32
    %c0_i32_1 = arith.constant 0 : i32
    return %arg1, %c0_i32, %c0_i32_0 : i32, i32, i32
  }
  func.func @transform_22(%arg0: i32, %arg1: i32) -> (i32, i32, i32) {
    %c0_i32 = arith.constant 0 : i32
    %c0_i32_0 = arith.constant 0 : i32
    %c0_i32_1 = arith.constant 0 : i32
    return %arg0, %c0_i32, %c0_i32_0 : i32, i32, i32
  }
}

</mosaic_0001>

<llo_original>
// kernel: tpu_custom_call.1
$region0: #{tpu_custom_call.1}
  #allocation0 [shape = 'u32[]', space=smem, size = 0x4, offset = 0x4, fixed_abs, tag = 'smem constant byte address 0x4 - core index']
  #allocation1 [shape = 'u32[144,128]{1,0:T(1,128)}', space=vmem, size = 0x12000, scoped, tag = 'internal scratch']
  #allocation2 [shape = 'f32[16,256]{1,0:T(8,128)}', space=vmem, size = 0x4000, scoped, tag = 'scratch operand']
  %s0 = inlined_call_operand.hbm [shape: f32[4,8,128], index: 0, kind: input, shape index: {}]
  %s1 = inlined_call_operand.hbm [shape: f32[8,128], index: 1, kind: input, shape index: {}]
  %s2 = inlined_call_operand.hbm [shape: f32[8,128], index: 2, kind: input, shape index: {}]
  %s3 = inlined_call_operand.hbm [shape: f32[8,128], index: 3, kind: input, shape index: {}]
  %s4 = inlined_call_operand.hbm [shape: bf16[128,256], index: 4, kind: input, shape index: {}]
  %s5 = inlined_call_operand.hbm [shape: f32[1,256], index: 5, kind: input, shape index: {}]
  %s6 = inlined_call_operand.hbm [shape: f32[1,256], index: 6, kind: input, shape index: {}]
  %s7 = inlined_call_operand.hbm [shape: f32[1,256], index: 7, kind: input, shape index: {}]
  %s8 = inlined_call_operand.hbm [shape: bf16[256,128], index: 8, kind: input, shape index: {}]
  %s9 = inlined_call_operand.hbm [shape: f32[1,128], index: 9, kind: input, shape index: {}]
  %s10 = inlined_call_operand.hbm [shape: f32[2,1,256], index: 10, kind: input, shape index: {}]
  %s11 = inlined_call_operand.hbm [shape: f32[2,1,256], index: 11, kind: input, shape index: {}]
  %s12 = inlined_call_operand.hbm [shape: bf16[2,256,768], index: 12, kind: input, shape index: {}]
  %s13 = inlined_call_operand.hbm [shape: f32[2,1,768], index: 13, kind: input, shape index: {}]
  %s14 = inlined_call_operand.hbm [shape: bf16[2,256,256], index: 14, kind: input, shape index: {}]
  %s15 = inlined_call_operand.hbm [shape: f32[2,1,256], index: 15, kind: input, shape index: {}]
  %s16 = inlined_call_operand.hbm [shape: f32[2,1,256], index: 16, kind: input, shape index: {}]
  %s17 = inlined_call_operand.hbm [shape: f32[2,1,256], index: 17, kind: input, shape index: {}]
  %s18 = inlined_call_operand.hbm [shape: bf16[2,256,512], index: 18, kind: input, shape index: {}]
  %s19 = inlined_call_operand.hbm [shape: f32[2,1,512], index: 19, kind: input, shape index: {}]
  %s20 = inlined_call_operand.hbm [shape: bf16[2,512,256], index: 20, kind: input, shape index: {}]
  %s21 = inlined_call_operand.hbm [shape: f32[2,1,256], index: 21, kind: input, shape index: {}]
  %s22 = inlined_call_operand.hbm [shape: f32[4,8,128], index: 22, kind: output, shape index: {}]
  %s23 = sld [smem:[#allocation0]]
  $region217: #{tpu_custom_call.1} parent=0
    _
  %s25 = ssub.s32 1, %s23
  %s26 = scalar_select 0, %s25, %s23
  $region1: #{tpu_custom_call.1} parent=0
    #allocation3 [shape = 'u8[16384]{0}', space=vmem, size = 0x4000, scoped, tag = 'input window, operand 0']
    #allocation4 [shape = 's32[2]{0}', space=sflag, size = 0x8, scoped, tag = 'scoped memory for tpu_custom_call.1']
    #allocation5 [shape = 's32[2]{0}', space=sflag, size = 0x8, scoped, tag = 'scoped memory for tpu_custom_call.1']
    #allocation6 [shape = 'u8[4096]{0}', space=vmem, size = 0x1000, scoped, tag = 'input window, operand 1, single buffered']
    #allocation7 [shape = 's32[1]{0}', space=sflag, size = 0x4, scoped, tag = 'scoped memory for tpu_custom_call.1']
    #allocation8 [shape = 'u8[4096]{0}', space=vmem, size = 0x1000, scoped, tag = 'input window, operand 2, single buffered']
    #allocation9 [shape = 'u8[4096]{0}', space=vmem, size = 0x1000, scoped, tag = 'input window, operand 3, single buffered']
    #allocation10 [shape = 's32[1]{0}', space=sflag, size = 0x4, scoped, tag = 'scoped memory for tpu_custom_call.1']
    #allocation11 [shape = 'u8[65536]{0}', space=vmem, size = 0x10000, scoped, tag = 'input window, operand 4, single buffered']
    #allocation12 [shape = 'u8[1024]{0}', space=vmem, size = 0x400, scoped, tag = 'input window, operand 5, single buffered']
    #allocation13 [shape = 's32[1]{0}', space=sflag, size = 0x4, scoped, tag = 'scoped memory for tpu_custom_call.1']
    #allocation14 [shape = 'u8[1024]{0}', space=vmem, size = 0x400, scoped, tag = 'input window, operand 6, single buffered']
    #allocation15 [shape = 'u8[1024]{0}', space=vmem, size = 0x400, scoped, tag = 'input window, operand 7, single buffered']
    #allocation16 [shape = 's32[1]{0}', space=sflag, size = 0x4, scoped, tag = 'scoped memory for tpu_custom_call.1']
    #allocation17 [shape = 'u8[65536]{0}', space=vmem, size = 0x10000, scoped, tag = 'input window, operand 8, single buffered']
    #allocation18 [shape = 'u8[512]{0}', space=vmem, size = 0x400, scoped, tag = 'input window, operand 9, single buffered']
    #allocation19 [shape = 's32[1]{0}', space=sflag, size = 0x4, scoped, tag = 'scoped memory for tpu_custom_call.1']
    #allocation20 [shape = 'u8[2048]{0}', space=vmem, size = 0x800, scoped, tag = 'input window, operand 10']
    #allocation21 [shape = 'u8[2048]{0}', space=vmem, size = 0x800, scoped, tag = 'input window, operand 11']
    #allocation22 [shape = 'u8[786432]{0}', space=vmem, size = 0xc0000, scoped, tag = 'input window, operand 12']
    #allocation23 [shape = 'u8[6144]{0}', space=vmem, size = 0x1800, scoped, tag = 'input window, operand 13']
    #allocation24 [shape = 'u8[262144]{0}', space=vmem, size = 0x40000, scoped, tag = 'input window, operand 14']
    #allocation25 [shape = 'u8[2048]{0}', space=vmem, size = 0x800, scoped, tag = 'input window, operand 15']
    #allocation26 [shape = 'u8[2048]{0}', space=vmem, size = 0x800, scoped, tag = 'input window, operand 16']
    #allocation27 [shape = 'u8[2048]{0}', space=vmem, size = 0x800, scoped, tag = 'input window, operand 17']
    #allocation28 [shape = 'u8[524288]{0}', space=vmem, size = 0x80000, scoped, tag = 'input window, operand 18']
    #allocation29 [shape = 'u8[4096]{0}', space=vmem, size = 0x1000, scoped, tag = 'input window, operand 19']
    #allocation30 [shape = 'u8[524288]{0}', space=vmem, size = 0x80000, scoped, tag = 'input window, operand 20']
    #allocation31 [shape = 'u8[2048]{0}', space=vmem, size = 0x800, scoped, tag = 'input window, operand 21']
    #allocation32 [shape = 'u8[16384]{0}', space=vmem, size = 0x4000, scoped, tag = 'output window, operand 0']
    %27 = vsyncpa [#allocation4], 0
    %s28 = scalar_lea.sflag [#allocation4], 1
    %29 = vsyncpa %s28, 0
    %30 = vsyncpa [#allocation7], 0
    %31 = vsyncpa [#allocation10], 0
    %32 = vsyncpa [#allocation13], 0
    %33 = vsyncpa [#allocation16], 0
    %34 = vsyncpa [#allocation19], 0
    %35 = vsyncpa [#allocation5], 0
    %s36 = scalar_lea.sflag [#allocation5], 1
    %37 = vsyncpa %s36, 0
    loop: start=0, step=1, limit=6
    $region2: #{tpu_custom_call.1} parent=1 // loop_pre_header
      _
    $region3: #{tpu_custom_call.1} parent=1 // loop_header
      %s39 = sphi 0, %s43
      %p40 = scmp.ge.s32.totalorder %s39, 6
      %s46 = sphi 0, %s58
      %s47 = sphi 0, %s54
      %s48 = sphi 0, %s46
      %s49 = sphi 0, %s47
      %s50 = sphi 0, %s48
      %s51 = sphi 0, %s49
      %s61 = sphi 0, %s63
      %s64 = sphi 0, %s61
      %s65 = sphi 0, %s64
      %s81 = sphi 0, %s65
      %s85 = sphi 0, %s85
      %s87 = sphi 0, %s85
      %s88 = sphi 0, %s87
      %s102 = sphi 0, %s88
      %s106 = sphi 0, %s106
      %s108 = sphi 0, %s106
      %s109 = sphi 0, %s108
      %s123 = sphi 0, %s109
      %s127 = sphi 0, %s127
      %s129 = sphi 0, %s127
      %s130 = sphi 0, %s129
      %s144 = sphi 0, %s130
      %s148 = sphi 0, %s148
      %s150 = sphi 0, %s148
      %s151 = sphi 0, %s150
      %s165 = sphi 0, %s151
      %s169 = sphi 0, %s169
      %s171 = sphi 0, %s169
      %s172 = sphi 0, %s171
      %s186 = sphi 0, %s172
      %s190 = sphi 0, %s190
      %s192 = sphi 0, %s190
      %s193 = sphi 0, %s192
      %s207 = sphi 0, %s193
      %s211 = sphi 0, %s211
      %s213 = sphi 0, %s211
      %s214 = sphi 0, %s213
      %s228 = sphi 0, %s214
      %s232 = sphi 0, %s232
      %s234 = sphi 0, %s232
      %s235 = sphi 0, %s234
      %s249 = sphi 0, %s235
      %s253 = sphi 0, %s253
      %s255 = sphi 0, %s253
      %s256 = sphi 0, %s255
      %s270 = sphi 0, %s256
      %s276 = sphi 0, %s278
      %s279 = sphi 0, %s276
      %s280 = sphi 0, %s279
      %s296 = sphi 0, %s280
      %s302 = sphi 0, %s304
      %s305 = sphi 0, %s302
      %s306 = sphi 0, %s305
      %s322 = sphi 0, %s306
      %s328 = sphi 0, %s330
      %s331 = sphi 0, %s328
      %s332 = sphi 0, %s331
      %s348 = sphi 0, %s332
      %s354 = sphi 0, %s356
      %s357 = sphi 0, %s354
      %s358 = sphi 0, %s357
      %s374 = sphi 0, %s358
      %s380 = sphi 0, %s382
      %s383 = sphi 0, %s380
      %s384 = sphi 0, %s383
      %s400 = sphi 0, %s384
      %s406 = sphi 0, %s408
      %s409 = sphi 0, %s406
      %s410 = sphi 0, %s409
      %s426 = sphi 0, %s410
      %s432 = sphi 0, %s434
      %s435 = sphi 0, %s432
      %s436 = sphi 0, %s435
      %s452 = sphi 0, %s436
      %s458 = sphi 0, %s460
      %s461 = sphi 0, %s458
      %s462 = sphi 0, %s461
      %s478 = sphi 0, %s462
      %s484 = sphi 0, %s486
      %s487 = sphi 0, %s484
      %s488 = sphi 0, %s487
      %s504 = sphi 0, %s488
      %s510 = sphi 0, %s512
      %s513 = sphi 0, %s510
      %s514 = sphi 0, %s513
      %s530 = sphi 0, %s514
      %s536 = sphi 0, %s538
      %s539 = sphi 0, %s536
      %s540 = sphi 0, %s539
      %s556 = sphi 0, %s540
      %s562 = sphi 0, %s564
      %s565 = sphi 0, %s562
      %s566 = sphi 0, %s565
      %s582 = sphi 0, %s566
      %s588 = sphi 0, %s590
      %s591 = sphi 0, %s588
      %s592 = sphi 0, %s591
      %s608 = sphi 0, %s592
    $region4: #{tpu_custom_call.1} parent=1 // loop_header_branch
      %42 = sbr.rel (%p40) target = $region8
    $region5: #{tpu_custom_call.1} parent=1 // loop_body
      %s44 = ssub.s32 %s39, 1
      %s45 = ssub.s32 %s39, 2
      %s52 = sadd.s32 1, %s47
      %p53 = scmp.ge.s32.totalorder %s52, 2
      %s54 = scalar_select %p53, 0, %s52
      %s55 = sadd.s32 1, %s46
      %s56 = scalar_select %p53, %s55, %s46
      %p57 = scmp.ge.s32.totalorder %s56, 2
      %s58 = scalar_select %p57, 0, %s56
      %s59 = ssub.s32 %s46, %s58
      %p60 = scmp.eq.s32.totalorder %s59, 0
      %s62 = sadd.s32 %s61, 1
      %s63 = scalar_select %p60, %s61, %s62
      %p66 = pneg %p60
      %p67 = scmp.eq.s32.totalorder %s39, 3
      %p68 = por %p66, %p67
      %p69 = scmp.ne.s32.totalorder %s61, %s64
      %p70 = scmp.eq.s32.totalorder %s39, 0
      %p71 = por %p69, %p70
      %p72 = scmp.ne.s32.totalorder %s61, %s64
      %p73 = scmp.eq.s32.totalorder %s44, 3
      %p74 = por %p72, %p73
      %p75 = scmp.ne.s32.totalorder %s64, %s65
      %p76 = scmp.eq.s32.totalorder %s44, 0
      %p77 = por %p75, %p76
      %p78 = scmp.ne.s32.totalorder %s64, %s65
      %p79 = scmp.eq.s32.totalorder %s45, 3
      %p80 = por %p78, %p79
      %p82 = scmp.ne.s32.totalorder %s65, %s81
      %p83 = scmp.eq.s32.totalorder %s45, 0
      %p84 = por %p82, %p83
      %s86 = sadd.s32 %s85, 1
      %p89 = scmp.eq.s32.totalorder %s39, 3
      %p90 = scmp.ne.s32.totalorder %s85, %s87
      %p91 = scmp.eq.s32.totalorder %s39, 0
      %p92 = por %p90, %p91
      %p93 = scmp.ne.s32.totalorder %s85, %s87
      %p94 = scmp.eq.s32.totalorder %s44, 3
      %p95 = por %p93, %p94
      %p96 = scmp.ne.s32.totalorder %s87, %s88
      %p97 = scmp.eq.s32.totalorder %s44, 0
      %p98 = por %p96, %p97
      %p99 = scmp.ne.s32.totalorder %s87, %s88
      %p100 = scmp.eq.s32.totalorder %s45, 3
      %p101 = por %p99, %p100
      %p103 = scmp.ne.s32.totalorder %s88, %s102
      %p104 = scmp.eq.s32.totalorder %s45, 0
      %p105 = por %p103, %p104
      %s107 = sadd.s32 %s106, 1
      %p110 = scmp.eq.s32.totalorder %s39, 3
      %p111 = scmp.ne.s32.totalorder %s106, %s108
      %p112 = scmp.eq.s32.totalorder %s39, 0
      %p113 = por %p111, %p112
      %p114 = scmp.ne.s32.totalorder %s106, %s108
      %p115 = scmp.eq.s32.totalorder %s44, 3
      %p116 = por %p114, %p115
      %p117 = scmp.ne.s32.totalorder %s108, %s109
      %p118 = scmp.eq.s32.totalorder %s44, 0
      %p119 = por %p117, %p118
      %p120 = scmp.ne.s32.totalorder %s108, %s109
      %p121 = scmp.eq.s32.totalorder %s45, 3
      %p122 = por %p120, %p121
      %p124 = scmp.ne.s32.totalorder %s109, %s123
      %p125 = scmp.eq.s32.totalorder %s45, 0
      %p126 = por %p124, %p125
      %s128 = sadd.s32 %s127, 1
      %p131 = scmp.eq.s32.totalorder %s39, 3
      %p132 = scmp.ne.s32.totalorder %s127, %s129
      %p133 = scmp.eq.s32.totalorder %s39, 0
      %p134 = por %p132, %p133
      %p135 = scmp.ne.s32.totalorder %s127, %s129
      %p136 = scmp.eq.s32.totalorder %s44, 3
      %p137 = por %p135, %p136
      %p138 = scmp.ne.s32.totalorder %s129, %s130
      %p139 = scmp.eq.s32.totalorder %s44, 0
      %p140 = por %p138, %p139
      %p141 = scmp.ne.s32.totalorder %s129, %s130
      %p142 = scmp.eq.s32.totalorder %s45, 3
      %p143 = por %p141, %p142
      %p145 = scmp.ne.s32.totalorder %s130, %s144
      %p146 = scmp.eq.s32.totalorder %s45, 0
      %p147 = por %p145, %p146
      %s149 = sadd.s32 %s148, 1
      %p152 = scmp.eq.s32.totalorder %s39, 3
      %p153 = scmp.ne.s32.totalorder %s148, %s150
      %p154 = scmp.eq.s32.totalorder %s39, 0
      %p155 = por %p153, %p154
      %p156 = scmp.ne.s32.totalorder %s148, %s150
      %p157 = scmp.eq.s32.totalorder %s44, 3
      %p158 = por %p156, %p157
      %p159 = scmp.ne.s32.totalorder %s150, %s151
      %p160 = scmp.eq.s32.totalorder %s44, 0
      %p161 = por %p159, %p160
      %p162 = scmp.ne.s32.totalorder %s150, %s151
      %p163 = scmp.eq.s32.totalorder %s45, 3
      %p164 = por %p162, %p163
      %p166 = scmp.ne.s32.totalorder %s151, %s165
      %p167 = scmp.eq.s32.totalorder %s45, 0
      %p168 = por %p166, %p167
      %s170 = sadd.s32 %s169, 1
      %p173 = scmp.eq.s32.totalorder %s39, 3
      %p174 = scmp.ne.s32.totalorder %s169, %s171
      %p175 = scmp.eq.s32.totalorder %s39, 0
      %p176 = por %p174, %p175
      %p177 = scmp.ne.s32.totalorder %s169, %s171
      %p178 = scmp.eq.s32.totalorder %s44, 3
      %p179 = por %p177, %p178
      %p180 = scmp.ne.s32.totalorder %s171, %s172
      %p181 = scmp.eq.s32.totalorder %s44, 0
      %p182 = por %p180, %p181
      %p183 = scmp.ne.s32.totalorder %s171, %s172
      %p184 = scmp.eq.s32.totalorder %s45, 3
      %p185 = por %p183, %p184
      %p187 = scmp.ne.s32.totalorder %s172, %s186
      %p188 = scmp.eq.s32.totalorder %s45, 0
      %p189 = por %p187, %p188
      %s191 = sadd.s32 %s190, 1
      %p194 = scmp.eq.s32.totalorder %s39, 3
      %p195 = scmp.ne.s32.totalorder %s190, %s192
      %p196 = scmp.eq.s32.totalorder %s39, 0
      %p197 = por %p195, %p196
      %p198 = scmp.ne.s32.totalorder %s190, %s192
      %p199 = scmp.eq.s32.totalorder %s44, 3
      %p200 = por %p198, %p199
      %p201 = scmp.ne.s32.totalorder %s192, %s193
      %p202 = scmp.eq.s32.totalorder %s44, 0
      %p203 = por %p201, %p202
      %p204 = scmp.ne.s32.totalorder %s192, %s193
      %p205 = scmp.eq.s32.totalorder %s45, 3
      %p206 = por %p204, %p205
      %p208 = scmp.ne.s32.totalorder %s193, %s207
      %p209 = scmp.eq.s32.totalorder %s45, 0
      %p210 = por %p208, %p209
      %s212 = sadd.s32 %s211, 1
      %p215 = scmp.eq.s32.totalorder %s39, 3
      %p216 = scmp.ne.s32.totalorder %s211, %s213
      %p217 = scmp.eq.s32.totalorder %s39, 0
      %p218 = por %p216, %p217
      %p219 = scmp.ne.s32.totalorder %s211, %s213
      %p220 = scmp.eq.s32.totalorder %s44, 3
      %p221 = por %p219, %p220
      %p222 = scmp.ne.s32.totalorder %s213, %s214
      %p223 = scmp.eq.s32.totalorder %s44, 0
      %p224 = por %p222, %p223
      %p225 = scmp.ne.s32.totalorder %s213, %s214
      %p226 = scmp.eq.s32.totalorder %s45, 3
      %p227 = por %p225, %p226
      %p229 = scmp.ne.s32.totalorder %s214, %s228
      %p230 = scmp.eq.s32.totalorder %s45, 0
      %p231 = por %p229, %p230
      %s233 = sadd.s32 %s232, 1
      %p236 = scmp.eq.s32.totalorder %s39, 3
      %p237 = scmp.ne.s32.totalorder %s232, %s234
      %p238 = scmp.eq.s32.totalorder %s39, 0
      %p239 = por %p237, %p238
      %p240 = scmp.ne.s32.totalorder %s232, %s234
      %p241 = scmp.eq.s32.totalorder %s44, 3
      %p242 = por %p240, %p241
      %p243 = scmp.ne.s32.totalorder %s234, %s235
      %p244 = scmp.eq.s32.totalorder %s44, 0
      %p245 = por %p243, %p244
      %p246 = scmp.ne.s32.totalorder %s234, %s235
      %p247 = scmp.eq.s32.totalorder %s45, 3
      %p248 = por %p246, %p247
      %p250 = scmp.ne.s32.totalorder %s235, %s249
      %p251 = scmp.eq.s32.totalorder %s45, 0
      %p252 = por %p250, %p251
      %s254 = sadd.s32 %s253, 1
      %p257 = scmp.eq.s32.totalorder %s39, 3
      %p258 = scmp.ne.s32.totalorder %s253, %s255
      %p259 = scmp.eq.s32.totalorder %s39, 0
      %p260 = por %p258, %p259
      %p261 = scmp.ne.s32.totalorder %s253, %s255
      %p262 = scmp.eq.s32.totalorder %s44, 3
      %p263 = por %p261, %p262
      %p264 = scmp.ne.s32.totalorder %s255, %s256
      %p265 = scmp.eq.s32.totalorder %s44, 0
      %p266 = por %p264, %p265
      %p267 = scmp.ne.s32.totalorder %s255, %s256
      %p268 = scmp.eq.s32.totalorder %s45, 3
      %p269 = por %p267, %p268
      %p271 = scmp.ne.s32.totalorder %s256, %s270
      %p272 = scmp.eq.s32.totalorder %s45, 0
      %p273 = por %p271, %p272
      %s274 = ssub.s32 %s47, %s54
      %p275 = scmp.eq.s32.totalorder %s274, 0
      %s277 = sadd.s32 %s276, 1
      %s278 = scalar_select %p275, %s276, %s277
      %p281 = pneg %p275
      %p282 = scmp.eq.s32.totalorder %s39, 3
      %p283 = por %p281, %p282
      %p284 = scmp.ne.s32.totalorder %s276, %s279
      %p285 = scmp.eq.s32.totalorder %s39, 0
      %p286 = por %p284, %p285
      %p287 = scmp.ne.s32.totalorder %s276, %s279
      %p288 = scmp.eq.s32.totalorder %s44, 3
      %p289 = por %p287, %p288
      %p290 = scmp.ne.s32.totalorder %s279, %s280
      %p291 = scmp.eq.s32.totalorder %s44, 0
      %p292 = por %p290, %p291
      %p293 = scmp.ne.s32.totalorder %s279, %s280
      %p294 = scmp.eq.s32.totalorder %s45, 3
      %p295 = por %p293, %p294
      %p297 = scmp.ne.s32.totalorder %s280, %s296
      %p298 = scmp.eq.s32.totalorder %s45, 0
      %p299 = por %p297, %p298
      %s300 = ssub.s32 %s47, %s54
      %p301 = scmp.eq.s32.totalorder %s300, 0
      %s303 = sadd.s32 %s302, 1
      %s304 = scalar_select %p301, %s302, %s303
      %p307 = pneg %p301
      %p308 = scmp.eq.s32.totalorder %s39, 3
      %p309 = por %p307, %p308
      %p310 = scmp.ne.s32.totalorder %s302, %s305
      %p311 = scmp.eq.s32.totalorder %s39, 0
      %p312 = por %p310, %p311
      %p313 = scmp.ne.s32.totalorder %s302, %s305
      %p314 = scmp.eq.s32.totalorder %s44, 3
      %p315 = por %p313, %p314
      %p316 = scmp.ne.s32.totalorder %s305, %s306
      %p317 = scmp.eq.s32.totalorder %s44, 0
      %p318 = por %p316, %p317
      %p319 = scmp.ne.s32.totalorder %s305, %s306
      %p320 = scmp.eq.s32.totalorder %s45, 3
      %p321 = por %p319, %p320
      %p323 = scmp.ne.s32.totalorder %s306, %s322
      %p324 = scmp.eq.s32.totalorder %s45, 0
      %p325 = por %p323, %p324
      %s326 = ssub.s32 %s47, %s54
      %p327 = scmp.eq.s32.totalorder %s326, 0
      %s329 = sadd.s32 %s328, 1
      %s330 = scalar_select %p327, %s328, %s329
      %p333 = pneg %p327
      %p334 = scmp.eq.s32.totalorder %s39, 3
      %p335 = por %p333, %p334
      %p336 = scmp.ne.s32.totalorder %s328, %s331
      %p337 = scmp.eq.s32.totalorder %s39, 0
      %p338 = por %p336, %p337
      %p339 = scmp.ne.s32.totalorder %s328, %s331
      %p340 = scmp.eq.s32.totalorder %s44, 3
      %p341 = por %p339, %p340
      %p342 = scmp.ne.s32.totalorder %s331, %s332
      %p343 = scmp.eq.s32.totalorder %s44, 0
      %p344 = por %p342, %p343
      %p345 = scmp.ne.s32.totalorder %s331, %s332
      %p346 = scmp.eq.s32.totalorder %s45, 3
      %p347 = por %p345, %p346
      %p349 = scmp.ne.s32.totalorder %s332, %s348
      %p350 = scmp.eq.s32.totalorder %s45, 0
      %p351 = por %p349, %p350
      %s352 = ssub.s32 %s47, %s54
      %p353 = scmp.eq.s32.totalorder %s352, 0
      %s355 = sadd.s32 %s354, 1
      %s356 = scalar_select %p353, %s354, %s355
      %p359 = pneg %p353
      %p360 = scmp.eq.s32.totalorder %s39, 3
      %p361 = por %p359, %p360
      %p362 = scmp.ne.s32.totalorder %s354, %s357
      %p363 = scmp.eq.s32.totalorder %s39, 0
      %p364 = por %p362, %p363
      %p365 = scmp.ne.s32.totalorder %s354, %s357
      %p366 = scmp.eq.s32.totalorder %s44, 3
      %p367 = por %p365, %p366
      %p368 = scmp.ne.s32.totalorder %s357, %s358
      %p369 = scmp.eq.s32.totalorder %s44, 0
      %p370 = por %p368, %p369
      %p371 = scmp.ne.s32.totalorder %s357, %s358
      %p372 = scmp.eq.s32.totalorder %s45, 3
      %p373 = por %p371, %p372
      %p375 = scmp.ne.s32.totalorder %s358, %s374
      %p376 = scmp.eq.s32.totalorder %s45, 0
      %p377 = por %p375, %p376
      %s378 = ssub.s32 %s47, %s54
      %p379 = scmp.eq.s32.totalorder %s378, 0
      %s381 = sadd.s32 %s380, 1
      %s382 = scalar_select %p379, %s380, %s381
      %p385 = pneg %p379
      %p386 = scmp.eq.s32.totalorder %s39, 3
      %p387 = por %p385, %p386
      %p388 = scmp.ne.s32.totalorder %s380, %s383
      %p389 = scmp.eq.s32.totalorder %s39, 0
      %p390 = por %p388, %p389
      %p391 = scmp.ne.s32.totalorder %s380, %s383
      %p392 = scmp.eq.s32.totalorder %s44, 3
      %p393 = por %p391, %p392
      %p394 = scmp.ne.s32.totalorder %s383, %s384
      %p395 = scmp.eq.s32.totalorder %s44, 0
      %p396 = por %p394, %p395
      %p397 = scmp.ne.s32.totalorder %s383, %s384
      %p398 = scmp.eq.s32.totalorder %s45, 3
      %p399 = por %p397, %p398
      %p401 = scmp.ne.s32.totalorder %s384, %s400
      %p402 = scmp.eq.s32.totalorder %s45, 0
      %p403 = por %p401, %p402
      %s404 = ssub.s32 %s47, %s54
      %p405 = scmp.eq.s32.totalorder %s404, 0
      %s407 = sadd.s32 %s406, 1
      %s408 = scalar_select %p405, %s406, %s407
      %p411 = pneg %p405
      %p412 = scmp.eq.s32.totalorder %s39, 3
      %p413 = por %p411, %p412
      %p414 = scmp.ne.s32.totalorder %s406, %s409
      %p415 = scmp.eq.s32.totalorder %s39, 0
      %p416 = por %p414, %p415
      %p417 = scmp.ne.s32.totalorder %s406, %s409
      %p418 = scmp.eq.s32.totalorder %s44, 3
      %p419 = por %p417, %p418
      %p420 = scmp.ne.s32.totalorder %s409, %s410
      %p421 = scmp.eq.s32.totalorder %s44, 0
      %p422 = por %p420, %p421
      %p423 = scmp.ne.s32.totalorder %s409, %s410
      %p424 = scmp.eq.s32.totalorder %s45, 3
      %p425 = por %p423, %p424
      %p427 = scmp.ne.s32.totalorder %s410, %s426
      %p428 = scmp.eq.s32.totalorder %s45, 0
      %p429 = por %p427, %p428
      %s430 = ssub.s32 %s47, %s54
      %p431 = scmp.eq.s32.totalorder %s430, 0
      %s433 = sadd.s32 %s432, 1
      %s434 = scalar_select %p431, %s432, %s433
      %p437 = pneg %p431
      %p438 = scmp.eq.s32.totalorder %s39, 3
      %p439 = por %p437, %p438
      %p440 = scmp.ne.s32.totalorder %s432, %s435
      %p441 = scmp.eq.s32.totalorder %s39, 0
      %p442 = por %p440, %p441
      %p443 = scmp.ne.s32.totalorder %s432, %s435
      %p444 = scmp.eq.s32.totalorder %s44, 3
      %p445 = por %p443, %p444
      %p446 = scmp.ne.s32.totalorder %s435, %s436
      %p447 = scmp.eq.s32.totalorder %s44, 0
      %p448 = por %p446, %p447
      %p449 = scmp.ne.s32.totalorder %s435, %s436
      %p450 = scmp.eq.s32.totalorder %s45, 3
      %p451 = por %p449, %p450
      %p453 = scmp.ne.s32.totalorder %s436, %s452
      %p454 = scmp.eq.s32.totalorder %s45, 0
      %p455 = por %p453, %p454
      %s456 = ssub.s32 %s47, %s54
      %p457 = scmp.eq.s32.totalorder %s456, 0
      %s459 = sadd.s32 %s458, 1
      %s460 = scalar_select %p457, %s458, %s459
      %p463 = pneg %p457
      %p464 = scmp.eq.s32.totalorder %s39, 3
      %p465 = por %p463, %p464
      %p466 = scmp.ne.s32.totalorder %s458, %s461
      %p467 = scmp.eq.s32.totalorder %s39, 0
      %p468 = por %p466, %p467
      %p469 = scmp.ne.s32.totalorder %s458, %s461
      %p470 = scmp.eq.s32.totalorder %s44, 3
      %p471 = por %p469, %p470
      %p472 = scmp.ne.s32.totalorder %s461, %s462
      %p473 = scmp.eq.s32.totalorder %s44, 0
      %p474 = por %p472, %p473
      %p475 = scmp.ne.s32.totalorder %s461, %s462
      %p476 = scmp.eq.s32.totalorder %s45, 3
      %p477 = por %p475, %p476
      %p479 = scmp.ne.s32.totalorder %s462, %s478
      %p480 = scmp.eq.s32.totalorder %s45, 0
      %p481 = por %p479, %p480
      %s482 = ssub.s32 %s47, %s54
      %p483 = scmp.eq.s32.totalorder %s482, 0
      %s485 = sadd.s32 %s484, 1
      %s486 = scalar_select %p483, %s484, %s485
      %p489 = pneg %p483
      %p490 = scmp.eq.s32.totalorder %s39, 3
      %p491 = por %p489, %p490
      %p492 = scmp.ne.s32.totalorder %s484, %s487
      %p493 = scmp.eq.s32.totalorder %s39, 0
      %p494 = por %p492, %p493
      %p495 = scmp.ne.s32.totalorder %s484, %s487
      %p496 = scmp.eq.s32.totalorder %s44, 3
      %p497 = por %p495, %p496
      %p498 = scmp.ne.s32.totalorder %s487, %s488
      %p499 = scmp.eq.s32.totalorder %s44, 0
      %p500 = por %p498, %p499
      %p501 = scmp.ne.s32.totalorder %s487, %s488
      %p502 = scmp.eq.s32.totalorder %s45, 3
      %p503 = por %p501, %p502
      %p505 = scmp.ne.s32.totalorder %s488, %s504
      %p506 = scmp.eq.s32.totalorder %s45, 0
      %p507 = por %p505, %p506
      %s508 = ssub.s32 %s47, %s54
      %p509 = scmp.eq.s32.totalorder %s508, 0
      %s511 = sadd.s32 %s510, 1
      %s512 = scalar_select %p509, %s510, %s511
      %p515 = pneg %p509
      %p516 = scmp.eq.s32.totalorder %s39, 3
      %p517 = por %p515, %p516
      %p518 = scmp.ne.s32.totalorder %s510, %s513
      %p519 = scmp.eq.s32.totalorder %s39, 0
      %p520 = por %p518, %p519
      %p521 = scmp.ne.s32.totalorder %s510, %s513
      %p522 = scmp.eq.s32.totalorder %s44, 3
      %p523 = por %p521, %p522
      %p524 = scmp.ne.s32.totalorder %s513, %s514
      %p525 = scmp.eq.s32.totalorder %s44, 0
      %p526 = por %p524, %p525
      %p527 = scmp.ne.s32.totalorder %s513, %s514
      %p528 = scmp.eq.s32.totalorder %s45, 3
      %p529 = por %p527, %p528
      %p531 = scmp.ne.s32.totalorder %s514, %s530
      %p532 = scmp.eq.s32.totalorder %s45, 0
      %p533 = por %p531, %p532
      %s534 = ssub.s32 %s47, %s54
      %p535 = scmp.eq.s32.totalorder %s534, 0
      %s537 = sadd.s32 %s536, 1
      %s538 = scalar_select %p535, %s536, %s537
      %p541 = pneg %p535
      %p542 = scmp.eq.s32.totalorder %s39, 3
      %p543 = por %p541, %p542
      %p544 = scmp.ne.s32.totalorder %s536, %s539
      %p545 = scmp.eq.s32.totalorder %s39, 0
      %p546 = por %p544, %p545
      %p547 = scmp.ne.s32.totalorder %s536, %s539
      %p548 = scmp.eq.s32.totalorder %s44, 3
      %p549 = por %p547, %p548
      %p550 = scmp.ne.s32.totalorder %s539, %s540
      %p551 = scmp.eq.s32.totalorder %s44, 0
      %p552 = por %p550, %p551
      %p553 = scmp.ne.s32.totalorder %s539, %s540
      %p554 = scmp.eq.s32.totalorder %s45, 3
      %p555 = por %p553, %p554
      %p557 = scmp.ne.s32.totalorder %s540, %s556
      %p558 = scmp.eq.s32.totalorder %s45, 0
      %p559 = por %p557, %p558
      %s560 = ssub.s32 %s47, %s54
      %p561 = scmp.eq.s32.totalorder %s560, 0
      %s563 = sadd.s32 %s562, 1
      %s564 = scalar_select %p561, %s562, %s563
      %p567 = pneg %p561
      %p568 = scmp.eq.s32.totalorder %s39, 3
      %p569 = por %p567, %p568
      %p570 = scmp.ne.s32.totalorder %s562, %s565
      %p571 = scmp.eq.s32.totalorder %s39, 0
      %p572 = por %p570, %p571
      %p573 = scmp.ne.s32.totalorder %s562, %s565
      %p574 = scmp.eq.s32.totalorder %s44, 3
      %p575 = por %p573, %p574
      %p576 = scmp.ne.s32.totalorder %s565, %s566
      %p577 = scmp.eq.s32.totalorder %s44, 0
      %p578 = por %p576, %p577
      %p579 = scmp.ne.s32.totalorder %s565, %s566
      %p580 = scmp.eq.s32.totalorder %s45, 3
      %p581 = por %p579, %p580
      %p583 = scmp.ne.s32.totalorder %s566, %s582
      %p584 = scmp.eq.s32.totalorder %s45, 0
      %p585 = por %p583, %p584
      %s586 = ssub.s32 %s46, %s58
      %p587 = scmp.eq.s32.totalorder %s586, 0
      %s589 = sadd.s32 %s588, 1
      %s590 = scalar_select %p587, %s588, %s589
      %p593 = pneg %p587
      %p594 = scmp.eq.s32.totalorder %s39, 3
      %p595 = por %p593, %p594
      %p596 = scmp.ne.s32.totalorder %s588, %s591
      %p597 = scmp.eq.s32.totalorder %s39, 0
      %p598 = por %p596, %p597
      %p599 = scmp.ne.s32.totalorder %s588, %s591
      %p600 = scmp.eq.s32.totalorder %s44, 3
      %p601 = por %p599, %p600
      %p602 = scmp.ne.s32.totalorder %s591, %s592
      %p603 = scmp.eq.s32.totalorder %s44, 0
      %p604 = por %p602, %p603
      %p605 = scmp.ne.s32.totalorder %s591, %s592
      %p606 = scmp.eq.s32.totalorder %s45, 3
      %p607 = por %p605, %p606
      %p609 = scmp.ne.s32.totalorder %s592, %s608
      %p610 = scmp.eq.s32.totalorder %s45, 0
      %p611 = por %p609, %p610
      %p612 = scmp.le.s32.totalorder 1, %s39
      %p613 = scmp.lt.s32.totalorder %s39, 5
      %p614 = pnand %p612, %p613
      %p615 = pneg %p614
      // Predicated region
      $region9: #{tpu_custom_call.1} parent=5 // pred_check
        _
      $region10: #{tpu_custom_call.1} parent=5 // pred_check_branch
        %617 = sbr.rel (%p614) target = $region12
      $region11: #{tpu_custom_call.1} parent=5 // pred_region
        %s618 = ssub.s32 %s39, 1
        // Predicated region
        $region13: #{tpu_custom_call.1} parent=11 // pred_check
          %p619 = pneg %p98
        $region14: #{tpu_custom_call.1} parent=11 // pred_check_branch
          %621 = sbr.rel (%p619) target = $region16
        $region15: #{tpu_custom_call.1} parent=11 // pred_region
          %s623 = ssub.s32 128, 128
          %624 = vsyncadd [#allocation7], %s623
          %s626 = sshll.u32 [#allocation6], 4
          %s627 = int_to_ptr.vmem [resolvable:$true] %s626
          %629 = dma.hbm_to_vmem [thread:$0]  %s1, 128, %s627, [#allocation7]
        $region16: #{tpu_custom_call.1} parent=11 // pred_fallthru
          _
        // Predicated region
        $region17: #{tpu_custom_call.1} parent=11 // pred_check
          %p630 = pneg %p119
        $region18: #{tpu_custom_call.1} parent=11 // pred_check_branch
          %632 = sbr.rel (%p630) target = $region20
        $region19: #{tpu_custom_call.1} parent=11 // pred_region
          %s634 = ssub.s32 128, 128
          %635 = vsyncadd [#allocation7], %s634
          %s637 = sshll.u32 [#allocation8], 4
          %s638 = int_to_ptr.vmem [resolvable:$true] %s637
          %640 = dma.hbm_to_vmem [thread:$0]  %s2, 128, %s638, [#allocation7]
        $region20: #{tpu_custom_call.1} parent=11 // pred_fallthru
          _
        // Predicated region
        $region21: #{tpu_custom_call.1} parent=11 // pred_check
          %p641 = pneg %p140
        $region22: #{tpu_custom_call.1} parent=11 // pred_check_branch
          %643 = sbr.rel (%p641) target = $region24
        $region23: #{tpu_custom_call.1} parent=11 // pred_region
          %s645 = ssub.s32 128, 128
          %646 = vsyncadd [#allocation10], %s645
          %s648 = sshll.u32 [#allocation9], 4
          %s649 = int_to_ptr.vmem [resolvable:$true] %s648
          %651 = dma.hbm_to_vmem [thread:$0]  %s3, 128, %s649, [#allocation10]
        $region24: #{tpu_custom_call.1} parent=11 // pred_fallthru
          _
        // Predicated region
        $region25: #{tpu_custom_call.1} parent=11 // pred_check
          %p652 = pneg %p161
        $region26: #{tpu_custom_call.1} parent=11 // pred_check_branch
          %654 = sbr.rel (%p652) target = $region28
        $region27: #{tpu_custom_call.1} parent=11 // pred_region
          %s656 = ssub.s32 2048, 2048
          %657 = vsyncadd [#allocation10], %s656
          %s658 = sshll.u32 [#allocation11], 4
          %s659 = int_to_ptr.vmem [resolvable:$true] %s658
          %664 = dma.hbm_to_vmem [thread:$0]  %s4, 2048, %s659, [#allocation10], 128, 128, 8
        $region28: #{tpu_custom_call.1} parent=11 // pred_fallthru
          _
        // Predicated region
        $region29: #{tpu_custom_call.1} parent=11 // pred_check
          %p665 = pneg %p182
        $region30: #{tpu_custom_call.1} parent=11 // pred_check_branch
          %667 = sbr.rel (%p665) target = $region32
        $region31: #{tpu_custom_call.1} parent=11 // pred_region
          %s669 = ssub.s32 32, 32
          %670 = vsyncadd [#allocation13], %s669
          %s672 = sshll.u32 [#allocation12], 4
          %s673 = int_to_ptr.vmem [resolvable:$true] %s672
          %675 = dma.hbm_to_vmem [thread:$0]  %s5, 32, %s673, [#allocation13]
        $region32: #{tpu_custom_call.1} parent=11 // pred_fallthru
          _
        // Predicated region
        $region33: #{tpu_custom_call.1} parent=11 // pred_check
          %p676 = pneg %p203
        $region34: #{tpu_custom_call.1} parent=11 // pred_check_branch
          %678 = sbr.rel (%p676) target = $region36
        $region35: #{tpu_custom_call.1} parent=11 // pred_region
          %s680 = ssub.s32 32, 32
          %681 = vsyncadd [#allocation13], %s680
          %s683 = sshll.u32 [#allocation14], 4
          %s684 = int_to_ptr.vmem [resolvable:$true] %s683
          %686 = dma.hbm_to_vmem [thread:$0]  %s6, 32, %s684, [#allocation13]
        $region36: #{tpu_custom_call.1} parent=11 // pred_fallthru
          _
        // Predicated region
        $region37: #{tpu_custom_call.1} parent=11 // pred_check
          %p687 = pneg %p224
        $region38: #{tpu_custom_call.1} parent=11 // pred_check_branch
          %689 = sbr.rel (%p687) target = $region40
        $region39: #{tpu_custom_call.1} parent=11 // pred_region
          %s691 = ssub.s32 32, 32
          %692 = vsyncadd [#allocation16], %s691
          %s694 = sshll.u32 [#allocation15], 4
          %s695 = int_to_ptr.vmem [resolvable:$true] %s694
          %697 = dma.hbm_to_vmem [thread:$0]  %s7, 32, %s695, [#allocation16]
        $region40: #{tpu_custom_call.1} parent=11 // pred_fallthru
          _
        // Predicated region
        $region41: #{tpu_custom_call.1} parent=11 // pred_check
          %p698 = pneg %p245
        $region42: #{tpu_custom_call.1} parent=11 // pred_check_branch
          %700 = sbr.rel (%p698) target = $region44
        $region43: #{tpu_custom_call.1} parent=11 // pred_region
          %s702 = ssub.s32 2048, 2048
          %703 = vsyncadd [#allocation16], %s702
          %s704 = sshll.u32 [#allocation17], 4
          %s705 = int_to_ptr.vmem [resolvable:$true] %s704
          %710 = dma.hbm_to_vmem [thread:$0]  %s8, 2048, %s705, [#allocation16], 64, 64, 4
        $region44: #{tpu_custom_call.1} parent=11 // pred_fallthru
          _
        // Predicated region
        $region45: #{tpu_custom_call.1} parent=11 // pred_check
          %p711 = pneg %p266
        $region46: #{tpu_custom_call.1} parent=11 // pred_check_branch
          %713 = sbr.rel (%p711) target = $region48
        $region47: #{tpu_custom_call.1} parent=11 // pred_region
          %s715 = ssub.s32 16, 16
          %716 = vsyncadd [#allocation19], %s715
          %s718 = sshll.u32 [#allocation18], 4
          %s719 = int_to_ptr.vmem [resolvable:$true] %s718
          %721 = dma.hbm_to_vmem [thread:$0]  %s9, 16, %s719, [#allocation19]
        $region48: #{tpu_custom_call.1} parent=11 // pred_fallthru
          _
      $region12: #{tpu_custom_call.1} parent=5 // pred_fallthru
        _
      %p722 = scmp.lt.s32.totalorder %s39, 4
      // Predicated region
      $region49: #{tpu_custom_call.1} parent=5 // pred_check
        %p723 = pneg %p722
      $region50: #{tpu_custom_call.1} parent=5 // pred_check_branch
        %725 = sbr.rel (%p723) target = $region52
      $region51: #{tpu_custom_call.1} parent=5 // pred_region
        // Predicated region
        $region53: #{tpu_custom_call.1} parent=51 // pred_check
          %p726 = pneg %p71
        $region54: #{tpu_custom_call.1} parent=51 // pred_check_branch
          %728 = sbr.rel (%p726) target = $region56
        $region55: #{tpu_custom_call.1} parent=51 // pred_region
          %s729 = sand.u32 %s39, 1
          %s730 = scalar_lea.sflag [#allocation4], %s729
          %s731 = sand.u32 %s61, 1
          %s732 = smul.addr %s731, 16
          %s733 = scalar_lea.vmem [#allocation3], %s732
          %s734 = smul.u32 2, %s46
          %s736 = ssub.s32 256, 256
          %737 = vsyncadd %s730, %s736
          %s738 = smul.addr %s734, 128
          %s739 = scalar_lea.hbm %s0, %s738
          %s740 = sshll.u32 %s733, 4
          %s741 = int_to_ptr.vmem [resolvable:$true] %s740
          %746 = dma.hbm_to_vmem [thread:$0]  %s739, 256, %s741, %s730, 128, 128, 8
        $region56: #{tpu_custom_call.1} parent=51 // pred_fallthru
          _
        // Predicated region
        $region57: #{tpu_custom_call.1} parent=51 // pred_check
          %p747 = pneg %p286
        $region58: #{tpu_custom_call.1} parent=51 // pred_check_branch
          %749 = sbr.rel (%p747) target = $region60
        $region59: #{tpu_custom_call.1} parent=51 // pred_region
          %s750 = sand.u32 %s39, 1
          %s751 = scalar_lea.sflag [#allocation4], %s750
          %s752 = sand.u32 %s276, 1
          %s753 = smul.addr %s752, 2
          %s754 = scalar_lea.vmem [#allocation20], %s753
          %s756 = ssub.s32 32, 32
          %757 = vsyncadd %s751, %s756
          %s758 = smul.addr %s47, 2
          %s759 = smul.addr %s758, 16
          %s760 = scalar_lea.hbm %s10, %s759
          %s762 = sshll.u32 %s754, 4
          %s763 = int_to_ptr.vmem [resolvable:$true] %s762
          %765 = dma.hbm_to_vmem [thread:$0]  %s760, 32, %s763, %s751
        $region60: #{tpu_custom_call.1} parent=51 // pred_fallthru
          _
        // Predicated region
        $region61: #{tpu_custom_call.1} parent=51 // pred_check
          %p766 = pneg %p312
        $region62: #{tpu_custom_call.1} parent=51 // pred_check_branch
          %768 = sbr.rel (%p766) target = $region64
        $region63: #{tpu_custom_call.1} parent=51 // pred_region
          %s769 = sand.u32 %s39, 1
          %s770 = scalar_lea.sflag [#allocation4], %s769
          %s771 = sand.u32 %s302, 1
          %s772 = smul.addr %s771, 2
          %s773 = scalar_lea.vmem [#allocation21], %s772
          %s775 = ssub.s32 32, 32
          %776 = vsyncadd %s770, %s775
          %s777 = smul.addr %s47, 2
          %s778 = smul.addr %s777, 16
          %s779 = scalar_lea.hbm %s11, %s778
          %s781 = sshll.u32 %s773, 4
          %s782 = int_to_ptr.vmem [resolvable:$true] %s781
          %784 = dma.hbm_to_vmem [thread:$0]  %s779, 32, %s782, %s770
        $region64: #{tpu_custom_call.1} parent=51 // pred_fallthru
          _
        // Predicated region
        $region65: #{tpu_custom_call.1} parent=51 // pred_check
          %p785 = pneg %p338
        $region66: #{tpu_custom_call.1} parent=51 // pred_check_branch
          %787 = sbr.rel (%p785) target = $region68
        $region67: #{tpu_custom_call.1} parent=51 // pred_region
          %s788 = sand.u32 %s39, 1
          %s789 = scalar_lea.sflag [#allocation4], %s788
          %s790 = sand.u32 %s328, 1
          %s791 = smul.addr %s790, 768
          %s792 = scalar_lea.vmem [#allocation22], %s791
          %s794 = ssub.s32 12288, 12288
          %795 = vsyncadd %s789, %s794
          %s796 = smul.addr %s47, 192
          %s797 = smul.addr %s796, 64
          %s798 = scalar_lea.hbm %s12, %s797
          %s799 = sshll.u32 %s792, 4
          %s800 = int_to_ptr.vmem [resolvable:$true] %s799
          %805 = dma.hbm_to_vmem [thread:$0]  %s798, 12288, %s800, %s789, 384, 384, 24
        $region68: #{tpu_custom_call.1} parent=51 // pred_fallthru
          _
        // Predicated region
        $region69: #{tpu_custom_call.1} parent=51 // pred_check
          %p806 = pneg %p364
        $region70: #{tpu_custom_call.1} parent=51 // pred_check_branch
          %808 = sbr.rel (%p806) target = $region72
        $region71: #{tpu_custom_call.1} parent=51 // pred_region
          %s809 = sand.u32 %s39, 1
          %s810 = scalar_lea.sflag [#allocation4], %s809
          %s811 = sand.u32 %s354, 1
          %s812 = smul.addr %s811, 6
          %s813 = scalar_lea.vmem [#allocation23], %s812
          %s815 = ssub.s32 96, 96
          %816 = vsyncadd %s810, %s815
          %s817 = smul.addr %s47, 6
          %s818 = smul.addr %s817, 16
          %s819 = scalar_lea.hbm %s13, %s818
          %s821 = sshll.u32 %s813, 4
          %s822 = int_to_ptr.vmem [resolvable:$true] %s821
          %824 = dma.hbm_to_vmem [thread:$0]  %s819, 96, %s822, %s810
        $region72: #{tpu_custom_call.1} parent=51 // pred_fallthru
          _
        // Predicated region
        $region73: #{tpu_custom_call.1} parent=51 // pred_check
          %p825 = pneg %p390
        $region74: #{tpu_custom_call.1} parent=51 // pred_check_branch
          %827 = sbr.rel (%p825) target = $region76
        $region75: #{tpu_custom_call.1} parent=51 // pred_region
          %s828 = sand.u32 %s39, 1
          %s829 = scalar_lea.sflag [#allocation4], %s828
          %s830 = sand.u32 %s380, 1
          %s831 = smul.addr %s830, 256
          %s832 = scalar_lea.vmem [#allocation24], %s831
          %s834 = ssub.s32 4096, 4096
          %835 = vsyncadd %s829, %s834
          %s836 = smul.addr %s47, 64
          %s837 = smul.addr %s836, 64
          %s838 = scalar_lea.hbm %s14, %s837
          %s839 = sshll.u32 %s832, 4
          %s840 = int_to_ptr.vmem [resolvable:$true] %s839
          %845 = dma.hbm_to_vmem [thread:$0]  %s838, 4096, %s840, %s829, 128, 128, 8
        $region76: #{tpu_custom_call.1} parent=51 // pred_fallthru
          _
        // Predicated region
        $region77: #{tpu_custom_call.1} parent=51 // pred_check
          %p846 = pneg %p416
        $region78: #{tpu_custom_call.1} parent=51 // pred_check_branch
          %848 = sbr.rel (%p846) target = $region80
        $region79: #{tpu_custom_call.1} parent=51 // pred_region
          %s849 = sand.u32 %s39, 1
          %s850 = scalar_lea.sflag [#allocation4], %s849
          %s851 = sand.u32 %s406, 1
          %s852 = smul.addr %s851, 2
          %s853 = scalar_lea.vmem [#allocation25], %s852
          %s855 = ssub.s32 32, 32
          %856 = vsyncadd %s850, %s855
          %s857 = smul.addr %s47, 2
          %s858 = smul.addr %s857, 16
          %s859 = scalar_lea.hbm %s15, %s858
          %s861 = sshll.u32 %s853, 4
          %s862 = int_to_ptr.vmem [resolvable:$true] %s861
          %864 = dma.hbm_to_vmem [thread:$0]  %s859, 32, %s862, %s850
        $region80: #{tpu_custom_call.1} parent=51 // pred_fallthru
          _
        // Predicated region
        $region81: #{tpu_custom_call.1} parent=51 // pred_check
          %p865 = pneg %p442
        $region82: #{tpu_custom_call.1} parent=51 // pred_check_branch
          %867 = sbr.rel (%p865) target = $region84
        $region83: #{tpu_custom_call.1} parent=51 // pred_region
          %s868 = sand.u32 %s39, 1
          %s869 = scalar_lea.sflag [#allocation4], %s868
          %s870 = sand.u32 %s432, 1
          %s871 = smul.addr %s870, 2
          %s872 = scalar_lea.vmem [#allocation26], %s871
          %s874 = ssub.s32 32, 32
          %875 = vsyncadd %s869, %s874
          %s876 = smul.addr %s47, 2
          %s877 = smul.addr %s876, 16
          %s878 = scalar_lea.hbm %s16, %s877
          %s880 = sshll.u32 %s872, 4
          %s881 = int_to_ptr.vmem [resolvable:$true] %s880
          %883 = dma.hbm_to_vmem [thread:$0]  %s878, 32, %s881, %s869
        $region84: #{tpu_custom_call.1} parent=51 // pred_fallthru
          _
        // Predicated region
        $region85: #{tpu_custom_call.1} parent=51 // pred_check
          %p884 = pneg %p468
        $region86: #{tpu_custom_call.1} parent=51 // pred_check_branch
          %886 = sbr.rel (%p884) target = $region88
        $region87: #{tpu_custom_call.1} parent=51 // pred_region
          %s887 = sand.u32 %s39, 1
          %s888 = scalar_lea.sflag [#allocation4], %s887
          %s889 = sand.u32 %s458, 1
          %s890 = smul.addr %s889, 2
          %s891 = scalar_lea.vmem [#allocation27], %s890
          %s893 = ssub.s32 32, 32
          %894 = vsyncadd %s888, %s893
          %s895 = smul.addr %s47, 2
          %s896 = smul.addr %s895, 16
          %s897 = scalar_lea.hbm %s17, %s896
          %s899 = sshll.u32 %s891, 4
          %s900 = int_to_ptr.vmem [resolvable:$true] %s899
          %902 = dma.hbm_to_vmem [thread:$0]  %s897, 32, %s900, %s888
        $region88: #{tpu_custom_call.1} parent=51 // pred_fallthru
          _
        // Predicated region
        $region89: #{tpu_custom_call.1} parent=51 // pred_check
          %p903 = pneg %p494
        $region90: #{tpu_custom_call.1} parent=51 // pred_check_branch
          %905 = sbr.rel (%p903) target = $region92
        $region91: #{tpu_custom_call.1} parent=51 // pred_region
          %s906 = sand.u32 %s39, 1
          %s907 = scalar_lea.sflag [#allocation4], %s906
          %s908 = sand.u32 %s484, 1
          %s909 = smul.addr %s908, 512
          %s910 = scalar_lea.vmem [#allocation28], %s909
          %s912 = ssub.s32 8192, 8192
          %913 = vsyncadd %s907, %s912
          %s914 = smul.addr %s47, 128
          %s915 = smul.addr %s914, 64
          %s916 = scalar_lea.hbm %s18, %s915
          %s917 = sshll.u32 %s910, 4
          %s918 = int_to_ptr.vmem [resolvable:$true] %s917
          %923 = dma.hbm_to_vmem [thread:$0]  %s916, 8192, %s918, %s907, 256, 256, 16
        $region92: #{tpu_custom_call.1} parent=51 // pred_fallthru
          _
        // Predicated region
        $region93: #{tpu_custom_call.1} parent=51 // pred_check
          %p924 = pneg %p520
        $region94: #{tpu_custom_call.1} parent=51 // pred_check_branch
          %926 = sbr.rel (%p924) target = $region96
        $region95: #{tpu_custom_call.1} parent=51 // pred_region
          %s927 = sand.u32 %s39, 1
          %s928 = scalar_lea.sflag [#allocation4], %s927
          %s929 = sand.u32 %s510, 1
          %s930 = smul.addr %s929, 4
          %s931 = scalar_lea.vmem [#allocation29], %s930
          %s933 = ssub.s32 64, 64
          %934 = vsyncadd %s928, %s933
          %s935 = smul.addr %s47, 4
          %s936 = smul.addr %s935, 16
          %s937 = scalar_lea.hbm %s19, %s936
          %s939 = sshll.u32 %s931, 4
          %s940 = int_to_ptr.vmem [resolvable:$true] %s939
          %942 = dma.hbm_to_vmem [thread:$0]  %s937, 64, %s940, %s928
        $region96: #{tpu_custom_call.1} parent=51 // pred_fallthru
          _
        // Predicated region
        $region97: #{tpu_custom_call.1} parent=51 // pred_check
          %p943 = pneg %p546
        $region98: #{tpu_custom_call.1} parent=51 // pred_check_branch
          %945 = sbr.rel (%p943) target = $region100
        $region99: #{tpu_custom_call.1} parent=51 // pred_region
          %s946 = sand.u32 %s39, 1
          %s947 = scalar_lea.sflag [#allocation4], %s946
          %s948 = sand.u32 %s536, 1
          %s949 = smul.addr %s948, 512
          %s950 = scalar_lea.vmem [#allocation30], %s949
          %s952 = ssub.s32 8192, 8192
          %953 = vsyncadd %s947, %s952
          %s954 = smul.addr %s47, 128
          %s955 = smul.addr %s954, 64
          %s956 = scalar_lea.hbm %s20, %s955
          %s957 = sshll.u32 %s950, 4
          %s958 = int_to_ptr.vmem [resolvable:$true] %s957
          %963 = dma.hbm_to_vmem [thread:$0]  %s956, 8192, %s958, %s947, 128, 128, 8
        $region100: #{tpu_custom_call.1} parent=51 // pred_fallthru
          _
        // Predicated region
        $region101: #{tpu_custom_call.1} parent=51 // pred_check
          %p964 = pneg %p572
        $region102: #{tpu_custom_call.1} parent=51 // pred_check_branch
          %966 = sbr.rel (%p964) target = $region104
        $region103: #{tpu_custom_call.1} parent=51 // pred_region
          %s967 = sand.u32 %s39, 1
          %s968 = scalar_lea.sflag [#allocation4], %s967
          %s969 = sand.u32 %s562, 1
          %s970 = smul.addr %s969, 2
          %s971 = scalar_lea.vmem [#allocation31], %s970
          %s973 = ssub.s32 32, 32
          %974 = vsyncadd %s968, %s973
          %s975 = smul.addr %s47, 2
          %s976 = smul.addr %s975, 16
          %s977 = scalar_lea.hbm %s21, %s976
          %s979 = sshll.u32 %s971, 4
          %s980 = int_to_ptr.vmem [resolvable:$true] %s979
          %982 = dma.hbm_to_vmem [thread:$0]  %s977, 32, %s980, %s968
        $region104: #{tpu_custom_call.1} parent=51 // pred_fallthru
          _
      $region52: #{tpu_custom_call.1} parent=5 // pred_fallthru
        _
      %p983 = scmp.le.s32.totalorder 1, %s39
      %p984 = scmp.lt.s32.totalorder %s39, 5
      %p985 = pnand %p983, %p984
      %p986 = pneg %p985
      // Predicated region
      $region105: #{tpu_custom_call.1} parent=5 // pred_check
        _
      $region106: #{tpu_custom_call.1} parent=5 // pred_check_branch
        %988 = sbr.rel (%p985) target = $region108
      $region107: #{tpu_custom_call.1} parent=5 // pred_region
        %s989 = ssub.s32 %s39, 1
        %s990 = sand.u32 %s44, 1
        %s991 = scalar_lea.sflag [#allocation4], %s990
        %s992 = sand.u32 %s64, 1
        %s993 = smul.addr %s992, 16
        %s994 = scalar_lea.vmem [#allocation3], %s993
        // Predicated region
        $region109: #{tpu_custom_call.1} parent=107 // pred_check
          %p995 = pneg %p77
        $region110: #{tpu_custom_call.1} parent=107 // pred_check_branch
          %997 = sbr.rel (%p995) target = $region112
        $region111: #{tpu_custom_call.1} parent=107 // pred_region
          %998 = dma.done %s991, 256
        $region112: #{tpu_custom_call.1} parent=107 // pred_fallthru
          _
        // Predicated region
        $region113: #{tpu_custom_call.1} parent=107 // pred_check
          %p999 = pneg %p98
        $region114: #{tpu_custom_call.1} parent=107 // pred_check_branch
          %1001 = sbr.rel (%p999) target = $region116
        $region115: #{tpu_custom_call.1} parent=107 // pred_region
          %1002 = dma.done [#allocation7], 128
        $region116: #{tpu_custom_call.1} parent=107 // pred_fallthru
          _
        // Predicated region
        $region117: #{tpu_custom_call.1} parent=107 // pred_check
          %p1003 = pneg %p119
        $region118: #{tpu_custom_call.1} parent=107 // pred_check_branch
          %1005 = sbr.rel (%p1003) target = $region120
        $region119: #{tpu_custom_call.1} parent=107 // pred_region
          %1006 = dma.done [#allocation7], 128
        $region120: #{tpu_custom_call.1} parent=107 // pred_fallthru
          _
        // Predicated region
        $region121: #{tpu_custom_call.1} parent=107 // pred_check
          %p1007 = pneg %p140
        $region122: #{tpu_custom_call.1} parent=107 // pred_check_branch
          %1009 = sbr.rel (%p1007) target = $region124
        $region123: #{tpu_custom_call.1} parent=107 // pred_region
          %1010 = dma.done [#allocation10], 128
        $region124: #{tpu_custom_call.1} parent=107 // pred_fallthru
          _
        // Predicated region
        $region125: #{tpu_custom_call.1} parent=107 // pred_check
          %p1011 = pneg %p161
        $region126: #{tpu_custom_call.1} parent=107 // pred_check_branch
          %1013 = sbr.rel (%p1011) target = $region128
        $region127: #{tpu_custom_call.1} parent=107 // pred_region
          %1014 = dma.done [#allocation10], 2048
        $region128: #{tpu_custom_call.1} parent=107 // pred_fallthru
          _
        // Predicated region
        $region129: #{tpu_custom_call.1} parent=107 // pred_check
          %p1015 = pneg %p182
        $region130: #{tpu_custom_call.1} parent=107 // pred_check_branch
          %1017 = sbr.rel (%p1015) target = $region132
        $region131: #{tpu_custom_call.1} parent=107 // pred_region
          %1018 = dma.done [#allocation13], 32
        $region132: #{tpu_custom_call.1} parent=107 // pred_fallthru
          _
        // Predicated region
        $region133: #{tpu_custom_call.1} parent=107 // pred_check
          %p1019 = pneg %p203
        $region134: #{tpu_custom_call.1} parent=107 // pred_check_branch
          %1021 = sbr.rel (%p1019) target = $region136
        $region135: #{tpu_custom_call.1} parent=107 // pred_region
          %1022 = dma.done [#allocation13], 32
        $region136: #{tpu_custom_call.1} parent=107 // pred_fallthru
          _
        // Predicated region
        $region137: #{tpu_custom_call.1} parent=107 // pred_check
          %p1023 = pneg %p224
        $region138: #{tpu_custom_call.1} parent=107 // pred_check_branch
          %1025 = sbr.rel (%p1023) target = $region140
        $region139: #{tpu_custom_call.1} parent=107 // pred_region
          %1026 = dma.done [#allocation16], 32
        $region140: #{tpu_custom_call.1} parent=107 // pred_fallthru
          _
        // Predicated region
        $region141: #{tpu_custom_call.1} parent=107 // pred_check
          %p1027 = pneg %p245
        $region142: #{tpu_custom_call.1} parent=107 // pred_check_branch
          %1029 = sbr.rel (%p1027) target = $region144
        $region143: #{tpu_custom_call.1} parent=107 // pred_region
          %1030 = dma.done [#allocation16], 2048
        $region144: #{tpu_custom_call.1} parent=107 // pred_fallthru
          _
        // Predicated region
        $region145: #{tpu_custom_call.1} parent=107 // pred_check
          %p1031 = pneg %p266
        $region146: #{tpu_custom_call.1} parent=107 // pred_check_branch
          %1033 = sbr.rel (%p1031) target = $region148
        $region147: #{tpu_custom_call.1} parent=107 // pred_region
          %1034 = dma.done [#allocation19], 16
        $region148: #{tpu_custom_call.1} parent=107 // pred_fallthru
          _
        %s1035 = sand.u32 %s44, 1
        %s1036 = scalar_lea.sflag [#allocation4], %s1035
        %s1037 = sand.u32 %s279, 1
        %s1038 = smul.addr %s1037, 2
        %s1039 = scalar_lea.vmem [#allocation20], %s1038
        // Predicated region
        $region149: #{tpu_custom_call.1} parent=107 // pred_check
          %p1040 = pneg %p292
        $region150: #{tpu_custom_call.1} parent=107 // pred_check_branch
          %1042 = sbr.rel (%p1040) target = $region152
        $region151: #{tpu_custom_call.1} parent=107 // pred_region
          %1043 = dma.done %s1036, 32
        $region152: #{tpu_custom_call.1} parent=107 // pred_fallthru
          _
        %s1044 = sand.u32 %s44, 1
        %s1045 = scalar_lea.sflag [#allocation4], %s1044
        %s1046 = sand.u32 %s305, 1
        %s1047 = smul.addr %s1046, 2
        %s1048 = scalar_lea.vmem [#allocation21], %s1047
        // Predicated region
        $region153: #{tpu_custom_call.1} parent=107 // pred_check
          %p1049 = pneg %p318
        $region154: #{tpu_custom_call.1} parent=107 // pred_check_branch
          %1051 = sbr.rel (%p1049) target = $region156
        $region155: #{tpu_custom_call.1} parent=107 // pred_region
          %1052 = dma.done %s1045, 32
        $region156: #{tpu_custom_call.1} parent=107 // pred_fallthru
          _
        %s1053 = sand.u32 %s44, 1
        %s1054 = scalar_lea.sflag [#allocation4], %s1053
        %s1055 = sand.u32 %s331, 1
        %s1056 = smul.addr %s1055, 768
        %s1057 = scalar_lea.vmem [#allocation22], %s1056
        // Predicated region
        $region157: #{tpu_custom_call.1} parent=107 // pred_check
          %p1058 = pneg %p344
        $region158: #{tpu_custom_call.1} parent=107 // pred_check_branch
          %1060 = sbr.rel (%p1058) target = $region160
        $region159: #{tpu_custom_call.1} parent=107 // pred_region
          %1061 = dma.done %s1054, 12288
        $region160: #{tpu_custom_call.1} parent=107 // pred_fallthru
          _
        %s1062 = sand.u32 %s44, 1
        %s1063 = scalar_lea.sflag [#allocation4], %s1062
        %s1064 = sand.u32 %s357, 1
        %s1065 = smul.addr %s1064, 6
        %s1066 = scalar_lea.vmem [#allocation23], %s1065
        // Predicated region
        $region161: #{tpu_custom_call.1} parent=107 // pred_check
          %p1067 = pneg %p370
        $region162: #{tpu_custom_call.1} parent=107 // pred_check_branch
          %1069 = sbr.rel (%p1067) target = $region164
        $region163: #{tpu_custom_call.1} parent=107 // pred_region
          %1070 = dma.done %s1063, 96
        $region164: #{tpu_custom_call.1} parent=107 // pred_fallthru
          _
        %s1071 = sand.u32 %s44, 1
        %s1072 = scalar_lea.sflag [#allocation4], %s1071
        %s1073 = sand.u32 %s383, 1
        %s1074 = smul.addr %s1073, 256
        %s1075 = scalar_lea.vmem [#allocation24], %s1074
        // Predicated region
        $region165: #{tpu_custom_call.1} parent=107 // pred_check
          %p1076 = pneg %p396
        $region166: #{tpu_custom_call.1} parent=107 // pred_check_branch
          %1078 = sbr.rel (%p1076) target = $region168
        $region167: #{tpu_custom_call.1} parent=107 // pred_region
          %1079 = dma.done %s1072, 4096
        $region168: #{tpu_custom_call.1} parent=107 // pred_fallthru
          _
        %s1080 = sand.u32 %s44, 1
        %s1081 = scalar_lea.sflag [#allocation4], %s1080
        %s1082 = sand.u32 %s409, 1
        %s1083 = smul.addr %s1082, 2
        %s1084 = scalar_lea.vmem [#allocation25], %s1083
        // Predicated region
        $region169: #{tpu_custom_call.1} parent=107 // pred_check
          %p1085 = pneg %p422
        $region170: #{tpu_custom_call.1} parent=107 // pred_check_branch
          %1087 = sbr.rel (%p1085) target = $region172
        $region171: #{tpu_custom_call.1} parent=107 // pred_region
          %1088 = dma.done %s1081, 32
        $region172: #{tpu_custom_call.1} parent=107 // pred_fallthru
          _
        %s1089 = sand.u32 %s44, 1
        %s1090 = scalar_lea.sflag [#allocation4], %s1089
        %s1091 = sand.u32 %s435, 1
        %s1092 = smul.addr %s1091, 2
        %s1093 = scalar_lea.vmem [#allocation26], %s1092
        // Predicated region
        $region173: #{tpu_custom_call.1} parent=107 // pred_check
          %p1094 = pneg %p448
        $region174: #{tpu_custom_call.1} parent=107 // pred_check_branch
          %1096 = sbr.rel (%p1094) target = $region176
        $region175: #{tpu_custom_call.1} parent=107 // pred_region
          %1097 = dma.done %s1090, 32
        $region176: #{tpu_custom_call.1} parent=107 // pred_fallthru
          _
        %s1098 = sand.u32 %s44, 1
        %s1099 = scalar_lea.sflag [#allocation4], %s1098
        %s1100 = sand.u32 %s461, 1
        %s1101 = smul.addr %s1100, 2
        %s1102 = scalar_lea.vmem [#allocation27], %s1101
        // Predicated region
        $region177: #{tpu_custom_call.1} parent=107 // pred_check
          %p1103 = pneg %p474
        $region178: #{tpu_custom_call.1} parent=107 // pred_check_branch
          %1105 = sbr.rel (%p1103) target = $region180
        $region179: #{tpu_custom_call.1} parent=107 // pred_region
          %1106 = dma.done %s1099, 32
        $region180: #{tpu_custom_call.1} parent=107 // pred_fallthru
          _
        %s1107 = sand.u32 %s44, 1
        %s1108 = scalar_lea.sflag [#allocation4], %s1107
        %s1109 = sand.u32 %s487, 1
        %s1110 = smul.addr %s1109, 512
        %s1111 = scalar_lea.vmem [#allocation28], %s1110
        // Predicated region
        $region181: #{tpu_custom_call.1} parent=107 // pred_check
          %p1112 = pneg %p500
        $region182: #{tpu_custom_call.1} parent=107 // pred_check_branch
          %1114 = sbr.rel (%p1112) target = $region184
        $region183: #{tpu_custom_call.1} parent=107 // pred_region
          %1115 = dma.done %s1108, 8192
        $region184: #{tpu_custom_call.1} parent=107 // pred_fallthru
          _
        %s1116 = sand.u32 %s44, 1
        %s1117 = scalar_lea.sflag [#allocation4], %s1116
        %s1118 = sand.u32 %s513, 1
        %s1119 = smul.addr %s1118, 4
        %s1120 = scalar_lea.vmem [#allocation29], %s1119
        // Predicated region
        $region185: #{tpu_custom_call.1} parent=107 // pred_check
          %p1121 = pneg %p526
        $region186: #{tpu_custom_call.1} parent=107 // pred_check_branch
          %1123 = sbr.rel (%p1121) target = $region188
        $region187: #{tpu_custom_call.1} parent=107 // pred_region
          %1124 = dma.done %s1117, 64
        $region188: #{tpu_custom_call.1} parent=107 // pred_fallthru
          _
        %s1125 = sand.u32 %s44, 1
        %s1126 = scalar_lea.sflag [#allocation4], %s1125
        %s1127 = sand.u32 %s539, 1
        %s1128 = smul.addr %s1127, 512
        %s1129 = scalar_lea.vmem [#allocation30], %s1128
        // Predicated region
        $region189: #{tpu_custom_call.1} parent=107 // pred_check
          %p1130 = pneg %p552
        $region190: #{tpu_custom_call.1} parent=107 // pred_check_branch
          %1132 = sbr.rel (%p1130) target = $region192
        $region191: #{tpu_custom_call.1} parent=107 // pred_region
          %1133 = dma.done %s1126, 8192
        $region192: #{tpu_custom_call.1} parent=107 // pred_fallthru
          _
        %s1134 = sand.u32 %s44, 1
        %s1135 = scalar_lea.sflag [#allocation4], %s1134
        %s1136 = sand.u32 %s565, 1
        %s1137 = smul.addr %s1136, 2
        %s1138 = scalar_lea.vmem [#allocation31], %s1137
        // Predicated region
        $region193: #{tpu_custom_call.1} parent=107 // pred_check
          %p1139 = pneg %p578
        $region194: #{tpu_custom_call.1} parent=107 // pred_check_branch
          %1141 = sbr.rel (%p1139) target = $region196
        $region195: #{tpu_custom_call.1} parent=107 // pred_region
          %1142 = dma.done %s1135, 32
        $region196: #{tpu_custom_call.1} parent=107 // pred_fallthru
          _
        %s1143 = sand.u32 %s44, 1
        %s1144 = scalar_lea.sflag [#allocation4], %s1143
        %s1145 = sand.u32 %s64, 1
        %s1146 = smul.addr %s1145, 16
        %s1147 = scalar_lea.vmem [#allocation3], %s1146
        %p1148 = pneg %p77
        %p1149 = pneg %p74
        %p1150 = pneg %p98
        %p1151 = pneg %p95
        %p1152 = pneg %p119
        %p1153 = pneg %p116
        %p1154 = pneg %p140
        %p1155 = pneg %p137
        %p1156 = pneg %p161
        %p1157 = pneg %p158
        %p1158 = pneg %p182
        %p1159 = pneg %p179
        %p1160 = pneg %p203
        %p1161 = pneg %p200
        %p1162 = pneg %p224
        %p1163 = pneg %p221
        %p1164 = pneg %p245
        %p1165 = pneg %p242
        %p1166 = pneg %p266
        %p1167 = pneg %p263
        %s1168 = sand.u32 %s44, 1
        %s1169 = scalar_lea.sflag [#allocation4], %s1168
        %s1170 = sand.u32 %s279, 1
        %s1171 = smul.addr %s1170, 2
        %s1172 = scalar_lea.vmem [#allocation20], %s1171
        %p1173 = pneg %p292
        %p1174 = pneg %p289
        %s1175 = sand.u32 %s44, 1
        %s1176 = scalar_lea.sflag [#allocation4], %s1175
        %s1177 = sand.u32 %s305, 1
        %s1178 = smul.addr %s1177, 2
        %s1179 = scalar_lea.vmem [#allocation21], %s1178
        %p1180 = pneg %p318
        %p1181 = pneg %p315
        %s1182 = sand.u32 %s44, 1
        %s1183 = scalar_lea.sflag [#allocation4], %s1182
        %s1184 = sand.u32 %s331, 1
        %s1185 = smul.addr %s1184, 768
        %s1186 = scalar_lea.vmem [#allocation22], %s1185
        %p1187 = pneg %p344
        %p1188 = pneg %p341
        %s1189 = sand.u32 %s44, 1
        %s1190 = scalar_lea.sflag [#allocation4], %s1189
        %s1191 = sand.u32 %s357, 1
        %s1192 = smul.addr %s1191, 6
        %s1193 = scalar_lea.vmem [#allocation23], %s1192
        %p1194 = pneg %p370
        %p1195 = pneg %p367
        %s1196 = sand.u32 %s44, 1
        %s1197 = scalar_lea.sflag [#allocation4], %s1196
        %s1198 = sand.u32 %s383, 1
        %s1199 = smul.addr %s1198, 256
        %s1200 = scalar_lea.vmem [#allocation24], %s1199
        %p1201 = pneg %p396
        %p1202 = pneg %p393
        %s1203 = sand.u32 %s44, 1
        %s1204 = scalar_lea.sflag [#allocation4], %s1203
        %s1205 = sand.u32 %s409, 1
        %s1206 = smul.addr %s1205, 2
        %s1207 = scalar_lea.vmem [#allocation25], %s1206
        %p1208 = pneg %p422
        %p1209 = pneg %p419
        %s1210 = sand.u32 %s44, 1
        %s1211 = scalar_lea.sflag [#allocation4], %s1210
        %s1212 = sand.u32 %s435, 1
        %s1213 = smul.addr %s1212, 2
        %s1214 = scalar_lea.vmem [#allocation26], %s1213
        %p1215 = pneg %p448
        %p1216 = pneg %p445
        %s1217 = sand.u32 %s44, 1
        %s1218 = scalar_lea.sflag [#allocation4], %s1217
        %s1219 = sand.u32 %s461, 1
        %s1220 = smul.addr %s1219, 2
        %s1221 = scalar_lea.vmem [#allocation27], %s1220
        %p1222 = pneg %p474
        %p1223 = pneg %p471
        %s1224 = sand.u32 %s44, 1
        %s1225 = scalar_lea.sflag [#allocation4], %s1224
        %s1226 = sand.u32 %s487, 1
        %s1227 = smul.addr %s1226, 512
        %s1228 = scalar_lea.vmem [#allocation28], %s1227
        %p1229 = pneg %p500
        %p1230 = pneg %p497
        %s1231 = sand.u32 %s44, 1
        %s1232 = scalar_lea.sflag [#allocation4], %s1231
        %s1233 = sand.u32 %s513, 1
        %s1234 = smul.addr %s1233, 4
        %s1235 = scalar_lea.vmem [#allocation29], %s1234
        %p1236 = pneg %p526
        %p1237 = pneg %p523
        %s1238 = sand.u32 %s44, 1
        %s1239 = scalar_lea.sflag [#allocation4], %s1238
        %s1240 = sand.u32 %s539, 1
        %s1241 = smul.addr %s1240, 512
        %s1242 = scalar_lea.vmem [#allocation30], %s1241
        %p1243 = pneg %p552
        %p1244 = pneg %p549
        %s1245 = sand.u32 %s44, 1
        %s1246 = scalar_lea.sflag [#allocation4], %s1245
        %s1247 = sand.u32 %s565, 1
        %s1248 = smul.addr %s1247, 2
        %s1249 = scalar_lea.vmem [#allocation31], %s1248
        %p1250 = pneg %p578
        %p1251 = pneg %p575
        %p1252 = pneg %p604
        %p1253 = pneg %p601
        %s1254 = sand.u32 %s591, 1
        %s1255 = scalar_lea.sflag [#allocation5], %s1254
        %s1256 = sand.u32 %s591, 1
        %s1257 = smul.addr %s1256, 16
        %s1258 = scalar_lea.vmem [#allocation32], %s1257
        %s1259 = smul.u32 2, %s48
        %s1260 = smul.u32 2, %s48
        %p1262 = scmp.eq.s32.totalorder %s49, 0
        // Predicated region
        $region197: #{tpu_custom_call.1} parent=107 // pred_check
          %p1263 = pneg %p1262
        $region198: #{tpu_custom_call.1} parent=107 // pred_check_branch
          %1265 = sbr.rel (%p1263) target = $region200
        $region199: #{tpu_custom_call.1} parent=107 // pred_region
          %v1266 = vld [vmem:[%s994] sm:$0xff]
          %v1267 = vld [vmem:[%s994 + $0x8] sm:$0xff]
          %v1268 = vpack.c.bf16 %v1267, %v1266
          %v1269 = vld [vmem:[#allocation11] sm:$0xff]
          %v1270 = vld [vmem:[#allocation11 + $0x8] sm:$0xff]
          %v1271 = vld [vmem:[#allocation11 + $0x10] sm:$0xff]
          %v1272 = vld [vmem:[#allocation11 + $0x18] sm:$0xff]
          %v1273 = vld [vmem:[#allocation11 + $0x20] sm:$0xff]
          %v1274 = vld [vmem:[#allocation11 + $0x28] sm:$0xff]
          %v1275 = vld [vmem:[#allocation11 + $0x30] sm:$0xff]
          %v1276 = vld [vmem:[#allocation11 + $0x38] sm:$0xff]
          %v1277 = vld [vmem:[#allocation11 + $0x40] sm:$0xff]
          %v1278 = vld [vmem:[#allocation11 + $0x48] sm:$0xff]
          %v1279 = vld [vmem:[#allocation11 + $0x50] sm:$0xff]
          %v1280 = vld [vmem:[#allocation11 + $0x58] sm:$0xff]
          %v1281 = vld [vmem:[#allocation11 + $0x60] sm:$0xff]
          %v1282 = vld [vmem:[#allocation11 + $0x68] sm:$0xff]
          %v1283 = vld [vmem:[#allocation11 + $0x70] sm:$0xff]
          %v1284 = vld [vmem:[#allocation11 + $0x78] sm:$0xff]
          %v1285 = vld [vmem:[#allocation12] sm:$0x3]
          %v1287 = vlaneseq
          %v1288 = vshrl.u32 %v1287, 7
          %v1289 = vsub.s32 0, %v1288
          %v1290 = vrot.slane %v1285, %v1289
          %v1291 = vlaneseq
          %v1292 = vshrl.u32 %v1291, 7
          %v1293 = vsub.s32 1, %v1292
          %v1294 = vrot.slane %v1285, %v1293
          %v1313 = vunpack.c.l.b16 %v1269
          %v1314 = vunpack.c.h.b16 %v1269
          %v1315 = vunpack.c.l.b16 %v1270
          %v1316 = vunpack.c.h.b16 %v1270
          %v1317 = vunpack.c.l.b16 %v1271
          %v1318 = vunpack.c.h.b16 %v1271
          %v1319 = vunpack.c.l.b16 %v1272
          %v1320 = vunpack.c.h.b16 %v1272
          %v1321 = vunpack.c.l.b16 %v1273
          %v1322 = vunpack.c.h.b16 %v1273
          %v1323 = vunpack.c.l.b16 %v1274
          %v1324 = vunpack.c.h.b16 %v1274
          %v1325 = vunpack.c.l.b16 %v1275
          %v1326 = vunpack.c.h.b16 %v1275
          %v1327 = vunpack.c.l.b16 %v1276
          %v1328 = vunpack.c.h.b16 %v1276
          %v1329 = vunpack.c.l.b16 %v1277
          %v1330 = vunpack.c.h.b16 %v1277
          %v1331 = vunpack.c.l.b16 %v1278
          %v1332 = vunpack.c.h.b16 %v1278
          %v1333 = vunpack.c.l.b16 %v1279
          %v1334 = vunpack.c.h.b16 %v1279
          %v1335 = vunpack.c.l.b16 %v1280
          %v1336 = vunpack.c.h.b16 %v1280
          %v1337 = vunpack.c.l.b16 %v1281
          %v1338 = vunpack.c.h.b16 %v1281
          %v1339 = vunpack.c.l.b16 %v1282
          %v1340 = vunpack.c.h.b16 %v1282
          %v1341 = vunpack.c.l.b16 %v1283
          %v1342 = vunpack.c.h.b16 %v1283
          %v1343 = vunpack.c.l.b16 %v1284
          %v1344 = vunpack.c.h.b16 %v1284
          %v1345 = vpack.c.b16 %v1315, %v1313
          %v1346 = vpack.c.b16 %v1316, %v1314
          %v1347 = vpack.c.b16 %v1319, %v1317
          %v1348 = vpack.c.b16 %v1320, %v1318
          %v1349 = vpack.c.b16 %v1323, %v1321
          %v1350 = vpack.c.b16 %v1324, %v1322
          %v1351 = vpack.c.b16 %v1327, %v1325
          %v1352 = vpack.c.b16 %v1328, %v1326
          %v1353 = vpack.c.b16 %v1331, %v1329
          %v1354 = vpack.c.b16 %v1332, %v1330
          %v1355 = vpack.c.b16 %v1335, %v1333
          %v1356 = vpack.c.b16 %v1336, %v1334
          %v1357 = vpack.c.b16 %v1339, %v1337
          %v1358 = vpack.c.b16 %v1340, %v1338
          %v1359 = vpack.c.b16 %v1343, %v1341
          %v1360 = vpack.c.b16 %v1344, %v1342
          %1377 = vmatprep.subr.bf16.mxu0 %v1346
          %1378 = vmatpush1.bf16.msra.mxu0 %v1345
          %1379 = vmatprep.subr.bf16.mxu0 %v1348
          %1380 = vmatpush1.bf16.msra.mxu0 %v1347
          %1381 = vmatprep.subr.bf16.mxu0 %v1350
          %1382 = vmatpush1.bf16.msra.mxu0 %v1349
          %1383 = vmatprep.subr.bf16.mxu0 %v1352
          %1384 = vmatpush1.bf16.msra.mxu0 %v1351
          %1385 = vmatprep.subr.bf16.mxu0 %v1354
          %1386 = vmatpush1.bf16.msra.mxu0 %v1353
          %1387 = vmatprep.subr.bf16.mxu0 %v1356
          %1388 = vmatpush1.bf16.msra.mxu0 %v1355
          %1389 = vmatprep.subr.bf16.mxu0 %v1358
          %1390 = vmatpush1.bf16.msra.mxu0 %v1357
          %1391 = vmatprep.subr.bf16.mxu0 %v1360
          %1392 = vmatpush1.bf16.msra.mxu0 %v1359
          %1393 = vmatprep.subr.bf16.mxu0 0
          %1394 = vmatpush1.bf16.msra.mxu0 0
          %1395 = vmatprep.subr.bf16.mxu0 0
          %1396 = vmatpush1.bf16.msra.mxu0 0
          %1397 = vmatprep.subr.bf16.mxu0 0
          %1398 = vmatpush1.bf16.msra.mxu0 0
          %1399 = vmatprep.subr.bf16.mxu0 0
          %1400 = vmatpush1.bf16.msra.mxu0 0
          %1401 = vmatprep.subr.bf16.mxu0 0
          %1402 = vmatpush1.bf16.msra.mxu0 0
          %1403 = vmatprep.subr.bf16.mxu0 0
          %1404 = vmatpush1.bf16.msra.mxu0 0
          %1405 = vmatprep.subr.bf16.mxu0 0
          %1406 = vmatpush1.bf16.msra.mxu0 0
          %1407 = vmatprep.subr.bf16.mxu0 0
          %1408 = vmatpush1.bf16.msra.mxu0 0
          %1409 = vmatprep.mubr.bf16.mxu0 0
          %1410 = vmatmul.mubr.bf16.gmra.mrb[0].mxu0 %v1268
          %v1411 = vpop.f32.mrb[0].mxu0
          %v1412 = vadd.f32 %v1290, %v1411
          %v1413 = vpop.f32.mrb[0].mxu0
          %v1414 = vadd.f32 %v1294, %v1413
          %v1415 = vpop.f32.mrb[0].mxu0
          %v1416 = vadd.f32 %v1290, %v1415
          %v1417 = vpop.f32.mrb[0].mxu0
          %v1418 = vadd.f32 %v1294, %v1417
          %1419 = vdwg.mxu0
          %1420 = vst [vmem:[#allocation2] sm:$0xff] %v1412
          %1421 = vst [vmem:[#allocation2 + $0x8] sm:$0xff] %v1414
          %1422 = vst [vmem:[#allocation2 + $0x10] sm:$0xff] %v1416
          %1423 = vst [vmem:[#allocation2 + $0x18] sm:$0xff] %v1418
        $region200: #{tpu_custom_call.1} parent=107 // pred_fallthru
          _
        %v1424 = vld [vmem:[#allocation2] sm:$0xff]
        %v1425 = vld [vmem:[#allocation2 + $0x8] sm:$0xff]
        %v1426 = vld [vmem:[#allocation2 + $0x10] sm:$0xff]
        %v1427 = vld [vmem:[#allocation2 + $0x18] sm:$0xff]
        %v1428 = vld [vmem:[%s1039] sm:$0x3]
        %v1429 = vld [vmem:[%s1048] sm:$0x3]
        %v1430 = vadd.f32 %v1424, %v1425
        %1431 = vadd.xlane.f32.xlu0 %v1430
        %v1432 = vpop.xlane.xlu0 %1431
        %v1433 = vadd.f32 %v1426, %v1427
        %1434 = vadd.xlane.f32.xlu0 %v1433
        %v1435 = vpop.xlane.xlu0 %1434
        %v1436 = vrcp.pop 256.0
        %v1437 = vmul.f32 %v1432, %v1436
        %v1438 = vmul.f32 %v1435, %v1436
        %v1439 = vsub.f32 %v1424, %v1437
        %v1440 = vsub.f32 %v1425, %v1437
        %v1441 = vsub.f32 %v1426, %v1438
        %v1442 = vsub.f32 %v1427, %v1438
        %v1443 = vmul.f32 %v1439, %v1439
        %v1444 = vmul.f32 %v1440, %v1440
        %v1445 = vmul.f32 %v1441, %v1441
        %v1446 = vmul.f32 %v1442, %v1442
        %v1447 = vadd.f32 %v1443, %v1444
        %1448 = vadd.xlane.f32.xlu0 %v1447
        %v1449 = vpop.xlane.xlu0 %1448
        %v1450 = vadd.f32 %v1445, %v1446
        %1451 = vadd.xlane.f32.xlu0 %v1450
        %v1452 = vpop.xlane.xlu0 %1451
        %v1453 = vmul.f32 %v1449, %v1436
        %v1454 = vmul.f32 %v1452, %v1436
        %v1455 = vadd.f32 %v1453, 1e-05
        %v1456 = vadd.f32 %v1454, 1e-05
        %v1457 = vrsqrt.pop %v1455
        %v1458 = vrsqrt.pop %v1456
        %v1459 = vmul.f32 %v1439, %v1457
        %v1460 = vmul.f32 %v1440, %v1457
        %v1461 = vmul.f32 %v1441, %v1458
        %v1462 = vmul.f32 %v1442, %v1458
        %v1464 = vlaneseq
        %v1465 = vshrl.u32 %v1464, 7
        %v1466 = vsub.s32 0, %v1465
        %v1467 = vrot.slane %v1428, %v1466
        %v1468 = vlaneseq
        %v1469 = vshrl.u32 %v1468, 7
        %v1470 = vsub.s32 1, %v1469
        %v1471 = vrot.slane %v1428, %v1470
        %v1474 = vmul.f32 %v1459, %v1467
        %v1475 = vmul.f32 %v1460, %v1471
        %v1476 = vmul.f32 %v1461, %v1467
        %v1477 = vmul.f32 %v1462, %v1471
        %v1479 = vlaneseq
        %v1480 = vshrl.u32 %v1479, 7
        %v1481 = vsub.s32 0, %v1480
        %v1482 = vrot.slane %v1429, %v1481
        %v1483 = vlaneseq
        %v1484 = vshrl.u32 %v1483, 7
        %v1485 = vsub.s32 1, %v1484
        %v1486 = vrot.slane %v1429, %v1485
        %v1489 = vadd.f32 %v1474, %v1482
        %v1490 = vadd.f32 %v1475, %v1486
        %v1491 = vadd.f32 %v1476, %v1482
        %v1492 = vadd.f32 %v1477, %v1486
        %v1493 = vpack.c.bf16 %v1491, %v1489
        %v1494 = vpack.c.bf16 %v1492, %v1490
        %v1495 = vld [vmem:[%s1057] sm:$0xff]
        %v1496 = vld [vmem:[%s1057 + $0x8] sm:$0xff]
        %v1497 = vld [vmem:[%s1057 + $0x10] sm:$0xff]
        %v1498 = vld [vmem:[%s1057 + $0x18] sm:$0xff]
        %v1499 = vld [vmem:[%s1057 + $0x20] sm:$0xff]
        %v1500 = vld [vmem:[%s1057 + $0x28] sm:$0xff]
        %v1501 = vld [vmem:[%s1057 + $0x30] sm:$0xff]
        %v1502 = vld [vmem:[%s1057 + $0x38] sm:$0xff]
        %v1503 = vld [vmem:[%s1057 + $0x40] sm:$0xff]
        %v1504 = vld [vmem:[%s1057 + $0x48] sm:$0xff]
        %v1505 = vld [vmem:[%s1057 + $0x50] sm:$0xff]
        %v1506 = vld [vmem:[%s1057 + $0x58] sm:$0xff]
        %v1507 = vld [vmem:[%s1057 + $0x60] sm:$0xff]
        %v1508 = vld [vmem:[%s1057 + $0x68] sm:$0xff]
        %v1509 = vld [vmem:[%s1057 + $0x70] sm:$0xff]
        %v1510 = vld [vmem:[%s1057 + $0x78] sm:$0xff]
        %v1511 = vld [vmem:[%s1057 + $0x80] sm:$0xff]
        %v1512 = vld [vmem:[%s1057 + $0x88] sm:$0xff]
        %v1513 = vld [vmem:[%s1057 + $0x90] sm:$0xff]
        %v1514 = vld [vmem:[%s1057 + $0x98] sm:$0xff]
        %v1515 = vld [vmem:[%s1057 + $0xa0] sm:$0xff]
        %v1516 = vld [vmem:[%s1057 + $0xa8] sm:$0xff]
        %v1517 = vld [vmem:[%s1057 + $0xb0] sm:$0xff]
        %v1518 = vld [vmem:[%s1057 + $0xb8] sm:$0xff]
        %v1519 = vld [vmem:[%s1057 + $0xc0] sm:$0xff]
        %v1520 = vld [vmem:[%s1057 + $0xc8] sm:$0xff]
        %v1521 = vld [vmem:[%s1057 + $0xd0] sm:$0xff]
        %v1522 = vld [vmem:[%s1057 + $0xd8] sm:$0xff]
        %v1523 = vld [vmem:[%s1057 + $0xe0] sm:$0xff]
        %v1524 = vld [vmem:[%s1057 + $0xe8] sm:$0xff]
        %v1525 = vld [vmem:[%s1057 + $0xf0] sm:$0xff]
        %v1526 = vld [vmem:[%s1057 + $0xf8] sm:$0xff]
        %v1527 = vld [vmem:[%s1057 + $0x100] sm:$0xff]
        %v1528 = vld [vmem:[%s1057 + $0x108] sm:$0xff]
        %v1529 = vld [vmem:[%s1057 + $0x110] sm:$0xff]
        %v1530 = vld [vmem:[%s1057 + $0x118] sm:$0xff]
        %v1531 = vld [vmem:[%s1057 + $0x120] sm:$0xff]
        %v1532 = vld [vmem:[%s1057 + $0x128] sm:$0xff]
        %v1533 = vld [vmem:[%s1057 + $0x130] sm:$0xff]
        %v1534 = vld [vmem:[%s1057 + $0x138] sm:$0xff]
        %v1535 = vld [vmem:[%s1057 + $0x140] sm:$0xff]
        %v1536 = vld [vmem:[%s1057 + $0x148] sm:$0xff]
        %v1537 = vld [vmem:[%s1057 + $0x150] sm:$0xff]
        %v1538 = vld [vmem:[%s1057 + $0x158] sm:$0xff]
        %v1539 = vld [vmem:[%s1057 + $0x160] sm:$0xff]
        %v1540 = vld [vmem:[%s1057 + $0x168] sm:$0xff]
        %v1541 = vld [vmem:[%s1057 + $0x170] sm:$0xff]
        %v1542 = vld [vmem:[%s1057 + $0x178] sm:$0xff]
        %v1543 = vld [vmem:[%s1057 + $0x180] sm:$0xff]
        %v1544 = vld [vmem:[%s1057 + $0x188] sm:$0xff]
        %v1545 = vld [vmem:[%s1057 + $0x190] sm:$0xff]
        %v1546 = vld [vmem:[%s1057 + $0x198] sm:$0xff]
        %v1547 = vld [vmem:[%s1057 + $0x1a0] sm:$0xff]
        %v1548 = vld [vmem:[%s1057 + $0x1a8] sm:$0xff]
        %v1549 = vld [vmem:[%s1057 + $0x1b0] sm:$0xff]
        %v1550 = vld [vmem:[%s1057 + $0x1b8] sm:$0xff]
        %v1551 = vld [vmem:[%s1057 + $0x1c0] sm:$0xff]
        %v1552 = vld [vmem:[%s1057 + $0x1c8] sm:$0xff]
        %v1553 = vld [vmem:[%s1057 + $0x1d0] sm:$0xff]
        %v1554 = vld [vmem:[%s1057 + $0x1d8] sm:$0xff]
        %v1555 = vld [vmem:[%s1057 + $0x1e0] sm:$0xff]
        %v1556 = vld [vmem:[%s1057 + $0x1e8] sm:$0xff]
        %v1557 = vld [vmem:[%s1057 + $0x1f0] sm:$0xff]
        %v1558 = vld [vmem:[%s1057 + $0x1f8] sm:$0xff]
        %v1559 = vld [vmem:[%s1057 + $0x200] sm:$0xff]
        %v1560 = vld [vmem:[%s1057 + $0x208] sm:$0xff]
        %v1561 = vld [vmem:[%s1057 + $0x210] sm:$0xff]
        %v1562 = vld [vmem:[%s1057 + $0x218] sm:$0xff]
        %v1563 = vld [vmem:[%s1057 + $0x220] sm:$0xff]
        %v1564 = vld [vmem:[%s1057 + $0x228] sm:$0xff]
        %v1565 = vld [vmem:[%s1057 + $0x230] sm:$0xff]
        %v1566 = vld [vmem:[%s1057 + $0x238] sm:$0xff]
        %v1567 = vld [vmem:[%s1057 + $0x240] sm:$0xff]
        %v1568 = vld [vmem:[%s1057 + $0x248] sm:$0xff]
        %v1569 = vld [vmem:[%s1057 + $0x250] sm:$0xff]
        %v1570 = vld [vmem:[%s1057 + $0x258] sm:$0xff]
        %v1571 = vld [vmem:[%s1057 + $0x260] sm:$0xff]
        %v1572 = vld [vmem:[%s1057 + $0x268] sm:$0xff]
        %v1573 = vld [vmem:[%s1057 + $0x270] sm:$0xff]
        %v1574 = vld [vmem:[%s1057 + $0x278] sm:$0xff]
        %v1575 = vld [vmem:[%s1057 + $0x280] sm:$0xff]
        %v1576 = vld [vmem:[%s1057 + $0x288] sm:$0xff]
        %v1577 = vld [vmem:[%s1057 + $0x290] sm:$0xff]
        %v1578 = vld [vmem:[%s1057 + $0x298] sm:$0xff]
        %v1579 = vld [vmem:[%s1057 + $0x2a0] sm:$0xff]
        %v1580 = vld [vmem:[%s1057 + $0x2a8] sm:$0xff]
        %v1581 = vld [vmem:[%s1057 + $0x2b0] sm:$0xff]
        %v1582 = vld [vmem:[%s1057 + $0x2b8] sm:$0xff]
        %v1583 = vld [vmem:[%s1057 + $0x2c0] sm:$0xff]
        %v1584 = vld [vmem:[%s1057 + $0x2c8] sm:$0xff]
        %v1585 = vld [vmem:[%s1057 + $0x2d0] sm:$0xff]
        %v1586 = vld [vmem:[%s1057 + $0x2d8] sm:$0xff]
        %v1587 = vld [vmem:[%s1057 + $0x2e0] sm:$0xff]
        %v1588 = vld [vmem:[%s1057 + $0x2e8] sm:$0xff]
        %v1589 = vld [vmem:[%s1057 + $0x2f0] sm:$0xff]
        %v1590 = vld [vmem:[%s1057 + $0x2f8] sm:$0xff]
        %v1591 = vld [vmem:[%s1066] sm:$0x3f]
        %v1593 = vlaneseq
        %v1594 = vshrl.u32 %v1593, 7
        %v1595 = vsub.s32 0, %v1594
        %v1596 = vrot.slane %v1591, %v1595
        %v1597 = vlaneseq
        %v1598 = vshrl.u32 %v1597, 7
        %v1599 = vsub.s32 1, %v1598
        %v1600 = vrot.slane %v1591, %v1599
        %v1601 = vlaneseq
        %v1602 = vshrl.u32 %v1601, 7
        %v1603 = vsub.s32 2, %v1602
        %v1604 = vrot.slane %v1591, %v1603
        %v1605 = vlaneseq
        %v1606 = vshrl.u32 %v1605, 7
        %v1607 = vsub.s32 3, %v1606
        %v1608 = vrot.slane %v1591, %v1607
        %v1609 = vlaneseq
        %v1610 = vshrl.u32 %v1609, 7
        %v1611 = vsub.s32 4, %v1610
        %v1612 = vrot.slane %v1591, %v1611
        %v1613 = vlaneseq
        %v1614 = vshrl.u32 %v1613, 7
        %v1615 = vsub.s32 5, %v1614
        %v1616 = vrot.slane %v1591, %v1615
        %v1719 = vunpack.c.l.b16 %v1495
        %v1720 = vunpack.c.h.b16 %v1495
        %v1721 = vunpack.c.l.b16 %v1496
        %v1722 = vunpack.c.h.b16 %v1496
        %v1723 = vunpack.c.l.b16 %v1497
        %v1724 = vunpack.c.h.b16 %v1497
        %v1725 = vunpack.c.l.b16 %v1498
        %v1726 = vunpack.c.h.b16 %v1498
        %v1727 = vunpack.c.l.b16 %v1499
        %v1728 = vunpack.c.h.b16 %v1499
        %v1729 = vunpack.c.l.b16 %v1500
        %v1730 = vunpack.c.h.b16 %v1500
        %v1731 = vunpack.c.l.b16 %v1501
        %v1732 = vunpack.c.h.b16 %v1501
        %v1733 = vunpack.c.l.b16 %v1502
        %v1734 = vunpack.c.h.b16 %v1502
        %v1735 = vunpack.c.l.b16 %v1503
        %v1736 = vunpack.c.h.b16 %v1503
        %v1737 = vunpack.c.l.b16 %v1504
        %v1738 = vunpack.c.h.b16 %v1504
        %v1739 = vunpack.c.l.b16 %v1505
        %v1740 = vunpack.c.h.b16 %v1505
        %v1741 = vunpack.c.l.b16 %v1506
        %v1742 = vunpack.c.h.b16 %v1506
        %v1743 = vunpack.c.l.b16 %v1507
        %v1744 = vunpack.c.h.b16 %v1507
        %v1745 = vunpack.c.l.b16 %v1508
        %v1746 = vunpack.c.h.b16 %v1508
        %v1747 = vunpack.c.l.b16 %v1509
        %v1748 = vunpack.c.h.b16 %v1509
        %v1749 = vunpack.c.l.b16 %v1510
        %v1750 = vunpack.c.h.b16 %v1510
        %v1751 = vunpack.c.l.b16 %v1511
        %v1752 = vunpack.c.h.b16 %v1511
        %v1753 = vunpack.c.l.b16 %v1512
        %v1754 = vunpack.c.h.b16 %v1512
        %v1755 = vunpack.c.l.b16 %v1513
        %v1756 = vunpack.c.h.b16 %v1513
        %v1757 = vunpack.c.l.b16 %v1514
        %v1758 = vunpack.c.h.b16 %v1514
        %v1759 = vunpack.c.l.b16 %v1515
        %v1760 = vunpack.c.h.b16 %v1515
        %v1761 = vunpack.c.l.b16 %v1516
        %v1762 = vunpack.c.h.b16 %v1516
        %v1763 = vunpack.c.l.b16 %v1517
        %v1764 = vunpack.c.h.b16 %v1517
        %v1765 = vunpack.c.l.b16 %v1518
        %v1766 = vunpack.c.h.b16 %v1518
        %v1767 = vunpack.c.l.b16 %v1519
        %v1768 = vunpack.c.h.b16 %v1519
        %v1769 = vunpack.c.l.b16 %v1520
        %v1770 = vunpack.c.h.b16 %v1520
        %v1771 = vunpack.c.l.b16 %v1521
        %v1772 = vunpack.c.h.b16 %v1521
        %v1773 = vunpack.c.l.b16 %v1522
        %v1774 = vunpack.c.h.b16 %v1522
        %v1775 = vunpack.c.l.b16 %v1523
        %v1776 = vunpack.c.h.b16 %v1523
        %v1777 = vunpack.c.l.b16 %v1524
        %v1778 = vunpack.c.h.b16 %v1524
        %v1779 = vunpack.c.l.b16 %v1525
        %v1780 = vunpack.c.h.b16 %v1525
        %v1781 = vunpack.c.l.b16 %v1526
        %v1782 = vunpack.c.h.b16 %v1526
        %v1783 = vunpack.c.l.b16 %v1527
        %v1784 = vunpack.c.h.b16 %v1527
        %v1785 = vunpack.c.l.b16 %v1528
        %v1786 = vunpack.c.h.b16 %v1528
        %v1787 = vunpack.c.l.b16 %v1529
        %v1788 = vunpack.c.h.b16 %v1529
        %v1789 = vunpack.c.l.b16 %v1530
        %v1790 = vunpack.c.h.b16 %v1530
        %v1791 = vunpack.c.l.b16 %v1531
        %v1792 = vunpack.c.h.b16 %v1531
        %v1793 = vunpack.c.l.b16 %v1532
        %v1794 = vunpack.c.h.b16 %v1532
        %v1795 = vunpack.c.l.b16 %v1533
        %v1796 = vunpack.c.h.b16 %v1533
        %v1797 = vunpack.c.l.b16 %v1534
        %v1798 = vunpack.c.h.b16 %v1534
        %v1799 = vunpack.c.l.b16 %v1535
        %v1800 = vunpack.c.h.b16 %v1535
        %v1801 = vunpack.c.l.b16 %v1536
        %v1802 = vunpack.c.h.b16 %v1536
        %v1803 = vunpack.c.l.b16 %v1537
        %v1804 = vunpack.c.h.b16 %v1537
        %v1805 = vunpack.c.l.b16 %v1538
        %v1806 = vunpack.c.h.b16 %v1538
        %v1807 = vunpack.c.l.b16 %v1539
        %v1808 = vunpack.c.h.b16 %v1539
        %v1809 = vunpack.c.l.b16 %v1540
        %v1810 = vunpack.c.h.b16 %v1540
        %v1811 = vunpack.c.l.b16 %v1541
        %v1812 = vunpack.c.h.b16 %v1541
        %v1813 = vunpack.c.l.b16 %v1542
        %v1814 = vunpack.c.h.b16 %v1542
        %v1815 = vunpack.c.l.b16 %v1543
        %v1816 = vunpack.c.h.b16 %v1543
        %v1817 = vunpack.c.l.b16 %v1544
        %v1818 = vunpack.c.h.b16 %v1544
        %v1819 = vunpack.c.l.b16 %v1545
        %v1820 = vunpack.c.h.b16 %v1545
        %v1821 = vunpack.c.l.b16 %v1546
        %v1822 = vunpack.c.h.b16 %v1546
        %v1823 = vunpack.c.l.b16 %v1547
        %v1824 = vunpack.c.h.b16 %v1547
        %v1825 = vunpack.c.l.b16 %v1548
        %v1826 = vunpack.c.h.b16 %v1548
        %v1827 = vunpack.c.l.b16 %v1549
        %v1828 = vunpack.c.h.b16 %v1549
        %v1829 = vunpack.c.l.b16 %v1550
        %v1830 = vunpack.c.h.b16 %v1550
        %v1831 = vunpack.c.l.b16 %v1551
        %v1832 = vunpack.c.h.b16 %v1551
        %v1833 = vunpack.c.l.b16 %v1552
        %v1834 = vunpack.c.h.b16 %v1552
        %v1835 = vunpack.c.l.b16 %v1553
        %v1836 = vunpack.c.h.b16 %v1553
        %v1837 = vunpack.c.l.b16 %v1554
        %v1838 = vunpack.c.h.b16 %v1554
        %v1839 = vunpack.c.l.b16 %v1555
        %v1840 = vunpack.c.h.b16 %v1555
        %v1841 = vunpack.c.l.b16 %v1556
        %v1842 = vunpack.c.h.b16 %v1556
        %v1843 = vunpack.c.l.b16 %v1557
        %v1844 = vunpack.c.h.b16 %v1557
        %v1845 = vunpack.c.l.b16 %v1558
        %v1846 = vunpack.c.h.b16 %v1558
        %v1847 = vunpack.c.l.b16 %v1559
        %v1848 = vunpack.c.h.b16 %v1559
        %v1849 = vunpack.c.l.b16 %v1560
        %v1850 = vunpack.c.h.b16 %v1560
        %v1851 = vunpack.c.l.b16 %v1561
        %v1852 = vunpack.c.h.b16 %v1561
        %v1853 = vunpack.c.l.b16 %v1562
        %v1854 = vunpack.c.h.b16 %v1562
        %v1855 = vunpack.c.l.b16 %v1563
        %v1856 = vunpack.c.h.b16 %v1563
        %v1857 = vunpack.c.l.b16 %v1564
        %v1858 = vunpack.c.h.b16 %v1564
        %v1859 = vunpack.c.l.b16 %v1565
        %v1860 = vunpack.c.h.b16 %v1565
        %v1861 = vunpack.c.l.b16 %v1566
        %v1862 = vunpack.c.h.b16 %v1566
        %v1863 = vunpack.c.l.b16 %v1567
        %v1864 = vunpack.c.h.b16 %v1567
        %v1865 = vunpack.c.l.b16 %v1568
        %v1866 = vunpack.c.h.b16 %v1568
        %v1867 = vunpack.c.l.b16 %v1569
        %v1868 = vunpack.c.h.b16 %v1569
        %v1869 = vunpack.c.l.b16 %v1570
        %v1870 = vunpack.c.h.b16 %v1570
        %v1871 = vunpack.c.l.b16 %v1571
        %v1872 = vunpack.c.h.b16 %v1571
        %v1873 = vunpack.c.l.b16 %v1572
        %v1874 = vunpack.c.h.b16 %v1572
        %v1875 = vunpack.c.l.b16 %v1573
        %v1876 = vunpack.c.h.b16 %v1573
        %v1877 = vunpack.c.l.b16 %v1574
        %v1878 = vunpack.c.h.b16 %v1574
        %v1879 = vunpack.c.l.b16 %v1575
        %v1880 = vunpack.c.h.b16 %v1575
        %v1881 = vunpack.c.l.b16 %v1576
        %v1882 = vunpack.c.h.b16 %v1576
        %v1883 = vunpack.c.l.b16 %v1577
        %v1884 = vunpack.c.h.b16 %v1577
        %v1885 = vunpack.c.l.b16 %v1578
        %v1886 = vunpack.c.h.b16 %v1578
        %v1887 = vunpack.c.l.b16 %v1579
        %v1888 = vunpack.c.h.b16 %v1579
        %v1889 = vunpack.c.l.b16 %v1580
        %v1890 = vunpack.c.h.b16 %v1580
        %v1891 = vunpack.c.l.b16 %v1581
        %v1892 = vunpack.c.h.b16 %v1581
        %v1893 = vunpack.c.l.b16 %v1582
        %v1894 = vunpack.c.h.b16 %v1582
        %v1895 = vunpack.c.l.b16 %v1583
        %v1896 = vunpack.c.h.b16 %v1583
        %v1897 = vunpack.c.l.b16 %v1584
        %v1898 = vunpack.c.h.b16 %v1584
        %v1899 = vunpack.c.l.b16 %v1585
        %v1900 = vunpack.c.h.b16 %v1585
        %v1901 = vunpack.c.l.b16 %v1586
        %v1902 = vunpack.c.h.b16 %v1586
        %v1903 = vunpack.c.l.b16 %v1587
        %v1904 = vunpack.c.h.b16 %v1587
        %v1905 = vunpack.c.l.b16 %v1588
        %v1906 = vunpack.c.h.b16 %v1588
        %v1907 = vunpack.c.l.b16 %v1589
        %v1908 = vunpack.c.h.b16 %v1589
        %v1909 = vunpack.c.l.b16 %v1590
        %v1910 = vunpack.c.h.b16 %v1590
        %v1911 = vpack.c.b16 %v1725, %v1719
        %v1912 = vpack.c.b16 %v1726, %v1720
        %v1913 = vpack.c.b16 %v1727, %v1721
        %v1914 = vpack.c.b16 %v1728, %v1722
        %v1915 = vpack.c.b16 %v1729, %v1723
        %v1916 = vpack.c.b16 %v1730, %v1724
        %v1917 = vpack.c.b16 %v1737, %v1731
        %v1918 = vpack.c.b16 %v1738, %v1732
        %v1919 = vpack.c.b16 %v1739, %v1733
        %v1920 = vpack.c.b16 %v1740, %v1734
        %v1921 = vpack.c.b16 %v1741, %v1735
        %v1922 = vpack.c.b16 %v1742, %v1736
        %v1923 = vpack.c.b16 %v1749, %v1743
        %v1924 = vpack.c.b16 %v1750, %v1744
        %v1925 = vpack.c.b16 %v1751, %v1745
        %v1926 = vpack.c.b16 %v1752, %v1746
        %v1927 = vpack.c.b16 %v1753, %v1747
        %v1928 = vpack.c.b16 %v1754, %v1748
        %v1929 = vpack.c.b16 %v1761, %v1755
        %v1930 = vpack.c.b16 %v1762, %v1756
        %v1931 = vpack.c.b16 %v1763, %v1757
        %v1932 = vpack.c.b16 %v1764, %v1758
        %v1933 = vpack.c.b16 %v1765, %v1759
        %v1934 = vpack.c.b16 %v1766, %v1760
        %v1935 = vpack.c.b16 %v1773, %v1767
        %v1936 = vpack.c.b16 %v1774, %v1768
        %v1937 = vpack.c.b16 %v1775, %v1769
        %v1938 = vpack.c.b16 %v1776, %v1770
        %v1939 = vpack.c.b16 %v1777, %v1771
        %v1940 = vpack.c.b16 %v1778, %v1772
        %v1941 = vpack.c.b16 %v1785, %v1779
        %v1942 = vpack.c.b16 %v1786, %v1780
        %v1943 = vpack.c.b16 %v1787, %v1781
        %v1944 = vpack.c.b16 %v1788, %v1782
        %v1945 = vpack.c.b16 %v1789, %v1783
        %v1946 = vpack.c.b16 %v1790, %v1784
        %v1947 = vpack.c.b16 %v1797, %v1791
        %v1948 = vpack.c.b16 %v1798, %v1792
        %v1949 = vpack.c.b16 %v1799, %v1793
        %v1950 = vpack.c.b16 %v1800, %v1794
        %v1951 = vpack.c.b16 %v1801, %v1795
        %v1952 = vpack.c.b16 %v1802, %v1796
        %v1953 = vpack.c.b16 %v1809, %v1803
        %v1954 = vpack.c.b16 %v1810, %v1804
        %v1955 = vpack.c.b16 %v1811, %v1805
        %v1956 = vpack.c.b16 %v1812, %v1806
        %v1957 = vpack.c.b16 %v1813, %v1807
        %v1958 = vpack.c.b16 %v1814, %v1808
        %v1959 = vpack.c.b16 %v1821, %v1815
        %v1960 = vpack.c.b16 %v1822, %v1816
        %v1961 = vpack.c.b16 %v1823, %v1817
        %v1962 = vpack.c.b16 %v1824, %v1818
        %v1963 = vpack.c.b16 %v1825, %v1819
        %v1964 = vpack.c.b16 %v1826, %v1820
        %v1965 = vpack.c.b16 %v1833, %v1827
        %v1966 = vpack.c.b16 %v1834, %v1828
        %v1967 = vpack.c.b16 %v1835, %v1829
        %v1968 = vpack.c.b16 %v1836, %v1830
        %v1969 = vpack.c.b16 %v1837, %v1831
        %v1970 = vpack.c.b16 %v1838, %v1832
        %v1971 = vpack.c.b16 %v1845, %v1839
        %v1972 = vpack.c.b16 %v1846, %v1840
        %v1973 = vpack.c.b16 %v1847, %v1841
        %v1974 = vpack.c.b16 %v1848, %v1842
        %v1975 = vpack.c.b16 %v1849, %v1843
        %v1976 = vpack.c.b16 %v1850, %v1844
        %v1977 = vpack.c.b16 %v1857, %v1851
        %v1978 = vpack.c.b16 %v1858, %v1852
        %v1979 = vpack.c.b16 %v1859, %v1853
        %v1980 = vpack.c.b16 %v1860, %v1854
        %v1981 = vpack.c.b16 %v1861, %v1855
        %v1982 = vpack.c.b16 %v1862, %v1856
        %v1983 = vpack.c.b16 %v1869, %v1863
        %v1984 = vpack.c.b16 %v1870, %v1864
        %v1985 = vpack.c.b16 %v1871, %v1865
        %v1986 = vpack.c.b16 %v1872, %v1866
        %v1987 = vpack.c.b16 %v1873, %v1867
        %v1988 = vpack.c.b16 %v1874, %v1868
        %v1989 = vpack.c.b16 %v1881, %v1875
        %v1990 = vpack.c.b16 %v1882, %v1876
        %v1991 = vpack.c.b16 %v1883, %v1877
        %v1992 = vpack.c.b16 %v1884, %v1878
        %v1993 = vpack.c.b16 %v1885, %v1879
        %v1994 = vpack.c.b16 %v1886, %v1880
        %v1995 = vpack.c.b16 %v1893, %v1887
        %v1996 = vpack.c.b16 %v1894, %v1888
        %v1997 = vpack.c.b16 %v1895, %v1889
        %v1998 = vpack.c.b16 %v1896, %v1890
        %v1999 = vpack.c.b16 %v1897, %v1891
        %v2000 = vpack.c.b16 %v1898, %v1892
        %v2001 = vpack.c.b16 %v1905, %v1899
        %v2002 = vpack.c.b16 %v1906, %v1900
        %v2003 = vpack.c.b16 %v1907, %v1901
        %v2004 = vpack.c.b16 %v1908, %v1902
        %v2005 = vpack.c.b16 %v1909, %v1903
        %v2006 = vpack.c.b16 %v1910, %v1904
        %2103 = vmatprep.subr.bf16.mxu0 %v1912
        %2104 = vmatpush1.bf16.msra.mxu0 %v1911
        %2105 = vmatprep.subr.bf16.mxu0 %v1918
        %2106 = vmatpush1.bf16.msra.mxu0 %v1917
        %2107 = vmatprep.subr.bf16.mxu0 %v1924
        %2108 = vmatpush1.bf16.msra.mxu0 %v1923
        %2109 = vmatprep.subr.bf16.mxu0 %v1930
        %2110 = vmatpush1.bf16.msra.mxu0 %v1929
        %2111 = vmatprep.subr.bf16.mxu0 %v1936
        %2112 = vmatpush1.bf16.msra.mxu0 %v1935
        %2113 = vmatprep.subr.bf16.mxu0 %v1942
        %2114 = vmatpush1.bf16.msra.mxu0 %v1941
        %2115 = vmatprep.subr.bf16.mxu0 %v1948
        %2116 = vmatpush1.bf16.msra.mxu0 %v1947
        %2117 = vmatprep.subr.bf16.mxu0 %v1954
        %2118 = vmatpush1.bf16.msra.mxu0 %v1953
        %2119 = vmatprep.subr.bf16.mxu0 %v1960
        %2120 = vmatpush1.bf16.msra.mxu0 %v1959
        %2121 = vmatprep.subr.bf16.mxu0 %v1966
        %2122 = vmatpush1.bf16.msra.mxu0 %v1965
        %2123 = vmatprep.subr.bf16.mxu0 %v1972
        %2124 = vmatpush1.bf16.msra.mxu0 %v1971
        %2125 = vmatprep.subr.bf16.mxu0 %v1978
        %2126 = vmatpush1.bf16.msra.mxu0 %v1977
        %2127 = vmatprep.subr.bf16.mxu0 %v1984
        %2128 = vmatpush1.bf16.msra.mxu0 %v1983
        %2129 = vmatprep.subr.bf16.mxu0 %v1990
        %2130 = vmatpush1.bf16.msra.mxu0 %v1989
        %2131 = vmatprep.subr.bf16.mxu0 %v1996
        %2132 = vmatpush1.bf16.msra.mxu0 %v1995
        %2133 = vmatprep.subr.bf16.mxu0 %v2002
        %2134 = vmatpush1.bf16.msra.mxu0 %v2001
        %2135 = vmatprep.mubr.bf16.mxu0 %v1494
        %2136 = vmatmul.mubr.bf16.gmra.mrb[0].mxu0 %v1493
        %v2137 = vpop.f32.mrb[0].mxu0
        %v2138 = vadd.f32 %v1596, %v2137
        %v2139 = vpop.f32.mrb[0].mxu0
        %v2140 = vadd.f32 %v1600, %v2139
        %v2141 = vpop.f32.mrb[0].mxu0
        %v2142 = vadd.f32 %v1596, %v2141
        %v2143 = vpop.f32.mrb[0].mxu0
        %v2144 = vadd.f32 %v1600, %v2143
        %2145 = vdwg.mxu0
        %2146 = vmatprep.subr.bf16.mxu0 %v1914
        %2147 = vmatpush1.bf16.msra.mxu0 %v1913
        %2148 = vmatprep.subr.bf16.mxu0 %v1920
        %2149 = vmatpush1.bf16.msra.mxu0 %v1919
        %2150 = vmatprep.subr.bf16.mxu0 %v1926
        %2151 = vmatpush1.bf16.msra.mxu0 %v1925
        %2152 = vmatprep.subr.bf16.mxu0 %v1932
        %2153 = vmatpush1.bf16.msra.mxu0 %v1931
        %2154 = vmatprep.subr.bf16.mxu0 %v1938
        %2155 = vmatpush1.bf16.msra.mxu0 %v1937
        %2156 = vmatprep.subr.bf16.mxu0 %v1944
        %2157 = vmatpush1.bf16.msra.mxu0 %v1943
        %2158 = vmatprep.subr.bf16.mxu0 %v1950
        %2159 = vmatpush1.bf16.msra.mxu0 %v1949
        %2160 = vmatprep.subr.bf16.mxu0 %v1956
        %2161 = vmatpush1.bf16.msra.mxu0 %v1955
        %2162 = vmatprep.subr.bf16.mxu0 %v1962
        %2163 = vmatpush1.bf16.msra.mxu0 %v1961
        %2164 = vmatprep.subr.bf16.mxu0 %v1968
        %2165 = vmatpush1.bf16.msra.mxu0 %v1967
        %2166 = vmatprep.subr.bf16.mxu0 %v1974
        %2167 = vmatpush1.bf16.msra.mxu0 %v1973
        %2168 = vmatprep.subr.bf16.mxu0 %v1980
        %2169 = vmatpush1.bf16.msra.mxu0 %v1979
        %2170 = vmatprep.subr.bf16.mxu0 %v1986
        %2171 = vmatpush1.bf16.msra.mxu0 %v1985
        %2172 = vmatprep.subr.bf16.mxu0 %v1992
        %2173 = vmatpush1.bf16.msra.mxu0 %v1991
        %2174 = vmatprep.subr.bf16.mxu0 %v1998
        %2175 = vmatpush1.bf16.msra.mxu0 %v1997
        %2176 = vmatprep.subr.bf16.mxu0 %v2004
        %2177 = vmatpush1.bf16.msra.mxu0 %v2003
        %2178 = vmatprep.mubr.bf16.mxu0 %v1494
        %2179 = vmatmul.mubr.bf16.gmra.mrb[0].mxu0 %v1493
        %v2180 = vpop.f32.mrb[0].mxu0
        %v2181 = vadd.f32 %v1604, %v2180
        %v2182 = vpop.f32.mrb[0].mxu0
        %v2183 = vadd.f32 %v1608, %v2182
        %v2184 = vpop.f32.mrb[0].mxu0
        %v2185 = vadd.f32 %v1604, %v2184
        %v2186 = vpop.f32.mrb[0].mxu0
        %v2187 = vadd.f32 %v1608, %v2186
        %2188 = vdwg.mxu0
        %2189 = vmatprep.subr.bf16.mxu0 %v1916
        %2190 = vmatpush1.bf16.msra.mxu0 %v1915
        %2191 = vmatprep.subr.bf16.mxu0 %v1922
        %2192 = vmatpush1.bf16.msra.mxu0 %v1921
        %2193 = vmatprep.subr.bf16.mxu0 %v1928
        %2194 = vmatpush1.bf16.msra.mxu0 %v1927
        %2195 = vmatprep.subr.bf16.mxu0 %v1934
        %2196 = vmatpush1.bf16.msra.mxu0 %v1933
        %2197 = vmatprep.subr.bf16.mxu0 %v1940
        %2198 = vmatpush1.bf16.msra.mxu0 %v1939
        %2199 = vmatprep.subr.bf16.mxu0 %v1946
        %2200 = vmatpush1.bf16.msra.mxu0 %v1945
        %2201 = vmatprep.subr.bf16.mxu0 %v1952
        %2202 = vmatpush1.bf16.msra.mxu0 %v1951
        %2203 = vmatprep.subr.bf16.mxu0 %v1958
        %2204 = vmatpush1.bf16.msra.mxu0 %v1957
        %2205 = vmatprep.subr.bf16.mxu0 %v1964
        %2206 = vmatpush1.bf16.msra.mxu0 %v1963
        %2207 = vmatprep.subr.bf16.mxu0 %v1970
        %2208 = vmatpush1.bf16.msra.mxu0 %v1969
        %2209 = vmatprep.subr.bf16.mxu0 %v1976
        %2210 = vmatpush1.bf16.msra.mxu0 %v1975
        %2211 = vmatprep.subr.bf16.mxu0 %v1982
        %2212 = vmatpush1.bf16.msra.mxu0 %v1981
        %2213 = vmatprep.subr.bf16.mxu0 %v1988
        %2214 = vmatpush1.bf16.msra.mxu0 %v1987
        %2215 = vmatprep.subr.bf16.mxu0 %v1994
        %2216 = vmatpush1.bf16.msra.mxu0 %v1993
        %2217 = vmatprep.subr.bf16.mxu0 %v2000
        %2218 = vmatpush1.bf16.msra.mxu0 %v1999
        %2219 = vmatprep.subr.bf16.mxu0 %v2006
        %2220 = vmatpush1.bf16.msra.mxu0 %v2005
        %2221 = vmatprep.mubr.bf16.mxu0 %v1494
        %2222 = vmatmul.mubr.bf16.gmra.mrb[0].mxu0 %v1493
        %v2223 = vpop.f32.mrb[0].mxu0
        %v2224 = vadd.f32 %v1612, %v2223
        %v2225 = vpop.f32.mrb[0].mxu0
        %v2226 = vadd.f32 %v1616, %v2225
        %v2227 = vpop.f32.mrb[0].mxu0
        %v2228 = vadd.f32 %v1612, %v2227
        %v2229 = vpop.f32.mrb[0].mxu0
        %v2230 = vadd.f32 %v1616, %v2229
        %2231 = vdwg.mxu0
        %v2232 = vld [vmem:[#allocation6] sm:$0xff]
        %v2233 = vld [vmem:[#allocation8] sm:$0xff]
        %v2234 = vld [vmem:[#allocation9] sm:$0xff]
        %v2235 = vmul.f32 %v2138, %v2232
        %v2236 = vmul.f32 %v2142, %v2232
        %2237 = vrot.lane.b32.xlu0 %v2138, 1
        %v2238 = vpop.permute.xlu0 %2237
        %2239 = vrot.lane.b32.xlu0 %v2142, 1
        %v2240 = vpop.permute.xlu0 %2239
        %v2241 = vmul.f32 %v2238, %v2233
        %v2242 = vmul.f32 %v2240, %v2233
        %v2243 = vadd.f32 %v2235, %v2241
        %v2244 = vadd.f32 %v2236, %v2242
        %2245 = vrot.lane.b32.xlu0 %v2138, 127
        %v2246 = vpop.permute.xlu0 %2245
        %2247 = vrot.lane.b32.xlu0 %v2142, 127
        %v2248 = vpop.permute.xlu0 %2247
        %v2249 = vmul.f32 %v2246, %v2234
        %v2250 = vmul.f32 %v2248, %v2234
        %v2251 = vadd.f32 %v2243, %v2249
        %v2252 = vadd.f32 %v2244, %v2250
        %v2253 = vpack.c.bf16 %v2251, %v2251
        %v2254 = vpack.c.bf16 %v2252, %v2252
        %v2255 = vmul.f32 %v2181, %v2232
        %v2256 = vmul.f32 %v2185, %v2232
        %2257 = vrot.lane.b32.xlu0 %v2181, 1
        %v2258 = vpop.permute.xlu0 %2257
        %2259 = vrot.lane.b32.xlu0 %v2185, 1
        %v2260 = vpop.permute.xlu0 %2259
        %v2261 = vmul.f32 %v2258, %v2233
        %v2262 = vmul.f32 %v2260, %v2233
        %v2263 = vadd.f32 %v2255, %v2261
        %v2264 = vadd.f32 %v2256, %v2262
        %2265 = vrot.lane.b32.xlu0 %v2181, 127
        %v2266 = vpop.permute.xlu0 %2265
        %2267 = vrot.lane.b32.xlu0 %v2185, 127
        %v2268 = vpop.permute.xlu0 %2267
        %v2269 = vmul.f32 %v2266, %v2234
        %v2270 = vmul.f32 %v2268, %v2234
        %v2271 = vadd.f32 %v2263, %v2269
        %v2272 = vadd.f32 %v2264, %v2270
        %v2273 = vpack.c.bf16 %v2271, %v2271
        %v2274 = vpack.c.bf16 %v2272, %v2272
        %v2275 = vpack.c.bf16 %v2224, %v2224
        %v2276 = vpack.c.bf16 %v2228, %v2228
        %2277 = vmatprep.subr.bf16.mxu0 0
        %2278 = vmatpush1.bf16.xpose.msra.mxu0 %v2273
        %2279 = vmatprep.subr.bf16.mxu0 0
        %2280 = vmatpush1.bf16.xpose.msra.mxu0 0
        %2281 = vmatprep.subr.bf16.mxu0 0
        %2282 = vmatpush1.bf16.xpose.msra.mxu0 0
        %2283 = vmatprep.subr.bf16.mxu0 0
        %2284 = vmatpush1.bf16.xpose.msra.mxu0 0
        %2285 = vmatprep.subr.bf16.mxu0 0
        %2286 = vmatpush1.bf16.xpose.msra.mxu0 0
        %2287 = vmatprep.subr.bf16.mxu0 0
        %2288 = vmatpush1.bf16.xpose.msra.mxu0 0
        %2289 = vmatprep.subr.bf16.mxu0 0
        %2290 = vmatpush1.bf16.xpose.msra.mxu0 0
        %2291 = vmatprep.subr.bf16.mxu0 0
        %2292 = vmatpush1.bf16.xpose.msra.mxu0 0
        %2293 = vmatprep.subr.bf16.mxu0 0
        %2294 = vmatpush1.bf16.xpose.msra.mxu0 0
        %2295 = vmatprep.subr.bf16.mxu0 0
        %2296 = vmatpush1.bf16.xpose.msra.mxu0 0
        %2297 = vmatprep.subr.bf16.mxu0 0
        %2298 = vmatpush1.bf16.xpose.msra.mxu0 0
        %2299 = vmatprep.subr.bf16.mxu0 0
        %2300 = vmatpush1.bf16.xpose.msra.mxu0 0
        %2301 = vmatprep.subr.bf16.mxu0 0
        %2302 = vmatpush1.bf16.xpose.msra.mxu0 0
        %2303 = vmatprep.subr.bf16.mxu0 0
        %2304 = vmatpush1.bf16.xpose.msra.mxu0 0
        %2305 = vmatprep.subr.bf16.mxu0 0
        %2306 = vmatpush1.bf16.xpose.msra.mxu0 0
        %2307 = vmatprep.subr.bf16.mxu0 0
        %2308 = vmatpush1.bf16.xpose.msra.mxu0 0
        %2309 = vmatprep.mubr.bf16.mxu0 0
        %2310 = vmatmul.mubr.bf16.gmra.mrb[0].mxu0 %v2253
        %v2311 = vpop.f32.mrb[0].mxu0
        %v2312 = vadd.f32 0.0, %v2311
        %v2313 = vpop.f32.mrb[0].mxu0
        %v2314 = vpop.f32.mrb[0].mxu0
        %v2315 = vpop.f32.mrb[0].mxu0
        %2316 = vdwg.mxu0
        %2317 = vmatprep.subr.bf16.mxu0 0
        %2318 = vmatpush1.bf16.xpose.msra.mxu0 %v2274
        %2319 = vmatprep.subr.bf16.mxu0 0
        %2320 = vmatpush1.bf16.xpose.msra.mxu0 0
        %2321 = vmatprep.subr.bf16.mxu0 0
        %2322 = vmatpush1.bf16.xpose.msra.mxu0 0
        %2323 = vmatprep.subr.bf16.mxu0 0
        %2324 = vmatpush1.bf16.xpose.msra.mxu0 0
        %2325 = vmatprep.subr.bf16.mxu0 0
        %2326 = vmatpush1.bf16.xpose.msra.mxu0 0
        %2327 = vmatprep.subr.bf16.mxu0 0
        %2328 = vmatpush1.bf16.xpose.msra.mxu0 0
        %2329 = vmatprep.subr.bf16.mxu0 0
        %2330 = vmatpush1.bf16.xpose.msra.mxu0 0
        %2331 = vmatprep.subr.bf16.mxu0 0
        %2332 = vmatpush1.bf16.xpose.msra.mxu0 0
        %2333 = vmatprep.subr.bf16.mxu0 0
        %2334 = vmatpush1.bf16.xpose.msra.mxu0 0
        %2335 = vmatprep.subr.bf16.mxu0 0
        %2336 = vmatpush1.bf16.xpose.msra.mxu0 0
        %2337 = vmatprep.subr.bf16.mxu0 0
        %2338 = vmatpush1.bf16.xpose.msra.mxu0 0
        %2339 = vmatprep.subr.bf16.mxu0 0
        %2340 = vmatpush1.bf16.xpose.msra.mxu0 0
        %2341 = vmatprep.subr.bf16.mxu0 0
        %2342 = vmatpush1.bf16.xpose.msra.mxu0 0
        %2343 = vmatprep.subr.bf16.mxu0 0
        %2344 = vmatpush1.bf16.xpose.msra.mxu0 0
        %2345 = vmatprep.subr.bf16.mxu0 0
        %2346 = vmatpush1.bf16.xpose.msra.mxu0 0
        %2347 = vmatprep.subr.bf16.mxu0 0
        %2348 = vmatpush1.bf16.xpose.msra.mxu0 0
        %2349 = vmatprep.mubr.bf16.mxu0 0
        %2350 = vmatmul.mubr.bf16.gmra.mrb[0].mxu0 %v2254
        %v2351 = vpop.f32.mrb[0].mxu0
        %v2352 = vadd.f32 0.0, %v2351
        %v2353 = vpop.f32.mrb[0].mxu0
        %v2354 = vpop.f32.mrb[0].mxu0
        %v2355 = vpop.f32.mrb[0].mxu0
        %2356 = vdwg.mxu0
        %vm2357 = vcmask 64512
        %v2358 = vsel %vm2357, %v2312, -inf
        %2359 = vmax.xlane.f32.xlu0 %v2358
        %v2360 = vpop.xlane.xlu0 %2359
        %v2361 = vsel %vm2357, %v2352, -inf
        %2362 = vmax.xlane.f32.xlu0 %v2361
        %v2363 = vpop.xlane.xlu0 %2362
        %v2364 = vsub.f32 %v2312, %v2360
        %v2365 = vsub.f32 %v2352, %v2363
        %v2366 = vmul.f32 %v2364, 1.442695
        %v2367 = vpow.pop %v2366
        %v2368 = vmul.f32 %v2365, 1.442695
        %v2369 = vpow.pop %v2368
        %v2370 = vsel %vm2357, %v2367, 0.0
        %2371 = vadd.xlane.f32.xlu0 %v2370
        %v2372 = vpop.xlane.xlu0 %2371
        %v2373 = vsel %vm2357, %v2369, 0.0
        %2374 = vadd.xlane.f32.xlu0 %v2373
        %v2375 = vpop.xlane.xlu0 %2374
        %v2376 = vpack.c.bf16 %v2367, %v2367
        %v2377 = vpack.c.bf16 %v2369, %v2369
        %v2379 = vsel %vm2357, %v2376, 0
        %vm2381 = vcmask 1043456
        %v2383 = vsel %vm2381, %v2275, 0
        %2385 = vmatprep.subr.bf16.mxu0 0
        %2386 = vmatpush1.bf16.msra.mxu0 %v2383
        %2387 = vmatprep.subr.bf16.mxu0 0
        %2388 = vmatpush1.bf16.msra.mxu0 0
        %2389 = vmatprep.subr.bf16.mxu0 0
        %2390 = vmatpush1.bf16.msra.mxu0 0
        %2391 = vmatprep.subr.bf16.mxu0 0
        %2392 = vmatpush1.bf16.msra.mxu0 0
        %2393 = vmatprep.subr.bf16.mxu0 0
        %2394 = vmatpush1.bf16.msra.mxu0 0
        %2395 = vmatprep.subr.bf16.mxu0 0
        %2396 = vmatpush1.bf16.msra.mxu0 0
        %2397 = vmatprep.subr.bf16.mxu0 0
        %2398 = vmatpush1.bf16.msra.mxu0 0
        %2399 = vmatprep.subr.bf16.mxu0 0
        %2400 = vmatpush1.bf16.msra.mxu0 0
        %2401 = vmatprep.subr.bf16.mxu0 0
        %2402 = vmatpush1.bf16.msra.mxu0 0
        %2403 = vmatprep.subr.bf16.mxu0 0
        %2404 = vmatpush1.bf16.msra.mxu0 0
        %2405 = vmatprep.subr.bf16.mxu0 0
        %2406 = vmatpush1.bf16.msra.mxu0 0
        %2407 = vmatprep.subr.bf16.mxu0 0
        %2408 = vmatpush1.bf16.msra.mxu0 0
        %2409 = vmatprep.subr.bf16.mxu0 0
        %2410 = vmatpush1.bf16.msra.mxu0 0
        %2411 = vmatprep.subr.bf16.mxu0 0
        %2412 = vmatpush1.bf16.msra.mxu0 0
        %2413 = vmatprep.subr.bf16.mxu0 0
        %2414 = vmatpush1.bf16.msra.mxu0 0
        %2415 = vmatprep.subr.bf16.mxu0 0
        %2416 = vmatpush1.bf16.msra.mxu0 0
        %2417 = vmatprep.mubr.bf16.mxu0 0
        %2418 = vmatmul.mubr.bf16.gmra.mrb[0].mxu0 %v2379
        %v2419 = vpop.f32.mrb[0].mxu0
        %v2420 = vadd.f32 0.0, %v2419
        %v2421 = vpop.f32.mrb[0].mxu0
        %v2422 = vpop.f32.mrb[0].mxu0
        %v2423 = vpop.f32.mrb[0].mxu0
        %2424 = vdwg.mxu0
        %v2426 = vsel %vm2357, %v2377, 0
        %v2429 = vsel %vm2381, %v2276, 0
        %2431 = vmatprep.subr.bf16.mxu0 0
        %2432 = vmatpush1.bf16.msra.mxu0 %v2429
        %2433 = vmatprep.subr.bf16.mxu0 0
        %2434 = vmatpush1.bf16.msra.mxu0 0
        %2435 = vmatprep.subr.bf16.mxu0 0
        %2436 = vmatpush1.bf16.msra.mxu0 0
        %2437 = vmatprep.subr.bf16.mxu0 0
        %2438 = vmatpush1.bf16.msra.mxu0 0
        %2439 = vmatprep.subr.bf16.mxu0 0
        %2440 = vmatpush1.bf16.msra.mxu0 0
        %2441 = vmatprep.subr.bf16.mxu0 0
        %2442 = vmatpush1.bf16.msra.mxu0 0
        %2443 = vmatprep.subr.bf16.mxu0 0
        %2444 = vmatpush1.bf16.msra.mxu0 0
        %2445 = vmatprep.subr.bf16.mxu0 0
        %2446 = vmatpush1.bf16.msra.mxu0 0
        %2447 = vmatprep.subr.bf16.mxu0 0
        %2448 = vmatpush1.bf16.msra.mxu0 0
        %2449 = vmatprep.subr.bf16.mxu0 0
        %2450 = vmatpush1.bf16.msra.mxu0 0
        %2451 = vmatprep.subr.bf16.mxu0 0
        %2452 = vmatpush1.bf16.msra.mxu0 0
        %2453 = vmatprep.subr.bf16.mxu0 0
        %2454 = vmatpush1.bf16.msra.mxu0 0
        %2455 = vmatprep.subr.bf16.mxu0 0
        %2456 = vmatpush1.bf16.msra.mxu0 0
        %2457 = vmatprep.subr.bf16.mxu0 0
        %2458 = vmatpush1.bf16.msra.mxu0 0
        %2459 = vmatprep.subr.bf16.mxu0 0
        %2460 = vmatpush1.bf16.msra.mxu0 0
        %2461 = vmatprep.subr.bf16.mxu0 0
        %2462 = vmatpush1.bf16.msra.mxu0 0
        %2463 = vmatprep.mubr.bf16.mxu0 0
        %2464 = vmatmul.mubr.bf16.gmra.mrb[0].mxu0 %v2426
        %v2465 = vpop.f32.mrb[0].mxu0
        %v2466 = vadd.f32 0.0, %v2465
        %v2467 = vpop.f32.mrb[0].mxu0
        %v2468 = vpop.f32.mrb[0].mxu0
        %v2469 = vpop.f32.mrb[0].mxu0
        %2470 = vdwg.mxu0
        %v2471 = vrcp.pop %v2372
        %v2472 = vrcp.pop %v2375
        %v2473 = vmul.f32 %v2420, %v2471
        %v2474 = vmul.f32 %v2466, %v2472
        %v2475 = vmul.f32 %v2140, %v2232
        %v2476 = vmul.f32 %v2144, %v2232
        %2477 = vrot.lane.b32.xlu0 %v2140, 1
        %v2478 = vpop.permute.xlu0 %2477
        %2479 = vrot.lane.b32.xlu0 %v2144, 1
        %v2480 = vpop.permute.xlu0 %2479
        %v2481 = vmul.f32 %v2478, %v2233
        %v2482 = vmul.f32 %v2480, %v2233
        %v2483 = vadd.f32 %v2475, %v2481
        %v2484 = vadd.f32 %v2476, %v2482
        %2485 = vrot.lane.b32.xlu0 %v2140, 127
        %v2486 = vpop.permute.xlu0 %2485
        %2487 = vrot.lane.b32.xlu0 %v2144, 127
        %v2488 = vpop.permute.xlu0 %2487
        %v2489 = vmul.f32 %v2486, %v2234
        %v2490 = vmul.f32 %v2488, %v2234
        %v2491 = vadd.f32 %v2483, %v2489
        %v2492 = vadd.f32 %v2484, %v2490
        %v2493 = vpack.c.bf16 %v2491, %v2491
        %v2494 = vpack.c.bf16 %v2492, %v2492
        %v2495 = vmul.f32 %v2183, %v2232
        %v2496 = vmul.f32 %v2187, %v2232
        %2497 = vrot.lane.b32.xlu0 %v2183, 1
        %v2498 = vpop.permute.xlu0 %2497
        %2499 = vrot.lane.b32.xlu0 %v2187, 1
        %v2500 = vpop.permute.xlu0 %2499
        %v2501 = vmul.f32 %v2498, %v2233
        %v2502 = vmul.f32 %v2500, %v2233
        %v2503 = vadd.f32 %v2495, %v2501
        %v2504 = vadd.f32 %v2496, %v2502
        %2505 = vrot.lane.b32.xlu0 %v2183, 127
        %v2506 = vpop.permute.xlu0 %2505
        %2507 = vrot.lane.b32.xlu0 %v2187, 127
        %v2508 = vpop.permute.xlu0 %2507
        %v2509 = vmul.f32 %v2506, %v2234
        %v2510 = vmul.f32 %v2508, %v2234
        %v2511 = vadd.f32 %v2503, %v2509
        %v2512 = vadd.f32 %v2504, %v2510
        %v2513 = vpack.c.bf16 %v2511, %v2511
        %v2514 = vpack.c.bf16 %v2512, %v2512
        %v2515 = vpack.c.bf16 %v2226, %v2226
        %v2516 = vpack.c.bf16 %v2230, %v2230
        %2517 = vmatprep.subr.bf16.mxu0 0
        %2518 = vmatpush1.bf16.xpose.msra.mxu0 %v2513
        %2519 = vmatprep.subr.bf16.mxu0 0
        %2520 = vmatpush1.bf16.xpose.msra.mxu0 0
        %2521 = vmatprep.subr.bf16.mxu0 0
        %2522 = vmatpush1.bf16.xpose.msra.mxu0 0
        %2523 = vmatprep.subr.bf16.mxu0 0
        %2524 = vmatpush1.bf16.xpose.msra.mxu0 0
        %2525 = vmatprep.subr.bf16.mxu0 0
        %2526 = vmatpush1.bf16.xpose.msra.mxu0 0
        %2527 = vmatprep.subr.bf16.mxu0 0
        %2528 = vmatpush1.bf16.xpose.msra.mxu0 0
        %2529 = vmatprep.subr.bf16.mxu0 0
        %2530 = vmatpush1.bf16.xpose.msra.mxu0 0
        %2531 = vmatprep.subr.bf16.mxu0 0
        %2532 = vmatpush1.bf16.xpose.msra.mxu0 0
        %2533 = vmatprep.subr.bf16.mxu0 0
        %2534 = vmatpush1.bf16.xpose.msra.mxu0 0
        %2535 = vmatprep.subr.bf16.mxu0 0
        %2536 = vmatpush1.bf16.xpose.msra.mxu0 0
        %2537 = vmatprep.subr.bf16.mxu0 0
        %2538 = vmatpush1.bf16.xpose.msra.mxu0 0
        %2539 = vmatprep.subr.bf16.mxu0 0
        %2540 = vmatpush1.bf16.xpose.msra.mxu0 0
        %2541 = vmatprep.subr.bf16.mxu0 0
        %2542 = vmatpush1.bf16.xpose.msra.mxu0 0
        %2543 = vmatprep.subr.bf16.mxu0 0
        %2544 = vmatpush1.bf16.xpose.msra.mxu0 0
        %2545 = vmatprep.subr.bf16.mxu0 0
        %2546 = vmatpush1.bf16.xpose.msra.mxu0 0
        %2547 = vmatprep.subr.bf16.mxu0 0
        %2548 = vmatpush1.bf16.xpose.msra.mxu0 0
        %2549 = vmatprep.mubr.bf16.mxu0 0
        %2550 = vmatmul.mubr.bf16.gmra.mrb[0].mxu0 %v2493
        %v2551 = vpop.f32.mrb[0].mxu0
        %v2552 = vadd.f32 0.0, %v2551
        %v2553 = vpop.f32.mrb[0].mxu0
        %v2554 = vpop.f32.mrb[0].mxu0
        %v2555 = vpop.f32.mrb[0].mxu0
        %2556 = vdwg.mxu0
        %2557 = vmatprep.subr.bf16.mxu0 0
        %2558 = vmatpush1.bf16.xpose.msra.mxu0 %v2514
        %2559 = vmatprep.subr.bf16.mxu0 0
        %2560 = vmatpush1.bf16.xpose.msra.mxu0 0
        %2561 = vmatprep.subr.bf16.mxu0 0
        %2562 = vmatpush1.bf16.xpose.msra.mxu0 0
        %2563 = vmatprep.subr.bf16.mxu0 0
        %2564 = vmatpush1.bf16.xpose.msra.mxu0 0
        %2565 = vmatprep.subr.bf16.mxu0 0
        %2566 = vmatpush1.bf16.xpose.msra.mxu0 0
        %2567 = vmatprep.subr.bf16.mxu0 0
        %2568 = vmatpush1.bf16.xpose.msra.mxu0 0
        %2569 = vmatprep.subr.bf16.mxu0 0
        %2570 = vmatpush1.bf16.xpose.msra.mxu0 0
        %2571 = vmatprep.subr.bf16.mxu0 0
        %2572 = vmatpush1.bf16.xpose.msra.mxu0 0
        %2573 = vmatprep.subr.bf16.mxu0 0
        %2574 = vmatpush1.bf16.xpose.msra.mxu0 0
        %2575 = vmatprep.subr.bf16.mxu0 0
        %2576 = vmatpush1.bf16.xpose.msra.mxu0 0
        %2577 = vmatprep.subr.bf16.mxu0 0
        %2578 = vmatpush1.bf16.xpose.msra.mxu0 0
        %2579 = vmatprep.subr.bf16.mxu0 0
        %2580 = vmatpush1.bf16.xpose.msra.mxu0 0
        %2581 = vmatprep.subr.bf16.mxu0 0
        %2582 = vmatpush1.bf16.xpose.msra.mxu0 0
        %2583 = vmatprep.subr.bf16.mxu0 0
        %2584 = vmatpush1.bf16.xpose.msra.mxu0 0
        %2585 = vmatprep.subr.bf16.mxu0 0
        %2586 = vmatpush1.bf16.xpose.msra.mxu0 0
        %2587 = vmatprep.subr.bf16.mxu0 0
        %2588 = vmatpush1.bf16.xpose.msra.mxu0 0
        %2589 = vmatprep.mubr.bf16.mxu0 0
        %2590 = vmatmul.mubr.bf16.gmra.mrb[0].mxu0 %v2494
        %v2591 = vpop.f32.mrb[0].mxu0
        %v2592 = vadd.f32 0.0, %v2591
        %v2593 = vpop.f32.mrb[0].mxu0
        %v2594 = vpop.f32.mrb[0].mxu0
        %v2595 = vpop.f32.mrb[0].mxu0
        %2596 = vdwg.mxu0
        %v2597 = vsel %vm2357, %v2552, -inf
        %2598 = vmax.xlane.f32.xlu0 %v2597
        %v2599 = vpop.xlane.xlu0 %2598
        %v2600 = vsel %vm2357, %v2592, -inf
        %2601 = vmax.xlane.f32.xlu0 %v2600
        %v2602 = vpop.xlane.xlu0 %2601
        %v2603 = vsub.f32 %v2552, %v2599
        %v2604 = vsub.f32 %v2592, %v2602
        %v2605 = vmul.f32 %v2603, 1.442695
        %v2606 = vpow.pop %v2605
        %v2607 = vmul.f32 %v2604, 1.442695
        %v2608 = vpow.pop %v2607
        %v2609 = vsel %vm2357, %v2606, 0.0
        %2610 = vadd.xlane.f32.xlu0 %v2609
        %v2611 = vpop.xlane.xlu0 %2610
        %v2612 = vsel %vm2357, %v2608, 0.0
        %2613 = vadd.xlane.f32.xlu0 %v2612
        %v2614 = vpop.xlane.xlu0 %2613
        %v2615 = vpack.c.bf16 %v2606, %v2606
        %v2616 = vpack.c.bf16 %v2608, %v2608
        %v2618 = vsel %vm2357, %v2615, 0
        %v2621 = vsel %vm2381, %v2515, 0
        %2623 = vmatprep.subr.bf16.mxu0 0
        %2624 = vmatpush1.bf16.msra.mxu0 %v2621
        %2625 = vmatprep.subr.bf16.mxu0 0
        %2626 = vmatpush1.bf16.msra.mxu0 0
        %2627 = vmatprep.subr.bf16.mxu0 0
        %2628 = vmatpush1.bf16.msra.mxu0 0
        %2629 = vmatprep.subr.bf16.mxu0 0
        %2630 = vmatpush1.bf16.msra.mxu0 0
        %2631 = vmatprep.subr.bf16.mxu0 0
        %2632 = vmatpush1.bf16.msra.mxu0 0
        %2633 = vmatprep.subr.bf16.mxu0 0
        %2634 = vmatpush1.bf16.msra.mxu0 0
        %2635 = vmatprep.subr.bf16.mxu0 0
        %2636 = vmatpush1.bf16.msra.mxu0 0
        %2637 = vmatprep.subr.bf16.mxu0 0
        %2638 = vmatpush1.bf16.msra.mxu0 0
        %2639 = vmatprep.subr.bf16.mxu0 0
        %2640 = vmatpush1.bf16.msra.mxu0 0
        %2641 = vmatprep.subr.bf16.mxu0 0
        %2642 = vmatpush1.bf16.msra.mxu0 0
        %2643 = vmatprep.subr.bf16.mxu0 0
        %2644 = vmatpush1.bf16.msra.mxu0 0
        %2645 = vmatprep.subr.bf16.mxu0 0
        %2646 = vmatpush1.bf16.msra.mxu0 0
        %2647 = vmatprep.subr.bf16.mxu0 0
        %2648 = vmatpush1.bf16.msra.mxu0 0
        %2649 = vmatprep.subr.bf16.mxu0 0
        %2650 = vmatpush1.bf16.msra.mxu0 0
        %2651 = vmatprep.subr.bf16.mxu0 0
        %2652 = vmatpush1.bf16.msra.mxu0 0
        %2653 = vmatprep.subr.bf16.mxu0 0
        %2654 = vmatpush1.bf16.msra.mxu0 0
        %2655 = vmatprep.mubr.bf16.mxu0 0
        %2656 = vmatmul.mubr.bf16.gmra.mrb[0].mxu0 %v2618
        %v2657 = vpop.f32.mrb[0].mxu0
        %v2658 = vadd.f32 0.0, %v2657
        %v2659 = vpop.f32.mrb[0].mxu0
        %v2660 = vpop.f32.mrb[0].mxu0
        %v2661 = vpop.f32.mrb[0].mxu0
        %2662 = vdwg.mxu0
        %v2664 = vsel %vm2357, %v2616, 0
        %v2667 = vsel %vm2381, %v2516, 0
        %2669 = vmatprep.subr.bf16.mxu0 0
        %2670 = vmatpush1.bf16.msra.mxu0 %v2667
        %2671 = vmatprep.subr.bf16.mxu0 0
        %2672 = vmatpush1.bf16.msra.mxu0 0
        %2673 = vmatprep.subr.bf16.mxu0 0
        %2674 = vmatpush1.bf16.msra.mxu0 0
        %2675 = vmatprep.subr.bf16.mxu0 0
        %2676 = vmatpush1.bf16.msra.mxu0 0
        %2677 = vmatprep.subr.bf16.mxu0 0
        %2678 = vmatpush1.bf16.msra.mxu0 0
        %2679 = vmatprep.subr.bf16.mxu0 0
        %2680 = vmatpush1.bf16.msra.mxu0 0
        %2681 = vmatprep.subr.bf16.mxu0 0
        %2682 = vmatpush1.bf16.msra.mxu0 0
        %2683 = vmatprep.subr.bf16.mxu0 0
        %2684 = vmatpush1.bf16.msra.mxu0 0
        %2685 = vmatprep.subr.bf16.mxu0 0
        %2686 = vmatpush1.bf16.msra.mxu0 0
        %2687 = vmatprep.subr.bf16.mxu0 0
        %2688 = vmatpush1.bf16.msra.mxu0 0
        %2689 = vmatprep.subr.bf16.mxu0 0
        %2690 = vmatpush1.bf16.msra.mxu0 0
        %2691 = vmatprep.subr.bf16.mxu0 0
        %2692 = vmatpush1.bf16.msra.mxu0 0
        %2693 = vmatprep.subr.bf16.mxu0 0
        %2694 = vmatpush1.bf16.msra.mxu0 0
        %2695 = vmatprep.subr.bf16.mxu0 0
        %2696 = vmatpush1.bf16.msra.mxu0 0
        %2697 = vmatprep.subr.bf16.mxu0 0
        %2698 = vmatpush1.bf16.msra.mxu0 0
        %2699 = vmatprep.subr.bf16.mxu0 0
        %2700 = vmatpush1.bf16.msra.mxu0 0
        %2701 = vmatprep.mubr.bf16.mxu0 0
        %2702 = vmatmul.mubr.bf16.gmra.mrb[0].mxu0 %v2664
        %v2703 = vpop.f32.mrb[0].mxu0
        %v2704 = vadd.f32 0.0, %v2703
        %v2705 = vpop.f32.mrb[0].mxu0
        %v2706 = vpop.f32.mrb[0].mxu0
        %v2707 = vpop.f32.mrb[0].mxu0
        %2708 = vdwg.mxu0
        %v2709 = vrcp.pop %v2611
        %v2710 = vrcp.pop %v2614
        %v2711 = vmul.f32 %v2658, %v2709
        %v2712 = vmul.f32 %v2704, %v2710
        %v2713 = vpack.c.bf16 %v2474, %v2473
        %v2714 = vpack.c.bf16 %v2712, %v2711
        %v2715 = vld [vmem:[%s1075] sm:$0xff]
        %v2716 = vld [vmem:[%s1075 + $0x8] sm:$0xff]
        %v2717 = vld [vmem:[%s1075 + $0x10] sm:$0xff]
        %v2718 = vld [vmem:[%s1075 + $0x18] sm:$0xff]
        %v2719 = vld [vmem:[%s1075 + $0x20] sm:$0xff]
        %v2720 = vld [vmem:[%s1075 + $0x28] sm:$0xff]
        %v2721 = vld [vmem:[%s1075 + $0x30] sm:$0xff]
        %v2722 = vld [vmem:[%s1075 + $0x38] sm:$0xff]
        %v2723 = vld [vmem:[%s1075 + $0x40] sm:$0xff]
        %v2724 = vld [vmem:[%s1075 + $0x48] sm:$0xff]
        %v2725 = vld [vmem:[%s1075 + $0x50] sm:$0xff]
        %v2726 = vld [vmem:[%s1075 + $0x58] sm:$0xff]
        %v2727 = vld [vmem:[%s1075 + $0x60] sm:$0xff]
        %v2728 = vld [vmem:[%s1075 + $0x68] sm:$0xff]
        %v2729 = vld [vmem:[%s1075 + $0x70] sm:$0xff]
        %v2730 = vld [vmem:[%s1075 + $0x78] sm:$0xff]
        %v2731 = vld [vmem:[%s1075 + $0x80] sm:$0xff]
        %v2732 = vld [vmem:[%s1075 + $0x88] sm:$0xff]
        %v2733 = vld [vmem:[%s1075 + $0x90] sm:$0xff]
        %v2734 = vld [vmem:[%s1075 + $0x98] sm:$0xff]
        %v2735 = vld [vmem:[%s1075 + $0xa0] sm:$0xff]
        %v2736 = vld [vmem:[%s1075 + $0xa8] sm:$0xff]
        %v2737 = vld [vmem:[%s1075 + $0xb0] sm:$0xff]
        %v2738 = vld [vmem:[%s1075 + $0xb8] sm:$0xff]
        %v2739 = vld [vmem:[%s1075 + $0xc0] sm:$0xff]
        %v2740 = vld [vmem:[%s1075 + $0xc8] sm:$0xff]
        %v2741 = vld [vmem:[%s1075 + $0xd0] sm:$0xff]
        %v2742 = vld [vmem:[%s1075 + $0xd8] sm:$0xff]
        %v2743 = vld [vmem:[%s1075 + $0xe0] sm:$0xff]
        %v2744 = vld [vmem:[%s1075 + $0xe8] sm:$0xff]
        %v2745 = vld [vmem:[%s1075 + $0xf0] sm:$0xff]
        %v2746 = vld [vmem:[%s1075 + $0xf8] sm:$0xff]
        %v2747 = vld [vmem:[%s1084] sm:$0x3]
        %v2749 = vlaneseq
        %v2750 = vshrl.u32 %v2749, 7
        %v2751 = vsub.s32 0, %v2750
        %v2752 = vrot.slane %v2747, %v2751
        %v2753 = vlaneseq
        %v2754 = vshrl.u32 %v2753, 7
        %v2755 = vsub.s32 1, %v2754
        %v2756 = vrot.slane %v2747, %v2755
        %v2791 = vunpack.c.l.b16 %v2715
        %v2792 = vunpack.c.h.b16 %v2715
        %v2793 = vunpack.c.l.b16 %v2716
        %v2794 = vunpack.c.h.b16 %v2716
        %v2795 = vunpack.c.l.b16 %v2717
        %v2796 = vunpack.c.h.b16 %v2717
        %v2797 = vunpack.c.l.b16 %v2718
        %v2798 = vunpack.c.h.b16 %v2718
        %v2799 = vunpack.c.l.b16 %v2719
        %v2800 = vunpack.c.h.b16 %v2719
        %v2801 = vunpack.c.l.b16 %v2720
        %v2802 = vunpack.c.h.b16 %v2720
        %v2803 = vunpack.c.l.b16 %v2721
        %v2804 = vunpack.c.h.b16 %v2721
        %v2805 = vunpack.c.l.b16 %v2722
        %v2806 = vunpack.c.h.b16 %v2722
        %v2807 = vunpack.c.l.b16 %v2723
        %v2808 = vunpack.c.h.b16 %v2723
        %v2809 = vunpack.c.l.b16 %v2724
        %v2810 = vunpack.c.h.b16 %v2724
        %v2811 = vunpack.c.l.b16 %v2725
        %v2812 = vunpack.c.h.b16 %v2725
        %v2813 = vunpack.c.l.b16 %v2726
        %v2814 = vunpack.c.h.b16 %v2726
        %v2815 = vunpack.c.l.b16 %v2727
        %v2816 = vunpack.c.h.b16 %v2727
        %v2817 = vunpack.c.l.b16 %v2728
        %v2818 = vunpack.c.h.b16 %v2728
        %v2819 = vunpack.c.l.b16 %v2729
        %v2820 = vunpack.c.h.b16 %v2729
        %v2821 = vunpack.c.l.b16 %v2730
        %v2822 = vunpack.c.h.b16 %v2730
        %v2823 = vunpack.c.l.b16 %v2731
        %v2824 = vunpack.c.h.b16 %v2731
        %v2825 = vunpack.c.l.b16 %v2732
        %v2826 = vunpack.c.h.b16 %v2732
        %v2827 = vunpack.c.l.b16 %v2733
        %v2828 = vunpack.c.h.b16 %v2733
        %v2829 = vunpack.c.l.b16 %v2734
        %v2830 = vunpack.c.h.b16 %v2734
        %v2831 = vunpack.c.l.b16 %v2735
        %v2832 = vunpack.c.h.b16 %v2735
        %v2833 = vunpack.c.l.b16 %v2736
        %v2834 = vunpack.c.h.b16 %v2736
        %v2835 = vunpack.c.l.b16 %v2737
        %v2836 = vunpack.c.h.b16 %v2737
        %v2837 = vunpack.c.l.b16 %v2738
        %v2838 = vunpack.c.h.b16 %v2738
        %v2839 = vunpack.c.l.b16 %v2739
        %v2840 = vunpack.c.h.b16 %v2739
        %v2841 = vunpack.c.l.b16 %v2740
        %v2842 = vunpack.c.h.b16 %v2740
        %v2843 = vunpack.c.l.b16 %v2741
        %v2844 = vunpack.c.h.b16 %v2741
        %v2845 = vunpack.c.l.b16 %v2742
        %v2846 = vunpack.c.h.b16 %v2742
        %v2847 = vunpack.c.l.b16 %v2743
        %v2848 = vunpack.c.h.b16 %v2743
        %v2849 = vunpack.c.l.b16 %v2744
        %v2850 = vunpack.c.h.b16 %v2744
        %v2851 = vunpack.c.l.b16 %v2745
        %v2852 = vunpack.c.h.b16 %v2745
        %v2853 = vunpack.c.l.b16 %v2746
        %v2854 = vunpack.c.h.b16 %v2746
        %v2855 = vpack.c.b16 %v2793, %v2791
        %v2856 = vpack.c.b16 %v2794, %v2792
        %v2857 = vpack.c.b16 %v2797, %v2795
        %v2858 = vpack.c.b16 %v2798, %v2796
        %v2859 = vpack.c.b16 %v2801, %v2799
        %v2860 = vpack.c.b16 %v2802, %v2800
        %v2861 = vpack.c.b16 %v2805, %v2803
        %v2862 = vpack.c.b16 %v2806, %v2804
        %v2863 = vpack.c.b16 %v2809, %v2807
        %v2864 = vpack.c.b16 %v2810, %v2808
        %v2865 = vpack.c.b16 %v2813, %v2811
        %v2866 = vpack.c.b16 %v2814, %v2812
        %v2867 = vpack.c.b16 %v2817, %v2815
        %v2868 = vpack.c.b16 %v2818, %v2816
        %v2869 = vpack.c.b16 %v2821, %v2819
        %v2870 = vpack.c.b16 %v2822, %v2820
        %v2871 = vpack.c.b16 %v2825, %v2823
        %v2872 = vpack.c.b16 %v2826, %v2824
        %v2873 = vpack.c.b16 %v2829, %v2827
        %v2874 = vpack.c.b16 %v2830, %v2828
        %v2875 = vpack.c.b16 %v2833, %v2831
        %v2876 = vpack.c.b16 %v2834, %v2832
        %v2877 = vpack.c.b16 %v2837, %v2835
        %v2878 = vpack.c.b16 %v2838, %v2836
        %v2879 = vpack.c.b16 %v2841, %v2839
        %v2880 = vpack.c.b16 %v2842, %v2840
        %v2881 = vpack.c.b16 %v2845, %v2843
        %v2882 = vpack.c.b16 %v2846, %v2844
        %v2883 = vpack.c.b16 %v2849, %v2847
        %v2884 = vpack.c.b16 %v2850, %v2848
        %v2885 = vpack.c.b16 %v2853, %v2851
        %v2886 = vpack.c.b16 %v2854, %v2852
        %2919 = vmatprep.subr.bf16.mxu0 %v2856
        %2920 = vmatpush1.bf16.msra.mxu0 %v2855
        %2921 = vmatprep.subr.bf16.mxu0 %v2858
        %2922 = vmatpush1.bf16.msra.mxu0 %v2857
        %2923 = vmatprep.subr.bf16.mxu0 %v2860
        %2924 = vmatpush1.bf16.msra.mxu0 %v2859
        %2925 = vmatprep.subr.bf16.mxu0 %v2862
        %2926 = vmatpush1.bf16.msra.mxu0 %v2861
        %2927 = vmatprep.subr.bf16.mxu0 %v2864
        %2928 = vmatpush1.bf16.msra.mxu0 %v2863
        %2929 = vmatprep.subr.bf16.mxu0 %v2866
        %2930 = vmatpush1.bf16.msra.mxu0 %v2865
        %2931 = vmatprep.subr.bf16.mxu0 %v2868
        %2932 = vmatpush1.bf16.msra.mxu0 %v2867
        %2933 = vmatprep.subr.bf16.mxu0 %v2870
        %2934 = vmatpush1.bf16.msra.mxu0 %v2869
        %2935 = vmatprep.subr.bf16.mxu0 %v2872
        %2936 = vmatpush1.bf16.msra.mxu0 %v2871
        %2937 = vmatprep.subr.bf16.mxu0 %v2874
        %2938 = vmatpush1.bf16.msra.mxu0 %v2873
        %2939 = vmatprep.subr.bf16.mxu0 %v2876
        %2940 = vmatpush1.bf16.msra.mxu0 %v2875
        %2941 = vmatprep.subr.bf16.mxu0 %v2878
        %2942 = vmatpush1.bf16.msra.mxu0 %v2877
        %2943 = vmatprep.subr.bf16.mxu0 %v2880
        %2944 = vmatpush1.bf16.msra.mxu0 %v2879
        %2945 = vmatprep.subr.bf16.mxu0 %v2882
        %2946 = vmatpush1.bf16.msra.mxu0 %v2881
        %2947 = vmatprep.subr.bf16.mxu0 %v2884
        %2948 = vmatpush1.bf16.msra.mxu0 %v2883
        %2949 = vmatprep.subr.bf16.mxu0 %v2886
        %2950 = vmatpush1.bf16.msra.mxu0 %v2885
        %2951 = vmatprep.mubr.bf16.mxu0 %v2714
        %2952 = vmatmul.mubr.bf16.gmra.mrb[0].mxu0 %v2713
        %v2953 = vpop.f32.mrb[0].mxu0
        %v2954 = vadd.f32 %v2752, %v2953
        %v2955 = vpop.f32.mrb[0].mxu0
        %v2956 = vadd.f32 %v2756, %v2955
        %v2957 = vpop.f32.mrb[0].mxu0
        %v2958 = vadd.f32 %v2752, %v2957
        %v2959 = vpop.f32.mrb[0].mxu0
        %v2960 = vadd.f32 %v2756, %v2959
        %2961 = vdwg.mxu0
        %v2962 = vadd.f32 %v1424, %v2954
        %v2963 = vadd.f32 %v1425, %v2956
        %v2964 = vadd.f32 %v1426, %v2958
        %v2965 = vadd.f32 %v1427, %v2960
        %v2966 = vld [vmem:[%s1093] sm:$0x3]
        %v2967 = vld [vmem:[%s1102] sm:$0x3]
        %v2968 = vadd.f32 %v2962, %v2963
        %2969 = vadd.xlane.f32.xlu0 %v2968
        %v2970 = vpop.xlane.xlu0 %2969
        %v2971 = vadd.f32 %v2964, %v2965
        %2972 = vadd.xlane.f32.xlu0 %v2971
        %v2973 = vpop.xlane.xlu0 %2972
        %v2974 = vmul.f32 %v2970, %v1436
        %v2975 = vmul.f32 %v2973, %v1436
        %v2976 = vsub.f32 %v2962, %v2974
        %v2977 = vsub.f32 %v2963, %v2974
        %v2978 = vsub.f32 %v2964, %v2975
        %v2979 = vsub.f32 %v2965, %v2975
        %v2980 = vmul.f32 %v2976, %v2976
        %v2981 = vmul.f32 %v2977, %v2977
        %v2982 = vmul.f32 %v2978, %v2978
        %v2983 = vmul.f32 %v2979, %v2979
        %v2984 = vadd.f32 %v2980, %v2981
        %2985 = vadd.xlane.f32.xlu0 %v2984
        %v2986 = vpop.xlane.xlu0 %2985
        %v2987 = vadd.f32 %v2982, %v2983
        %2988 = vadd.xlane.f32.xlu0 %v2987
        %v2989 = vpop.xlane.xlu0 %2988
        %v2990 = vmul.f32 %v2986, %v1436
        %v2991 = vmul.f32 %v2989, %v1436
        %v2992 = vadd.f32 %v2990, 1e-05
        %v2993 = vadd.f32 %v2991, 1e-05
        %v2994 = vrsqrt.pop %v2992
        %v2995 = vrsqrt.pop %v2993
        %v2996 = vmul.f32 %v2976, %v2994
        %v2997 = vmul.f32 %v2977, %v2994
        %v2998 = vmul.f32 %v2978, %v2995
        %v2999 = vmul.f32 %v2979, %v2995
        %v3001 = vlaneseq
        %v3002 = vshrl.u32 %v3001, 7
        %v3003 = vsub.s32 0, %v3002
        %v3004 = vrot.slane %v2966, %v3003
        %v3005 = vlaneseq
        %v3006 = vshrl.u32 %v3005, 7
        %v3007 = vsub.s32 1, %v3006
        %v3008 = vrot.slane %v2966, %v3007
        %v3011 = vmul.f32 %v2996, %v3004
        %v3012 = vmul.f32 %v2997, %v3008
        %v3013 = vmul.f32 %v2998, %v3004
        %v3014 = vmul.f32 %v2999, %v3008
        %v3016 = vlaneseq
        %v3017 = vshrl.u32 %v3016, 7
        %v3018 = vsub.s32 0, %v3017
        %v3019 = vrot.slane %v2967, %v3018
        %v3020 = vlaneseq
        %v3021 = vshrl.u32 %v3020, 7
        %v3022 = vsub.s32 1, %v3021
        %v3023 = vrot.slane %v2967, %v3022
        %v3026 = vadd.f32 %v3011, %v3019
        %v3027 = vadd.f32 %v3012, %v3023
        %v3028 = vadd.f32 %v3013, %v3019
        %v3029 = vadd.f32 %v3014, %v3023
        %v3030 = vpack.c.bf16 %v3028, %v3026
        %v3031 = vpack.c.bf16 %v3029, %v3027
        %v3032 = vld [vmem:[%s1111] sm:$0xff]
        %v3033 = vld [vmem:[%s1111 + $0x8] sm:$0xff]
        %v3034 = vld [vmem:[%s1111 + $0x10] sm:$0xff]
        %v3035 = vld [vmem:[%s1111 + $0x18] sm:$0xff]
        %v3036 = vld [vmem:[%s1111 + $0x20] sm:$0xff]
        %v3037 = vld [vmem:[%s1111 + $0x28] sm:$0xff]
        %v3038 = vld [vmem:[%s1111 + $0x30] sm:$0xff]
        %v3039 = vld [vmem:[%s1111 + $0x38] sm:$0xff]
        %v3040 = vld [vmem:[%s1111 + $0x40] sm:$0xff]
        %v3041 = vld [vmem:[%s1111 + $0x48] sm:$0xff]
        %v3042 = vld [vmem:[%s1111 + $0x50] sm:$0xff]
        %v3043 = vld [vmem:[%s1111 + $0x58] sm:$0xff]
        %v3044 = vld [vmem:[%s1111 + $0x60] sm:$0xff]
        %v3045 = vld [vmem:[%s1111 + $0x68] sm:$0xff]
        %v3046 = vld [vmem:[%s1111 + $0x70] sm:$0xff]
        %v3047 = vld [vmem:[%s1111 + $0x78] sm:$0xff]
        %v3048 = vld [vmem:[%s1111 + $0x80] sm:$0xff]
        %v3049 = vld [vmem:[%s1111 + $0x88] sm:$0xff]
        %v3050 = vld [vmem:[%s1111 + $0x90] sm:$0xff]
        %v3051 = vld [vmem:[%s1111 + $0x98] sm:$0xff]
        %v3052 = vld [vmem:[%s1111 + $0xa0] sm:$0xff]
        %v3053 = vld [vmem:[%s1111 + $0xa8] sm:$0xff]
        %v3054 = vld [vmem:[%s1111 + $0xb0] sm:$0xff]
        %v3055 = vld [vmem:[%s1111 + $0xb8] sm:$0xff]
        %v3056 = vld [vmem:[%s1111 + $0xc0] sm:$0xff]
        %v3057 = vld [vmem:[%s1111 + $0xc8] sm:$0xff]
        %v3058 = vld [vmem:[%s1111 + $0xd0] sm:$0xff]
        %v3059 = vld [vmem:[%s1111 + $0xd8] sm:$0xff]
        %v3060 = vld [vmem:[%s1111 + $0xe0] sm:$0xff]
        %v3061 = vld [vmem:[%s1111 + $0xe8] sm:$0xff]
        %v3062 = vld [vmem:[%s1111 + $0xf0] sm:$0xff]
        %v3063 = vld [vmem:[%s1111 + $0xf8] sm:$0xff]
        %v3064 = vld [vmem:[%s1111 + $0x100] sm:$0xff]
        %v3065 = vld [vmem:[%s1111 + $0x108] sm:$0xff]
        %v3066 = vld [vmem:[%s1111 + $0x110] sm:$0xff]
        %v3067 = vld [vmem:[%s1111 + $0x118] sm:$0xff]
        %v3068 = vld [vmem:[%s1111 + $0x120] sm:$0xff]
        %v3069 = vld [vmem:[%s1111 + $0x128] sm:$0xff]
        %v3070 = vld [vmem:[%s1111 + $0x130] sm:$0xff]
        %v3071 = vld [vmem:[%s1111 + $0x138] sm:$0xff]
        %v3072 = vld [vmem:[%s1111 + $0x140] sm:$0xff]
        %v3073 = vld [vmem:[%s1111 + $0x148] sm:$0xff]
        %v3074 = vld [vmem:[%s1111 + $0x150] sm:$0xff]
        %v3075 = vld [vmem:[%s1111 + $0x158] sm:$0xff]
        %v3076 = vld [vmem:[%s1111 + $0x160] sm:$0xff]
        %v3077 = vld [vmem:[%s1111 + $0x168] sm:$0xff]
        %v3078 = vld [vmem:[%s1111 + $0x170] sm:$0xff]
        %v3079 = vld [vmem:[%s1111 + $0x178] sm:$0xff]
        %v3080 = vld [vmem:[%s1111 + $0x180] sm:$0xff]
        %v3081 = vld [vmem:[%s1111 + $0x188] sm:$0xff]
        %v3082 = vld [vmem:[%s1111 + $0x190] sm:$0xff]
        %v3083 = vld [vmem:[%s1111 + $0x198] sm:$0xff]
        %v3084 = vld [vmem:[%s1111 + $0x1a0] sm:$0xff]
        %v3085 = vld [vmem:[%s1111 + $0x1a8] sm:$0xff]
        %v3086 = vld [vmem:[%s1111 + $0x1b0] sm:$0xff]
        %v3087 = vld [vmem:[%s1111 + $0x1b8] sm:$0xff]
        %v3088 = vld [vmem:[%s1111 + $0x1c0] sm:$0xff]
        %v3089 = vld [vmem:[%s1111 + $0x1c8] sm:$0xff]
        %v3090 = vld [vmem:[%s1111 + $0x1d0] sm:$0xff]
        %v3091 = vld [vmem:[%s1111 + $0x1d8] sm:$0xff]
        %v3092 = vld [vmem:[%s1111 + $0x1e0] sm:$0xff]
        %v3093 = vld [vmem:[%s1111 + $0x1e8] sm:$0xff]
        %v3094 = vld [vmem:[%s1111 + $0x1f0] sm:$0xff]
        %v3095 = vld [vmem:[%s1111 + $0x1f8] sm:$0xff]
        %v3096 = vld [vmem:[%s1120] sm:$0xf]
        %v3098 = vlaneseq
        %v3099 = vshrl.u32 %v3098, 7
        %v3100 = vsub.s32 0, %v3099
        %v3101 = vrot.slane %v3096, %v3100
        %v3102 = vlaneseq
        %v3103 = vshrl.u32 %v3102, 7
        %v3104 = vsub.s32 1, %v3103
        %v3105 = vrot.slane %v3096, %v3104
        %v3106 = vlaneseq
        %v3107 = vshrl.u32 %v3106, 7
        %v3108 = vsub.s32 2, %v3107
        %v3109 = vrot.slane %v3096, %v3108
        %v3110 = vlaneseq
        %v3111 = vshrl.u32 %v3110, 7
        %v3112 = vsub.s32 3, %v3111
        %v3113 = vrot.slane %v3096, %v3112
        %v3182 = vunpack.c.l.b16 %v3032
        %v3183 = vunpack.c.h.b16 %v3032
        %v3184 = vunpack.c.l.b16 %v3033
        %v3185 = vunpack.c.h.b16 %v3033
        %v3186 = vunpack.c.l.b16 %v3034
        %v3187 = vunpack.c.h.b16 %v3034
        %v3188 = vunpack.c.l.b16 %v3035
        %v3189 = vunpack.c.h.b16 %v3035
        %v3190 = vunpack.c.l.b16 %v3036
        %v3191 = vunpack.c.h.b16 %v3036
        %v3192 = vunpack.c.l.b16 %v3037
        %v3193 = vunpack.c.h.b16 %v3037
        %v3194 = vunpack.c.l.b16 %v3038
        %v3195 = vunpack.c.h.b16 %v3038
        %v3196 = vunpack.c.l.b16 %v3039
        %v3197 = vunpack.c.h.b16 %v3039
        %v3198 = vunpack.c.l.b16 %v3040
        %v3199 = vunpack.c.h.b16 %v3040
        %v3200 = vunpack.c.l.b16 %v3041
        %v3201 = vunpack.c.h.b16 %v3041
        %v3202 = vunpack.c.l.b16 %v3042
        %v3203 = vunpack.c.h.b16 %v3042
        %v3204 = vunpack.c.l.b16 %v3043
        %v3205 = vunpack.c.h.b16 %v3043
        %v3206 = vunpack.c.l.b16 %v3044
        %v3207 = vunpack.c.h.b16 %v3044
        %v3208 = vunpack.c.l.b16 %v3045
        %v3209 = vunpack.c.h.b16 %v3045
        %v3210 = vunpack.c.l.b16 %v3046
        %v3211 = vunpack.c.h.b16 %v3046
        %v3212 = vunpack.c.l.b16 %v3047
        %v3213 = vunpack.c.h.b16 %v3047
        %v3214 = vunpack.c.l.b16 %v3048
        %v3215 = vunpack.c.h.b16 %v3048
        %v3216 = vunpack.c.l.b16 %v3049
        %v3217 = vunpack.c.h.b16 %v3049
        %v3218 = vunpack.c.l.b16 %v3050
        %v3219 = vunpack.c.h.b16 %v3050
        %v3220 = vunpack.c.l.b16 %v3051
        %v3221 = vunpack.c.h.b16 %v3051
        %v3222 = vunpack.c.l.b16 %v3052
        %v3223 = vunpack.c.h.b16 %v3052
        %v3224 = vunpack.c.l.b16 %v3053
        %v3225 = vunpack.c.h.b16 %v3053
        %v3226 = vunpack.c.l.b16 %v3054
        %v3227 = vunpack.c.h.b16 %v3054
        %v3228 = vunpack.c.l.b16 %v3055
        %v3229 = vunpack.c.h.b16 %v3055
        %v3230 = vunpack.c.l.b16 %v3056
        %v3231 = vunpack.c.h.b16 %v3056
        %v3232 = vunpack.c.l.b16 %v3057
        %v3233 = vunpack.c.h.b16 %v3057
        %v3234 = vunpack.c.l.b16 %v3058
        %v3235 = vunpack.c.h.b16 %v3058
        %v3236 = vunpack.c.l.b16 %v3059
        %v3237 = vunpack.c.h.b16 %v3059
        %v3238 = vunpack.c.l.b16 %v3060
        %v3239 = vunpack.c.h.b16 %v3060
        %v3240 = vunpack.c.l.b16 %v3061
        %v3241 = vunpack.c.h.b16 %v3061
        %v3242 = vunpack.c.l.b16 %v3062
        %v3243 = vunpack.c.h.b16 %v3062
        %v3244 = vunpack.c.l.b16 %v3063
        %v3245 = vunpack.c.h.b16 %v3063
        %v3246 = vunpack.c.l.b16 %v3064
        %v3247 = vunpack.c.h.b16 %v3064
        %v3248 = vunpack.c.l.b16 %v3065
        %v3249 = vunpack.c.h.b16 %v3065
        %v3250 = vunpack.c.l.b16 %v3066
        %v3251 = vunpack.c.h.b16 %v3066
        %v3252 = vunpack.c.l.b16 %v3067
        %v3253 = vunpack.c.h.b16 %v3067
        %v3254 = vunpack.c.l.b16 %v3068
        %v3255 = vunpack.c.h.b16 %v3068
        %v3256 = vunpack.c.l.b16 %v3069
        %v3257 = vunpack.c.h.b16 %v3069
        %v3258 = vunpack.c.l.b16 %v3070
        %v3259 = vunpack.c.h.b16 %v3070
        %v3260 = vunpack.c.l.b16 %v3071
        %v3261 = vunpack.c.h.b16 %v3071
        %v3262 = vunpack.c.l.b16 %v3072
        %v3263 = vunpack.c.h.b16 %v3072
        %v3264 = vunpack.c.l.b16 %v3073
        %v3265 = vunpack.c.h.b16 %v3073
        %v3266 = vunpack.c.l.b16 %v3074
        %v3267 = vunpack.c.h.b16 %v3074
        %v3268 = vunpack.c.l.b16 %v3075
        %v3269 = vunpack.c.h.b16 %v3075
        %v3270 = vunpack.c.l.b16 %v3076
        %v3271 = vunpack.c.h.b16 %v3076
        %v3272 = vunpack.c.l.b16 %v3077
        %v3273 = vunpack.c.h.b16 %v3077
        %v3274 = vunpack.c.l.b16 %v3078
        %v3275 = vunpack.c.h.b16 %v3078
        %v3276 = vunpack.c.l.b16 %v3079
        %v3277 = vunpack.c.h.b16 %v3079
        %v3278 = vunpack.c.l.b16 %v3080
        %v3279 = vunpack.c.h.b16 %v3080
        %v3280 = vunpack.c.l.b16 %v3081
        %v3281 = vunpack.c.h.b16 %v3081
        %v3282 = vunpack.c.l.b16 %v3082
        %v3283 = vunpack.c.h.b16 %v3082
        %v3284 = vunpack.c.l.b16 %v3083
        %v3285 = vunpack.c.h.b16 %v3083
        %v3286 = vunpack.c.l.b16 %v3084
        %v3287 = vunpack.c.h.b16 %v3084
        %v3288 = vunpack.c.l.b16 %v3085
        %v3289 = vunpack.c.h.b16 %v3085
        %v3290 = vunpack.c.l.b16 %v3086
        %v3291 = vunpack.c.h.b16 %v3086
        %v3292 = vunpack.c.l.b16 %v3087
        %v3293 = vunpack.c.h.b16 %v3087
        %v3294 = vunpack.c.l.b16 %v3088
        %v3295 = vunpack.c.h.b16 %v3088
        %v3296 = vunpack.c.l.b16 %v3089
        %v3297 = vunpack.c.h.b16 %v3089
        %v3298 = vunpack.c.l.b16 %v3090
        %v3299 = vunpack.c.h.b16 %v3090
        %v3300 = vunpack.c.l.b16 %v3091
        %v3301 = vunpack.c.h.b16 %v3091
        %v3302 = vunpack.c.l.b16 %v3092
        %v3303 = vunpack.c.h.b16 %v3092
        %v3304 = vunpack.c.l.b16 %v3093
        %v3305 = vunpack.c.h.b16 %v3093
        %v3306 = vunpack.c.l.b16 %v3094
        %v3307 = vunpack.c.h.b16 %v3094
        %v3308 = vunpack.c.l.b16 %v3095
        %v3309 = vunpack.c.h.b16 %v3095
        %v3310 = vpack.c.b16 %v3186, %v3182
        %v3311 = vpack.c.b16 %v3187, %v3183
        %v3312 = vpack.c.b16 %v3188, %v3184
        %v3313 = vpack.c.b16 %v3189, %v3185
        %v3314 = vpack.c.b16 %v3194, %v3190
        %v3315 = vpack.c.b16 %v3195, %v3191
        %v3316 = vpack.c.b16 %v3196, %v3192
        %v3317 = vpack.c.b16 %v3197, %v3193
        %v3318 = vpack.c.b16 %v3202, %v3198
        %v3319 = vpack.c.b16 %v3203, %v3199
        %v3320 = vpack.c.b16 %v3204, %v3200
        %v3321 = vpack.c.b16 %v3205, %v3201
        %v3322 = vpack.c.b16 %v3210, %v3206
        %v3323 = vpack.c.b16 %v3211, %v3207
        %v3324 = vpack.c.b16 %v3212, %v3208
        %v3325 = vpack.c.b16 %v3213, %v3209
        %v3326 = vpack.c.b16 %v3218, %v3214
        %v3327 = vpack.c.b16 %v3219, %v3215
        %v3328 = vpack.c.b16 %v3220, %v3216
        %v3329 = vpack.c.b16 %v3221, %v3217
        %v3330 = vpack.c.b16 %v3226, %v3222
        %v3331 = vpack.c.b16 %v3227, %v3223
        %v3332 = vpack.c.b16 %v3228, %v3224
        %v3333 = vpack.c.b16 %v3229, %v3225
        %v3334 = vpack.c.b16 %v3234, %v3230
        %v3335 = vpack.c.b16 %v3235, %v3231
        %v3336 = vpack.c.b16 %v3236, %v3232
        %v3337 = vpack.c.b16 %v3237, %v3233
        %v3338 = vpack.c.b16 %v3242, %v3238
        %v3339 = vpack.c.b16 %v3243, %v3239
        %v3340 = vpack.c.b16 %v3244, %v3240
        %v3341 = vpack.c.b16 %v3245, %v3241
        %v3342 = vpack.c.b16 %v3250, %v3246
        %v3343 = vpack.c.b16 %v3251, %v3247
        %v3344 = vpack.c.b16 %v3252, %v3248
        %v3345 = vpack.c.b16 %v3253, %v3249
        %v3346 = vpack.c.b16 %v3258, %v3254
        %v3347 = vpack.c.b16 %v3259, %v3255
        %v3348 = vpack.c.b16 %v3260, %v3256
        %v3349 = vpack.c.b16 %v3261, %v3257
        %v3350 = vpack.c.b16 %v3266, %v3262
        %v3351 = vpack.c.b16 %v3267, %v3263
        %v3352 = vpack.c.b16 %v3268, %v3264
        %v3353 = vpack.c.b16 %v3269, %v3265
        %v3354 = vpack.c.b16 %v3274, %v3270
        %v3355 = vpack.c.b16 %v3275, %v3271
        %v3356 = vpack.c.b16 %v3276, %v3272
        %v3357 = vpack.c.b16 %v3277, %v3273
        %v3358 = vpack.c.b16 %v3282, %v3278
        %v3359 = vpack.c.b16 %v3283, %v3279
        %v3360 = vpack.c.b16 %v3284, %v3280
        %v3361 = vpack.c.b16 %v3285, %v3281
        %v3362 = vpack.c.b16 %v3290, %v3286
        %v3363 = vpack.c.b16 %v3291, %v3287
        %v3364 = vpack.c.b16 %v3292, %v3288
        %v3365 = vpack.c.b16 %v3293, %v3289
        %v3366 = vpack.c.b16 %v3298, %v3294
        %v3367 = vpack.c.b16 %v3299, %v3295
        %v3368 = vpack.c.b16 %v3300, %v3296
        %v3369 = vpack.c.b16 %v3301, %v3297
        %v3370 = vpack.c.b16 %v3306, %v3302
        %v3371 = vpack.c.b16 %v3307, %v3303
        %v3372 = vpack.c.b16 %v3308, %v3304
        %v3373 = vpack.c.b16 %v3309, %v3305
        %3438 = vmatprep.subr.bf16.mxu0 %v3311
        %3439 = vmatpush1.bf16.msra.mxu0 %v3310
        %3440 = vmatprep.subr.bf16.mxu0 %v3315
        %3441 = vmatpush1.bf16.msra.mxu0 %v3314
        %3442 = vmatprep.subr.bf16.mxu0 %v3319
        %3443 = vmatpush1.bf16.msra.mxu0 %v3318
        %3444 = vmatprep.subr.bf16.mxu0 %v3323
        %3445 = vmatpush1.bf16.msra.mxu0 %v3322
        %3446 = vmatprep.subr.bf16.mxu0 %v3327
        %3447 = vmatpush1.bf16.msra.mxu0 %v3326
        %3448 = vmatprep.subr.bf16.mxu0 %v3331
        %3449 = vmatpush1.bf16.msra.mxu0 %v3330
        %3450 = vmatprep.subr.bf16.mxu0 %v3335
        %3451 = vmatpush1.bf16.msra.mxu0 %v3334
        %3452 = vmatprep.subr.bf16.mxu0 %v3339
        %3453 = vmatpush1.bf16.msra.mxu0 %v3338
        %3454 = vmatprep.subr.bf16.mxu0 %v3343
        %3455 = vmatpush1.bf16.msra.mxu0 %v3342
        %3456 = vmatprep.subr.bf16.mxu0 %v3347
        %3457 = vmatpush1.bf16.msra.mxu0 %v3346
        %3458 = vmatprep.subr.bf16.mxu0 %v3351
        %3459 = vmatpush1.bf16.msra.mxu0 %v3350
        %3460 = vmatprep.subr.bf16.mxu0 %v3355
        %3461 = vmatpush1.bf16.msra.mxu0 %v3354
        %3462 = vmatprep.subr.bf16.mxu0 %v3359
        %3463 = vmatpush1.bf16.msra.mxu0 %v3358
        %3464 = vmatprep.subr.bf16.mxu0 %v3363
        %3465 = vmatpush1.bf16.msra.mxu0 %v3362
        %3466 = vmatprep.subr.bf16.mxu0 %v3367
        %3467 = vmatpush1.bf16.msra.mxu0 %v3366
        %3468 = vmatprep.subr.bf16.mxu0 %v3371
        %3469 = vmatpush1.bf16.msra.mxu0 %v3370
        %3470 = vmatprep.mubr.bf16.mxu0 %v3031
        %3471 = vmatmul.mubr.bf16.gmra.mrb[0].mxu0 %v3030
        %v3472 = vpop.f32.mrb[0].mxu0
        %v3473 = vadd.f32 %v3101, %v3472
        %v3474 = vpop.f32.mrb[0].mxu0
        %v3475 = vadd.f32 %v3105, %v3474
        %v3476 = vpop.f32.mrb[0].mxu0
        %v3477 = vadd.f32 %v3101, %v3476
        %v3478 = vpop.f32.mrb[0].mxu0
        %v3479 = vadd.f32 %v3105, %v3478
        %3480 = vdwg.mxu0
        %3481 = vmatprep.subr.bf16.mxu0 %v3313
        %3482 = vmatpush1.bf16.msra.mxu0 %v3312
        %3483 = vmatprep.subr.bf16.mxu0 %v3317
        %3484 = vmatpush1.bf16.msra.mxu0 %v3316
        %3485 = vmatprep.subr.bf16.mxu0 %v3321
        %3486 = vmatpush1.bf16.msra.mxu0 %v3320
        %3487 = vmatprep.subr.bf16.mxu0 %v3325
        %3488 = vmatpush1.bf16.msra.mxu0 %v3324
        %3489 = vmatprep.subr.bf16.mxu0 %v3329
        %3490 = vmatpush1.bf16.msra.mxu0 %v3328
        %3491 = vmatprep.subr.bf16.mxu0 %v3333
        %3492 = vmatpush1.bf16.msra.mxu0 %v3332
        %3493 = vmatprep.subr.bf16.mxu0 %v3337
        %3494 = vmatpush1.bf16.msra.mxu0 %v3336
        %3495 = vmatprep.subr.bf16.mxu0 %v3341
        %3496 = vmatpush1.bf16.msra.mxu0 %v3340
        %3497 = vmatprep.subr.bf16.mxu0 %v3345
        %3498 = vmatpush1.bf16.msra.mxu0 %v3344
        %3499 = vmatprep.subr.bf16.mxu0 %v3349
        %3500 = vmatpush1.bf16.msra.mxu0 %v3348
        %3501 = vmatprep.subr.bf16.mxu0 %v3353
        %3502 = vmatpush1.bf16.msra.mxu0 %v3352
        %3503 = vmatprep.subr.bf16.mxu0 %v3357
        %3504 = vmatpush1.bf16.msra.mxu0 %v3356
        %3505 = vmatprep.subr.bf16.mxu0 %v3361
        %3506 = vmatpush1.bf16.msra.mxu0 %v3360
        %3507 = vmatprep.subr.bf16.mxu0 %v3365
        %3508 = vmatpush1.bf16.msra.mxu0 %v3364
        %3509 = vmatprep.subr.bf16.mxu0 %v3369
        %3510 = vmatpush1.bf16.msra.mxu0 %v3368
        %3511 = vmatprep.subr.bf16.mxu0 %v3373
        %3512 = vmatpush1.bf16.msra.mxu0 %v3372
        %3513 = vmatprep.mubr.bf16.mxu0 %v3031
        %3514 = vmatmul.mubr.bf16.gmra.mrb[0].mxu0 %v3030
        %v3515 = vpop.f32.mrb[0].mxu0
        %v3516 = vadd.f32 %v3109, %v3515
        %v3517 = vpop.f32.mrb[0].mxu0
        %v3518 = vadd.f32 %v3113, %v3517
        %v3519 = vpop.f32.mrb[0].mxu0
        %v3520 = vadd.f32 %v3109, %v3519
        %v3521 = vpop.f32.mrb[0].mxu0
        %v3522 = vadd.f32 %v3113, %v3521
        %3523 = vdwg.mxu0
        %v3524 = vmul.f32 %v3473, %v3473
        %v3525 = vmul.f32 %v3475, %v3475
        %v3526 = vmul.f32 %v3516, %v3516
        %v3527 = vmul.f32 %v3518, %v3518
        %v3528 = vmul.f32 %v3477, %v3477
        %v3529 = vmul.f32 %v3479, %v3479
        %v3530 = vmul.f32 %v3520, %v3520
        %v3531 = vmul.f32 %v3522, %v3522
        %v3532 = vmul.f32 %v3473, %v3524
        %v3533 = vmul.f32 %v3475, %v3525
        %v3534 = vmul.f32 %v3516, %v3526
        %v3535 = vmul.f32 %v3518, %v3527
        %v3536 = vmul.f32 %v3477, %v3528
        %v3537 = vmul.f32 %v3479, %v3529
        %v3538 = vmul.f32 %v3520, %v3530
        %v3539 = vmul.f32 %v3522, %v3531
        %v3540 = vmul.f32 %v3532, 0.044715
        %v3541 = vmul.f32 %v3533, 0.044715
        %v3542 = vmul.f32 %v3534, 0.044715
        %v3543 = vmul.f32 %v3535, 0.044715
        %v3544 = vmul.f32 %v3536, 0.044715
        %v3545 = vmul.f32 %v3537, 0.044715
        %v3546 = vmul.f32 %v3538, 0.044715
        %v3547 = vmul.f32 %v3539, 0.044715
        %v3548 = vadd.f32 %v3473, %v3540
        %v3549 = vadd.f32 %v3475, %v3541
        %v3550 = vadd.f32 %v3516, %v3542
        %v3551 = vadd.f32 %v3518, %v3543
        %v3552 = vadd.f32 %v3477, %v3544
        %v3553 = vadd.f32 %v3479, %v3545
        %v3554 = vadd.f32 %v3520, %v3546
        %v3555 = vadd.f32 %v3522, %v3547
        %v3556 = vmul.f32 %v3548, 0.7978846
        %v3557 = vmul.f32 %v3549, 0.7978846
        %v3558 = vmul.f32 %v3550, 0.7978846
        %v3559 = vmul.f32 %v3551, 0.7978846
        %v3560 = vmul.f32 %v3552, 0.7978846
        %v3561 = vmul.f32 %v3553, 0.7978846
        %v3562 = vmul.f32 %v3554, 0.7978846
        %v3563 = vmul.f32 %v3555, 0.7978846
        %v3564 = vtanh.pop %v3556
        %v3565 = vtanh.pop %v3557
        %v3566 = vtanh.pop %v3558
        %v3567 = vtanh.pop %v3559
        %v3568 = vtanh.pop %v3560
        %v3569 = vtanh.pop %v3561
        %v3570 = vtanh.pop %v3562
        %v3571 = vtanh.pop %v3563
        %v3572 = vadd.f32 %v3564, 1.0
        %v3573 = vadd.f32 %v3565, 1.0
        %v3574 = vadd.f32 %v3566, 1.0
        %v3575 = vadd.f32 %v3567, 1.0
        %v3576 = vadd.f32 %v3568, 1.0
        %v3577 = vadd.f32 %v3569, 1.0
        %v3578 = vadd.f32 %v3570, 1.0
        %v3579 = vadd.f32 %v3571, 1.0
        %v3580 = vmul.f32 %v3572, 0.5
        %v3581 = vmul.f32 %v3573, 0.5
        %v3582 = vmul.f32 %v3574, 0.5
        %v3583 = vmul.f32 %v3575, 0.5
        %v3584 = vmul.f32 %v3576, 0.5
        %v3585 = vmul.f32 %v3577, 0.5
        %v3586 = vmul.f32 %v3578, 0.5
        %v3587 = vmul.f32 %v3579, 0.5
        %v3588 = vmul.f32 %v3473, %v3580
        %v3589 = vmul.f32 %v3475, %v3581
        %v3590 = vmul.f32 %v3516, %v3582
        %v3591 = vmul.f32 %v3518, %v3583
        %v3592 = vmul.f32 %v3477, %v3584
        %v3593 = vmul.f32 %v3479, %v3585
        %v3594 = vmul.f32 %v3520, %v3586
        %v3595 = vmul.f32 %v3522, %v3587
        %v3596 = vpack.c.bf16 %v3592, %v3588
        %v3597 = vpack.c.bf16 %v3593, %v3589
        %v3598 = vpack.c.bf16 %v3594, %v3590
        %v3599 = vpack.c.bf16 %v3595, %v3591
        %v3600 = vld [vmem:[%s1129] sm:$0xff]
        %v3601 = vld [vmem:[%s1129 + $0x8] sm:$0xff]
        %v3602 = vld [vmem:[%s1129 + $0x10] sm:$0xff]
        %v3603 = vld [vmem:[%s1129 + $0x18] sm:$0xff]
        %v3604 = vld [vmem:[%s1129 + $0x20] sm:$0xff]
        %v3605 = vld [vmem:[%s1129 + $0x28] sm:$0xff]
        %v3606 = vld [vmem:[%s1129 + $0x30] sm:$0xff]
        %v3607 = vld [vmem:[%s1129 + $0x38] sm:$0xff]
        %v3608 = vld [vmem:[%s1129 + $0x40] sm:$0xff]
        %v3609 = vld [vmem:[%s1129 + $0x48] sm:$0xff]
        %v3610 = vld [vmem:[%s1129 + $0x50] sm:$0xff]
        %v3611 = vld [vmem:[%s1129 + $0x58] sm:$0xff]
        %v3612 = vld [vmem:[%s1129 + $0x60] sm:$0xff]
        %v3613 = vld [vmem:[%s1129 + $0x68] sm:$0xff]
        %v3614 = vld [vmem:[%s1129 + $0x70] sm:$0xff]
        %v3615 = vld [vmem:[%s1129 + $0x78] sm:$0xff]
        %v3616 = vld [vmem:[%s1129 + $0x80] sm:$0xff]
        %v3617 = vld [vmem:[%s1129 + $0x88] sm:$0xff]
        %v3618 = vld [vmem:[%s1129 + $0x90] sm:$0xff]
        %v3619 = vld [vmem:[%s1129 + $0x98] sm:$0xff]
        %v3620 = vld [vmem:[%s1129 + $0xa0] sm:$0xff]
        %v3621 = vld [vmem:[%s1129 + $0xa8] sm:$0xff]
        %v3622 = vld [vmem:[%s1129 + $0xb0] sm:$0xff]
        %v3623 = vld [vmem:[%s1129 + $0xb8] sm:$0xff]
        %v3624 = vld [vmem:[%s1129 + $0xc0] sm:$0xff]
        %v3625 = vld [vmem:[%s1129 + $0xc8] sm:$0xff]
        %v3626 = vld [vmem:[%s1129 + $0xd0] sm:$0xff]
        %v3627 = vld [vmem:[%s1129 + $0xd8] sm:$0xff]
        %v3628 = vld [vmem:[%s1129 + $0xe0] sm:$0xff]
        %v3629 = vld [vmem:[%s1129 + $0xe8] sm:$0xff]
        %v3630 = vld [vmem:[%s1129 + $0xf0] sm:$0xff]
        %v3631 = vld [vmem:[%s1129 + $0xf8] sm:$0xff]
        %v3632 = vld [vmem:[%s1129 + $0x100] sm:$0xff]
        %v3633 = vld [vmem:[%s1129 + $0x108] sm:$0xff]
        %v3634 = vld [vmem:[%s1129 + $0x110] sm:$0xff]
        %v3635 = vld [vmem:[%s1129 + $0x118] sm:$0xff]
        %v3636 = vld [vmem:[%s1129 + $0x120] sm:$0xff]
        %v3637 = vld [vmem:[%s1129 + $0x128] sm:$0xff]
        %v3638 = vld [vmem:[%s1129 + $0x130] sm:$0xff]
        %v3639 = vld [vmem:[%s1129 + $0x138] sm:$0xff]
        %v3640 = vld [vmem:[%s1129 + $0x140] sm:$0xff]
        %v3641 = vld [vmem:[%s1129 + $0x148] sm:$0xff]
        %v3642 = vld [vmem:[%s1129 + $0x150] sm:$0xff]
        %v3643 = vld [vmem:[%s1129 + $0x158] sm:$0xff]
        %v3644 = vld [vmem:[%s1129 + $0x160] sm:$0xff]
        %v3645 = vld [vmem:[%s1129 + $0x168] sm:$0xff]
        %v3646 = vld [vmem:[%s1129 + $0x170] sm:$0xff]
        %v3647 = vld [vmem:[%s1129 + $0x178] sm:$0xff]
        %v3648 = vld [vmem:[%s1129 + $0x180] sm:$0xff]
        %v3649 = vld [vmem:[%s1129 + $0x188] sm:$0xff]
        %v3650 = vld [vmem:[%s1129 + $0x190] sm:$0xff]
        %v3651 = vld [vmem:[%s1129 + $0x198] sm:$0xff]
        %v3652 = vld [vmem:[%s1129 + $0x1a0] sm:$0xff]
        %v3653 = vld [vmem:[%s1129 + $0x1a8] sm:$0xff]
        %v3654 = vld [vmem:[%s1129 + $0x1b0] sm:$0xff]
        %v3655 = vld [vmem:[%s1129 + $0x1b8] sm:$0xff]
        %v3656 = vld [vmem:[%s1129 + $0x1c0] sm:$0xff]
        %v3657 = vld [vmem:[%s1129 + $0x1c8] sm:$0xff]
        %v3658 = vld [vmem:[%s1129 + $0x1d0] sm:$0xff]
        %v3659 = vld [vmem:[%s1129 + $0x1d8] sm:$0xff]
        %v3660 = vld [vmem:[%s1129 + $0x1e0] sm:$0xff]
        %v3661 = vld [vmem:[%s1129 + $0x1e8] sm:$0xff]
        %v3662 = vld [vmem:[%s1129 + $0x1f0] sm:$0xff]
        %v3663 = vld [vmem:[%s1129 + $0x1f8] sm:$0xff]
        %v3664 = vld [vmem:[%s1138] sm:$0x3]
        %v3666 = vlaneseq
        %v3667 = vshrl.u32 %v3666, 7
        %v3668 = vsub.s32 0, %v3667
        %v3669 = vrot.slane %v3664, %v3668
        %v3670 = vlaneseq
        %v3671 = vshrl.u32 %v3670, 7
        %v3672 = vsub.s32 1, %v3671
        %v3673 = vrot.slane %v3664, %v3672
        %v3740 = vunpack.c.l.b16 %v3600
        %v3741 = vunpack.c.h.b16 %v3600
        %v3742 = vunpack.c.l.b16 %v3601
        %v3743 = vunpack.c.h.b16 %v3601
        %v3744 = vunpack.c.l.b16 %v3602
        %v3745 = vunpack.c.h.b16 %v3602
        %v3746 = vunpack.c.l.b16 %v3603
        %v3747 = vunpack.c.h.b16 %v3603
        %v3748 = vunpack.c.l.b16 %v3604
        %v3749 = vunpack.c.h.b16 %v3604
        %v3750 = vunpack.c.l.b16 %v3605
        %v3751 = vunpack.c.h.b16 %v3605
        %v3752 = vunpack.c.l.b16 %v3606
        %v3753 = vunpack.c.h.b16 %v3606
        %v3754 = vunpack.c.l.b16 %v3607
        %v3755 = vunpack.c.h.b16 %v3607
        %v3756 = vunpack.c.l.b16 %v3608
        %v3757 = vunpack.c.h.b16 %v3608
        %v3758 = vunpack.c.l.b16 %v3609
        %v3759 = vunpack.c.h.b16 %v3609
        %v3760 = vunpack.c.l.b16 %v3610
        %v3761 = vunpack.c.h.b16 %v3610
        %v3762 = vunpack.c.l.b16 %v3611
        %v3763 = vunpack.c.h.b16 %v3611
        %v3764 = vunpack.c.l.b16 %v3612
        %v3765 = vunpack.c.h.b16 %v3612
        %v3766 = vunpack.c.l.b16 %v3613
        %v3767 = vunpack.c.h.b16 %v3613
        %v3768 = vunpack.c.l.b16 %v3614
        %v3769 = vunpack.c.h.b16 %v3614
        %v3770 = vunpack.c.l.b16 %v3615
        %v3771 = vunpack.c.h.b16 %v3615
        %v3772 = vunpack.c.l.b16 %v3616
        %v3773 = vunpack.c.h.b16 %v3616
        %v3774 = vunpack.c.l.b16 %v3617
        %v3775 = vunpack.c.h.b16 %v3617
        %v3776 = vunpack.c.l.b16 %v3618
        %v3777 = vunpack.c.h.b16 %v3618
        %v3778 = vunpack.c.l.b16 %v3619
        %v3779 = vunpack.c.h.b16 %v3619
        %v3780 = vunpack.c.l.b16 %v3620
        %v3781 = vunpack.c.h.b16 %v3620
        %v3782 = vunpack.c.l.b16 %v3621
        %v3783 = vunpack.c.h.b16 %v3621
        %v3784 = vunpack.c.l.b16 %v3622
        %v3785 = vunpack.c.h.b16 %v3622
        %v3786 = vunpack.c.l.b16 %v3623
        %v3787 = vunpack.c.h.b16 %v3623
        %v3788 = vunpack.c.l.b16 %v3624
        %v3789 = vunpack.c.h.b16 %v3624
        %v3790 = vunpack.c.l.b16 %v3625
        %v3791 = vunpack.c.h.b16 %v3625
        %v3792 = vunpack.c.l.b16 %v3626
        %v3793 = vunpack.c.h.b16 %v3626
        %v3794 = vunpack.c.l.b16 %v3627
        %v3795 = vunpack.c.h.b16 %v3627
        %v3796 = vunpack.c.l.b16 %v3628
        %v3797 = vunpack.c.h.b16 %v3628
        %v3798 = vunpack.c.l.b16 %v3629
        %v3799 = vunpack.c.h.b16 %v3629
        %v3800 = vunpack.c.l.b16 %v3630
        %v3801 = vunpack.c.h.b16 %v3630
        %v3802 = vunpack.c.l.b16 %v3631
        %v3803 = vunpack.c.h.b16 %v3631
        %v3804 = vunpack.c.l.b16 %v3632
        %v3805 = vunpack.c.h.b16 %v3632
        %v3806 = vunpack.c.l.b16 %v3633
        %v3807 = vunpack.c.h.b16 %v3633
        %v3808 = vunpack.c.l.b16 %v3634
        %v3809 = vunpack.c.h.b16 %v3634
        %v3810 = vunpack.c.l.b16 %v3635
        %v3811 = vunpack.c.h.b16 %v3635
        %v3812 = vunpack.c.l.b16 %v3636
        %v3813 = vunpack.c.h.b16 %v3636
        %v3814 = vunpack.c.l.b16 %v3637
        %v3815 = vunpack.c.h.b16 %v3637
        %v3816 = vunpack.c.l.b16 %v3638
        %v3817 = vunpack.c.h.b16 %v3638
        %v3818 = vunpack.c.l.b16 %v3639
        %v3819 = vunpack.c.h.b16 %v3639
        %v3820 = vunpack.c.l.b16 %v3640
        %v3821 = vunpack.c.h.b16 %v3640
        %v3822 = vunpack.c.l.b16 %v3641
        %v3823 = vunpack.c.h.b16 %v3641
        %v3824 = vunpack.c.l.b16 %v3642
        %v3825 = vunpack.c.h.b16 %v3642
        %v3826 = vunpack.c.l.b16 %v3643
        %v3827 = vunpack.c.h.b16 %v3643
        %v3828 = vunpack.c.l.b16 %v3644
        %v3829 = vunpack.c.h.b16 %v3644
        %v3830 = vunpack.c.l.b16 %v3645
        %v3831 = vunpack.c.h.b16 %v3645
        %v3832 = vunpack.c.l.b16 %v3646
        %v3833 = vunpack.c.h.b16 %v3646
        %v3834 = vunpack.c.l.b16 %v3647
        %v3835 = vunpack.c.h.b16 %v3647
        %v3836 = vunpack.c.l.b16 %v3648
        %v3837 = vunpack.c.h.b16 %v3648
        %v3838 = vunpack.c.l.b16 %v3649
        %v3839 = vunpack.c.h.b16 %v3649
        %v3840 = vunpack.c.l.b16 %v3650
        %v3841 = vunpack.c.h.b16 %v3650
        %v3842 = vunpack.c.l.b16 %v3651
        %v3843 = vunpack.c.h.b16 %v3651
        %v3844 = vunpack.c.l.b16 %v3652
        %v3845 = vunpack.c.h.b16 %v3652
        %v3846 = vunpack.c.l.b16 %v3653
        %v3847 = vunpack.c.h.b16 %v3653
        %v3848 = vunpack.c.l.b16 %v3654
        %v3849 = vunpack.c.h.b16 %v3654
        %v3850 = vunpack.c.l.b16 %v3655
        %v3851 = vunpack.c.h.b16 %v3655
        %v3852 = vunpack.c.l.b16 %v3656
        %v3853 = vunpack.c.h.b16 %v3656
        %v3854 = vunpack.c.l.b16 %v3657
        %v3855 = vunpack.c.h.b16 %v3657
        %v3856 = vunpack.c.l.b16 %v3658
        %v3857 = vunpack.c.h.b16 %v3658
        %v3858 = vunpack.c.l.b16 %v3659
        %v3859 = vunpack.c.h.b16 %v3659
        %v3860 = vunpack.c.l.b16 %v3660
        %v3861 = vunpack.c.h.b16 %v3660
        %v3862 = vunpack.c.l.b16 %v3661
        %v3863 = vunpack.c.h.b16 %v3661
        %v3864 = vunpack.c.l.b16 %v3662
        %v3865 = vunpack.c.h.b16 %v3662
        %v3866 = vunpack.c.l.b16 %v3663
        %v3867 = vunpack.c.h.b16 %v3663
        %v3868 = vpack.c.b16 %v3742, %v3740
        %v3869 = vpack.c.b16 %v3743, %v3741
        %v3870 = vpack.c.b16 %v3746, %v3744
        %v3871 = vpack.c.b16 %v3747, %v3745
        %v3872 = vpack.c.b16 %v3750, %v3748
        %v3873 = vpack.c.b16 %v3751, %v3749
        %v3874 = vpack.c.b16 %v3754, %v3752
        %v3875 = vpack.c.b16 %v3755, %v3753
        %v3876 = vpack.c.b16 %v3758, %v3756
        %v3877 = vpack.c.b16 %v3759, %v3757
        %v3878 = vpack.c.b16 %v3762, %v3760
        %v3879 = vpack.c.b16 %v3763, %v3761
        %v3880 = vpack.c.b16 %v3766, %v3764
        %v3881 = vpack.c.b16 %v3767, %v3765
        %v3882 = vpack.c.b16 %v3770, %v3768
        %v3883 = vpack.c.b16 %v3771, %v3769
        %v3884 = vpack.c.b16 %v3774, %v3772
        %v3885 = vpack.c.b16 %v3775, %v3773
        %v3886 = vpack.c.b16 %v3778, %v3776
        %v3887 = vpack.c.b16 %v3779, %v3777
        %v3888 = vpack.c.b16 %v3782, %v3780
        %v3889 = vpack.c.b16 %v3783, %v3781
        %v3890 = vpack.c.b16 %v3786, %v3784
        %v3891 = vpack.c.b16 %v3787, %v3785
        %v3892 = vpack.c.b16 %v3790, %v3788
        %v3893 = vpack.c.b16 %v3791, %v3789
        %v3894 = vpack.c.b16 %v3794, %v3792
        %v3895 = vpack.c.b16 %v3795, %v3793
        %v3896 = vpack.c.b16 %v3798, %v3796
        %v3897 = vpack.c.b16 %v3799, %v3797
        %v3898 = vpack.c.b16 %v3802, %v3800
        %v3899 = vpack.c.b16 %v3803, %v3801
        %v3900 = vpack.c.b16 %v3806, %v3804
        %v3901 = vpack.c.b16 %v3807, %v3805
        %v3902 = vpack.c.b16 %v3810, %v3808
        %v3903 = vpack.c.b16 %v3811, %v3809
        %v3904 = vpack.c.b16 %v3814, %v3812
        %v3905 = vpack.c.b16 %v3815, %v3813
        %v3906 = vpack.c.b16 %v3818, %v3816
        %v3907 = vpack.c.b16 %v3819, %v3817
        %v3908 = vpack.c.b16 %v3822, %v3820
        %v3909 = vpack.c.b16 %v3823, %v3821
        %v3910 = vpack.c.b16 %v3826, %v3824
        %v3911 = vpack.c.b16 %v3827, %v3825
        %v3912 = vpack.c.b16 %v3830, %v3828
        %v3913 = vpack.c.b16 %v3831, %v3829
        %v3914 = vpack.c.b16 %v3834, %v3832
        %v3915 = vpack.c.b16 %v3835, %v3833
        %v3916 = vpack.c.b16 %v3838, %v3836
        %v3917 = vpack.c.b16 %v3839, %v3837
        %v3918 = vpack.c.b16 %v3842, %v3840
        %v3919 = vpack.c.b16 %v3843, %v3841
        %v3920 = vpack.c.b16 %v3846, %v3844
        %v3921 = vpack.c.b16 %v3847, %v3845
        %v3922 = vpack.c.b16 %v3850, %v3848
        %v3923 = vpack.c.b16 %v3851, %v3849
        %v3924 = vpack.c.b16 %v3854, %v3852
        %v3925 = vpack.c.b16 %v3855, %v3853
        %v3926 = vpack.c.b16 %v3858, %v3856
        %v3927 = vpack.c.b16 %v3859, %v3857
        %v3928 = vpack.c.b16 %v3862, %v3860
        %v3929 = vpack.c.b16 %v3863, %v3861
        %v3930 = vpack.c.b16 %v3866, %v3864
        %v3931 = vpack.c.b16 %v3867, %v3865
        %3996 = vmatprep.subr.bf16.mxu0 %v3869
        %3997 = vmatpush1.bf16.msra.mxu0 %v3868
        %3998 = vmatprep.subr.bf16.mxu0 %v3871
        %3999 = vmatpush1.bf16.msra.mxu0 %v3870
        %4000 = vmatprep.subr.bf16.mxu0 %v3873
        %4001 = vmatpush1.bf16.msra.mxu0 %v3872
        %4002 = vmatprep.subr.bf16.mxu0 %v3875
        %4003 = vmatpush1.bf16.msra.mxu0 %v3874
        %4004 = vmatprep.subr.bf16.mxu0 %v3877
        %4005 = vmatpush1.bf16.msra.mxu0 %v3876
        %4006 = vmatprep.subr.bf16.mxu0 %v3879
        %4007 = vmatpush1.bf16.msra.mxu0 %v3878
        %4008 = vmatprep.subr.bf16.mxu0 %v3881
        %4009 = vmatpush1.bf16.msra.mxu0 %v3880
        %4010 = vmatprep.subr.bf16.mxu0 %v3883
        %4011 = vmatpush1.bf16.msra.mxu0 %v3882
        %4012 = vmatprep.subr.bf16.mxu0 %v3885
        %4013 = vmatpush1.bf16.msra.mxu0 %v3884
        %4014 = vmatprep.subr.bf16.mxu0 %v3887
        %4015 = vmatpush1.bf16.msra.mxu0 %v3886
        %4016 = vmatprep.subr.bf16.mxu0 %v3889
        %4017 = vmatpush1.bf16.msra.mxu0 %v3888
        %4018 = vmatprep.subr.bf16.mxu0 %v3891
        %4019 = vmatpush1.bf16.msra.mxu0 %v3890
        %4020 = vmatprep.subr.bf16.mxu0 %v3893
        %4021 = vmatpush1.bf16.msra.mxu0 %v3892
        %4022 = vmatprep.subr.bf16.mxu0 %v3895
        %4023 = vmatpush1.bf16.msra.mxu0 %v3894
        %4024 = vmatprep.subr.bf16.mxu0 %v3897
        %4025 = vmatpush1.bf16.msra.mxu0 %v3896
        %4026 = vmatprep.subr.bf16.mxu0 %v3899
        %4027 = vmatpush1.bf16.msra.mxu0 %v3898
        %4028 = vmatprep.mubr.bf16.mxu0 %v3597
        %4029 = vmatmul.mubr.bf16.gmra.mrb[0].mxu0 %v3596
        %v4030 = vpop.f32.mrb[0].mxu0
        %v4031 = vadd.f32 %v3669, %v4030
        %v4032 = vpop.f32.mrb[0].mxu0
        %v4033 = vadd.f32 %v3673, %v4032
        %v4034 = vpop.f32.mrb[0].mxu0
        %v4035 = vadd.f32 %v3669, %v4034
        %v4036 = vpop.f32.mrb[0].mxu0
        %v4037 = vadd.f32 %v3673, %v4036
        %4038 = vdwg.mxu0
        %4039 = vmatprep.subr.bf16.mxu0 %v3901
        %4040 = vmatpush1.bf16.msra.mxu0 %v3900
        %4041 = vmatprep.subr.bf16.mxu0 %v3903
        %4042 = vmatpush1.bf16.msra.mxu0 %v3902
        %4043 = vmatprep.subr.bf16.mxu0 %v3905
        %4044 = vmatpush1.bf16.msra.mxu0 %v3904
        %4045 = vmatprep.subr.bf16.mxu0 %v3907
        %4046 = vmatpush1.bf16.msra.mxu0 %v3906
        %4047 = vmatprep.subr.bf16.mxu0 %v3909
        %4048 = vmatpush1.bf16.msra.mxu0 %v3908
        %4049 = vmatprep.subr.bf16.mxu0 %v3911
        %4050 = vmatpush1.bf16.msra.mxu0 %v3910
        %4051 = vmatprep.subr.bf16.mxu0 %v3913
        %4052 = vmatpush1.bf16.msra.mxu0 %v3912
        %4053 = vmatprep.subr.bf16.mxu0 %v3915
        %4054 = vmatpush1.bf16.msra.mxu0 %v3914
        %4055 = vmatprep.subr.bf16.mxu0 %v3917
        %4056 = vmatpush1.bf16.msra.mxu0 %v3916
        %4057 = vmatprep.subr.bf16.mxu0 %v3919
        %4058 = vmatpush1.bf16.msra.mxu0 %v3918
        %4059 = vmatprep.subr.bf16.mxu0 %v3921
        %4060 = vmatpush1.bf16.msra.mxu0 %v3920
        %4061 = vmatprep.subr.bf16.mxu0 %v3923
        %4062 = vmatpush1.bf16.msra.mxu0 %v3922
        %4063 = vmatprep.subr.bf16.mxu0 %v3925
        %4064 = vmatpush1.bf16.msra.mxu0 %v3924
        %4065 = vmatprep.subr.bf16.mxu0 %v3927
        %4066 = vmatpush1.bf16.msra.mxu0 %v3926
        %4067 = vmatprep.subr.bf16.mxu0 %v3929
        %4068 = vmatpush1.bf16.msra.mxu0 %v3928
        %4069 = vmatprep.subr.bf16.mxu0 %v3931
        %4070 = vmatpush1.bf16.msra.mxu0 %v3930
        %4071 = vmatprep.mubr.bf16.mxu0 %v3599
        %4072 = vmatmul.mubr.bf16.gmra.mrb[0].mxu0 %v3598
        %v4073 = vpop.f32.mrb[0].mxu0
        %v4074 = vadd.f32 %v4031, %v4073
        %v4075 = vpop.f32.mrb[0].mxu0
        %v4076 = vadd.f32 %v4033, %v4075
        %v4077 = vpop.f32.mrb[0].mxu0
        %v4078 = vadd.f32 %v4035, %v4077
        %v4079 = vpop.f32.mrb[0].mxu0
        %v4080 = vadd.f32 %v4037, %v4079
        %4081 = vdwg.mxu0
        %v4082 = vadd.f32 %v2962, %v4074
        %v4083 = vadd.f32 %v2963, %v4076
        %v4084 = vadd.f32 %v2964, %v4078
        %v4085 = vadd.f32 %v2965, %v4080
        %4086 = vst [vmem:[#allocation2] sm:$0xff] %v4082
        %4087 = vst [vmem:[#allocation2 + $0x8] sm:$0xff] %v4083
        %4088 = vst [vmem:[#allocation2 + $0x10] sm:$0xff] %v4084
        %4089 = vst [vmem:[#allocation2 + $0x18] sm:$0xff] %v4085
        %p4090 = scmp.eq.s32.totalorder %s49, 1
        // Predicated region
        $region201: #{tpu_custom_call.1} parent=107 // pred_check
          %p4091 = pneg %p4090
        $region202: #{tpu_custom_call.1} parent=107 // pred_check_branch
          %4093 = sbr.rel (%p4091) target = $region204
        $region203: #{tpu_custom_call.1} parent=107 // pred_region
          %v4094 = vld [vmem:[#allocation14] sm:$0x3]
          %v4095 = vld [vmem:[#allocation15] sm:$0x3]
          %v4096 = vadd.f32 %v4082, %v4083
          %4097 = vadd.xlane.f32.xlu0 %v4096
          %v4098 = vpop.xlane.xlu0 %4097
          %v4099 = vadd.f32 %v4084, %v4085
          %4100 = vadd.xlane.f32.xlu0 %v4099
          %v4101 = vpop.xlane.xlu0 %4100
          %v4102 = vmul.f32 %v4098, %v1436
          %v4103 = vmul.f32 %v4101, %v1436
          %v4104 = vsub.f32 %v4082, %v4102
          %v4105 = vsub.f32 %v4083, %v4102
          %v4106 = vsub.f32 %v4084, %v4103
          %v4107 = vsub.f32 %v4085, %v4103
          %v4108 = vmul.f32 %v4104, %v4104
          %v4109 = vmul.f32 %v4105, %v4105
          %v4110 = vmul.f32 %v4106, %v4106
          %v4111 = vmul.f32 %v4107, %v4107
          %v4112 = vadd.f32 %v4108, %v4109
          %4113 = vadd.xlane.f32.xlu0 %v4112
          %v4114 = vpop.xlane.xlu0 %4113
          %v4115 = vadd.f32 %v4110, %v4111
          %4116 = vadd.xlane.f32.xlu0 %v4115
          %v4117 = vpop.xlane.xlu0 %4116
          %v4118 = vmul.f32 %v4114, %v1436
          %v4119 = vmul.f32 %v4117, %v1436
          %v4120 = vadd.f32 %v4118, 1e-05
          %v4121 = vadd.f32 %v4119, 1e-05
          %v4122 = vrsqrt.pop %v4120
          %v4123 = vrsqrt.pop %v4121
          %v4124 = vmul.f32 %v4104, %v4122
          %v4125 = vmul.f32 %v4105, %v4122
          %v4126 = vmul.f32 %v4106, %v4123
          %v4127 = vmul.f32 %v4107, %v4123
          %v4129 = vlaneseq
          %v4130 = vshrl.u32 %v4129, 7
          %v4131 = vsub.s32 0, %v4130
          %v4132 = vrot.slane %v4094, %v4131
          %v4133 = vlaneseq
          %v4134 = vshrl.u32 %v4133, 7
          %v4135 = vsub.s32 1, %v4134
          %v4136 = vrot.slane %v4094, %v4135
          %v4139 = vmul.f32 %v4124, %v4132
          %v4140 = vmul.f32 %v4125, %v4136
          %v4141 = vmul.f32 %v4126, %v4132
          %v4142 = vmul.f32 %v4127, %v4136
          %v4144 = vlaneseq
          %v4145 = vshrl.u32 %v4144, 7
          %v4146 = vsub.s32 0, %v4145
          %v4147 = vrot.slane %v4095, %v4146
          %v4148 = vlaneseq
          %v4149 = vshrl.u32 %v4148, 7
          %v4150 = vsub.s32 1, %v4149
          %v4151 = vrot.slane %v4095, %v4150
          %v4154 = vadd.f32 %v4139, %v4147
          %v4155 = vadd.f32 %v4140, %v4151
          %v4156 = vadd.f32 %v4141, %v4147
          %v4157 = vadd.f32 %v4142, %v4151
          %v4158 = vpack.c.bf16 %v4156, %v4154
          %v4159 = vpack.c.bf16 %v4157, %v4155
          %v4160 = vld [vmem:[#allocation17] sm:$0xf]
          %v4161 = vld [vmem:[#allocation17 + $0x4] sm:$0xf]
          %v4162 = vld [vmem:[#allocation17 + $0x8] sm:$0xf]
          %v4163 = vld [vmem:[#allocation17 + $0xc] sm:$0xf]
          %v4164 = vld [vmem:[#allocation17 + $0x10] sm:$0xf]
          %v4165 = vld [vmem:[#allocation17 + $0x14] sm:$0xf]
          %v4166 = vld [vmem:[#allocation17 + $0x18] sm:$0xf]
          %v4167 = vld [vmem:[#allocation17 + $0x1c] sm:$0xf]
          %v4168 = vld [vmem:[#allocation17 + $0x20] sm:$0xf]
          %v4169 = vld [vmem:[#allocation17 + $0x24] sm:$0xf]
          %v4170 = vld [vmem:[#allocation17 + $0x28] sm:$0xf]
          %v4171 = vld [vmem:[#allocation17 + $0x2c] sm:$0xf]
          %v4172 = vld [vmem:[#allocation17 + $0x30] sm:$0xf]
          %v4173 = vld [vmem:[#allocation17 + $0x34] sm:$0xf]
          %v4174 = vld [vmem:[#allocation17 + $0x38] sm:$0xf]
          %v4175 = vld [vmem:[#allocation17 + $0x3c] sm:$0xf]
          %v4176 = vld [vmem:[#allocation17 + $0x40] sm:$0xf]
          %v4177 = vld [vmem:[#allocation17 + $0x44] sm:$0xf]
          %v4178 = vld [vmem:[#allocation17 + $0x48] sm:$0xf]
          %v4179 = vld [vmem:[#allocation17 + $0x4c] sm:$0xf]
          %v4180 = vld [vmem:[#allocation17 + $0x50] sm:$0xf]
          %v4181 = vld [vmem:[#allocation17 + $0x54] sm:$0xf]
          %v4182 = vld [vmem:[#allocation17 + $0x58] sm:$0xf]
          %v4183 = vld [vmem:[#allocation17 + $0x5c] sm:$0xf]
          %v4184 = vld [vmem:[#allocation17 + $0x60] sm:$0xf]
          %v4185 = vld [vmem:[#allocation17 + $0x64] sm:$0xf]
          %v4186 = vld [vmem:[#allocation17 + $0x68] sm:$0xf]
          %v4187 = vld [vmem:[#allocation17 + $0x6c] sm:$0xf]
          %v4188 = vld [vmem:[#allocation17 + $0x70] sm:$0xf]
          %v4189 = vld [vmem:[#allocation17 + $0x74] sm:$0xf]
          %v4190 = vld [vmem:[#allocation17 + $0x78] sm:$0xf]
          %v4191 = vld [vmem:[#allocation17 + $0x7c] sm:$0xf]
          %v4192 = vld [vmem:[#allocation18] sm:$0x1]
          %v4194 = vlaneseq
          %v4195 = vshrl.u32 %v4194, 7
          %v4196 = vsub.s32 0, %v4195
          %v4197 = vrot.slane %v4192, %v4196
          %v4231 = vunpack.c.l.b16 %v4160
          %v4232 = vunpack.c.l.b16 %v4161
          %v4233 = vunpack.c.l.b16 %v4162
          %v4234 = vunpack.c.l.b16 %v4163
          %v4235 = vunpack.c.l.b16 %v4164
          %v4236 = vunpack.c.l.b16 %v4165
          %v4237 = vunpack.c.l.b16 %v4166
          %v4238 = vunpack.c.l.b16 %v4167
          %v4239 = vunpack.c.l.b16 %v4168
          %v4240 = vunpack.c.l.b16 %v4169
          %v4241 = vunpack.c.l.b16 %v4170
          %v4242 = vunpack.c.l.b16 %v4171
          %v4243 = vunpack.c.l.b16 %v4172
          %v4244 = vunpack.c.l.b16 %v4173
          %v4245 = vunpack.c.l.b16 %v4174
          %v4246 = vunpack.c.l.b16 %v4175
          %v4247 = vunpack.c.l.b16 %v4176
          %v4248 = vunpack.c.l.b16 %v4177
          %v4249 = vunpack.c.l.b16 %v4178
          %v4250 = vunpack.c.l.b16 %v4179
          %v4251 = vunpack.c.l.b16 %v4180
          %v4252 = vunpack.c.l.b16 %v4181
          %v4253 = vunpack.c.l.b16 %v4182
          %v4254 = vunpack.c.l.b16 %v4183
          %v4255 = vunpack.c.l.b16 %v4184
          %v4256 = vunpack.c.l.b16 %v4185
          %v4257 = vunpack.c.l.b16 %v4186
          %v4258 = vunpack.c.l.b16 %v4187
          %v4259 = vunpack.c.l.b16 %v4188
          %v4260 = vunpack.c.l.b16 %v4189
          %v4261 = vunpack.c.l.b16 %v4190
          %v4262 = vunpack.c.l.b16 %v4191
          %v4263 = vpack.c.b16 %v4232, %v4231
          %v4264 = vpack.c.b16 %v4234, %v4233
          %v4265 = vpack.c.b16 %v4236, %v4235
          %v4266 = vpack.c.b16 %v4238, %v4237
          %v4267 = vpack.c.b16 %v4240, %v4239
          %v4268 = vpack.c.b16 %v4242, %v4241
          %v4269 = vpack.c.b16 %v4244, %v4243
          %v4270 = vpack.c.b16 %v4246, %v4245
          %v4271 = vpack.c.b16 %v4248, %v4247
          %v4272 = vpack.c.b16 %v4250, %v4249
          %v4273 = vpack.c.b16 %v4252, %v4251
          %v4274 = vpack.c.b16 %v4254, %v4253
          %v4275 = vpack.c.b16 %v4256, %v4255
          %v4276 = vpack.c.b16 %v4258, %v4257
          %v4277 = vpack.c.b16 %v4260, %v4259
          %v4278 = vpack.c.b16 %v4262, %v4261
          %4295 = vmatprep.subr.bf16.mxu0 0
          %4296 = vmatpush1.bf16.msra.mxu0 %v4263
          %4297 = vmatprep.subr.bf16.mxu0 0
          %4298 = vmatpush1.bf16.msra.mxu0 %v4264
          %4299 = vmatprep.subr.bf16.mxu0 0
          %4300 = vmatpush1.bf16.msra.mxu0 %v4265
          %4301 = vmatprep.subr.bf16.mxu0 0
          %4302 = vmatpush1.bf16.msra.mxu0 %v4266
          %4303 = vmatprep.subr.bf16.mxu0 0
          %4304 = vmatpush1.bf16.msra.mxu0 %v4267
          %4305 = vmatprep.subr.bf16.mxu0 0
          %4306 = vmatpush1.bf16.msra.mxu0 %v4268
          %4307 = vmatprep.subr.bf16.mxu0 0
          %4308 = vmatpush1.bf16.msra.mxu0 %v4269
          %4309 = vmatprep.subr.bf16.mxu0 0
          %4310 = vmatpush1.bf16.msra.mxu0 %v4270
          %4311 = vmatprep.subr.bf16.mxu0 0
          %4312 = vmatpush1.bf16.msra.mxu0 %v4271
          %4313 = vmatprep.subr.bf16.mxu0 0
          %4314 = vmatpush1.bf16.msra.mxu0 %v4272
          %4315 = vmatprep.subr.bf16.mxu0 0
          %4316 = vmatpush1.bf16.msra.mxu0 %v4273
          %4317 = vmatprep.subr.bf16.mxu0 0
          %4318 = vmatpush1.bf16.msra.mxu0 %v4274
          %4319 = vmatprep.subr.bf16.mxu0 0
          %4320 = vmatpush1.bf16.msra.mxu0 %v4275
          %4321 = vmatprep.subr.bf16.mxu0 0
          %4322 = vmatpush1.bf16.msra.mxu0 %v4276
          %4323 = vmatprep.subr.bf16.mxu0 0
          %4324 = vmatpush1.bf16.msra.mxu0 %v4277
          %4325 = vmatprep.subr.bf16.mxu0 0
          %4326 = vmatpush1.bf16.msra.mxu0 %v4278
          %4327 = vmatprep.mubr.bf16.mxu0 %v4159
          %4328 = vmatmul.mubr.bf16.gmra.mrb[0].mxu0 %v4158
          %v4329 = vpop.f32.mrb[0].mxu0
          %v4330 = vadd.f32 %v4197, %v4329
          %v4331 = vpop.f32.mrb[0].mxu0
          %v4332 = vpop.f32.mrb[0].mxu0
          %v4333 = vadd.f32 %v4197, %v4332
          %v4334 = vpop.f32.mrb[0].mxu0
          %4335 = vdwg.mxu0
          %4336 = vst [vmem:[%s1258] sm:$0xff] %v4330
          %4337 = vst [vmem:[%s1258 + $0x8] sm:$0xff] %v4333
        $region204: #{tpu_custom_call.1} parent=107 // pred_fallthru
          _
        %s4338 = sand.u32 %s591, 1
        %s4339 = scalar_lea.sflag [#allocation5], %s4338
        %s4340 = sand.u32 %s591, 1
        %s4341 = smul.addr %s4340, 16
        %s4342 = scalar_lea.vmem [#allocation32], %s4341
        // Predicated region
        $region205: #{tpu_custom_call.1} parent=107 // pred_check
          %p4343 = pneg %p601
        $region206: #{tpu_custom_call.1} parent=107 // pred_check_branch
          %4345 = sbr.rel (%p4343) target = $region208
        $region207: #{tpu_custom_call.1} parent=107 // pred_region
          %s4346 = smul.u32 2, %s48
          %s4348 = ssub.s32 256, 256
          %4349 = vsyncadd %s4339, %s4348
          %s4350 = smul.addr %s4346, 128
          %s4351 = scalar_lea.hbm %s22, %s4350
          %s4352 = sshll.u32 %s4342, 4
          %s4353 = int_to_ptr.vmem [resolvable:$true] %s4352
          %4358 = dma.vmem_to_hbm [thread:$0]  %s4353, 256, %s4351, %s4339, 128, 128, 8
        $region208: #{tpu_custom_call.1} parent=107 // pred_fallthru
          _
      $region108: #{tpu_custom_call.1} parent=5 // pred_fallthru
        _
      %p4359 = scmp.le.s32.totalorder 2, %s39
      // Predicated region
      $region209: #{tpu_custom_call.1} parent=5 // pred_check
        %p4360 = pneg %p4359
      $region210: #{tpu_custom_call.1} parent=5 // pred_check_branch
        %4362 = sbr.rel (%p4360) target = $region212
      $region211: #{tpu_custom_call.1} parent=5 // pred_region
        %s4363 = ssub.s32 %s39, 2
        // Predicated region
        $region213: #{tpu_custom_call.1} parent=211 // pred_check
          %p4364 = pneg %p607
        $region214: #{tpu_custom_call.1} parent=211 // pred_check_branch
          %4366 = sbr.rel (%p4364) target = $region216
        $region215: #{tpu_custom_call.1} parent=211 // pred_region
          %s4367 = sand.u32 %s592, 1
          %s4368 = scalar_lea.sflag [#allocation5], %s4367
          %s4369 = sand.u32 %s592, 1
          %s4370 = smul.addr %s4369, 16
          %s4371 = scalar_lea.vmem [#allocation32], %s4370
          %4372 = dma.done %s4368, 256
        $region216: #{tpu_custom_call.1} parent=211 // pred_fallthru
          _
      $region212: #{tpu_custom_call.1} parent=5 // pred_fallthru
        _
    $region6: #{tpu_custom_call.1} parent=1 // loop_footer
      %s43 = sadd.s32 1, %s39
    $region7: #{tpu_custom_call.1} parent=1 // loop_footer_branch
      %38 = sbr.rel target = $region3
    $region8: #{tpu_custom_call.1} parent=1 // loop_exit
      _
    %4373 = vsyncpa [#allocation4], 1
    %s4374 = scalar_lea.sflag [#allocation4], 1
    %4375 = vsyncpa %s4374, 1
    %4376 = vsyncpa [#allocation7], 1
    %4377 = vsyncpa [#allocation10], 1
    %4378 = vsyncpa [#allocation13], 1
    %4379 = vsyncpa [#allocation16], 1
    %4380 = vsyncpa [#allocation19], 1
    %4381 = vsyncpa [#allocation5], 1
    %s4382 = scalar_lea.sflag [#allocation5], 1
    %4383 = vsyncpa %s4382, 1

</llo_original>
